<compile_context>
chip_gen: v5e
topology: v5e:2x2
jax: 0.10.0
libtpu: 0.0.40
codegen_flags: <defaults>
</compile_context>

<pallas_src>
import functools

import jax
import jax.numpy as jnp
from jax import lax
from jax.experimental import pallas as pl
from jax.experimental.pallas import tpu as pltpu


def _round_up(n, m):
    return ((n + m - 1) // m) * m


def _row_align(dtype):
    # Sub-32-bit dtypes pack rows along sublanes: 16 rows / sublane-group for
    # 16-bit, 32 for 8-bit.  f32 needs 8.
    s = jnp.dtype(dtype).itemsize
    return 32 if s == 1 else (16 if s == 2 else 8)


def _node_emb_kernel(x_ref, w1_ref, b1_ref, w2_ref, b2_ref, o_ref, *, precision):
    # x_ref:  (tm, d_in)     input tile (native dtype; cast on load)
    # w1_ref: (d_in, d_emb)  == W1 + pad(I)   (first residual folded in)
    # b1_ref: (1, d_emb)     f32
    # w2_ref: (d_emb, d_emb) == W2 + I        (second residual folded in)
    # b2_ref: (1, d_emb)     f32
    # o_ref:  (tm, d_emb)
    x = x_ref[...].astype(w1_ref.dtype)                 # VPU cast; no HBM pass
    h = jnp.dot(x, w1_ref[...],
                preferred_element_type=jnp.float32, precision=precision)
    h = jnp.maximum(h + b1_ref[...], 0.0)               # relu1 (f32 vregs)
    out = jnp.dot(h.astype(w2_ref.dtype), w2_ref[...],
                  preferred_element_type=jnp.float32, precision=precision)
    out = jnp.maximum(out + b2_ref[...], 0.0)           # relu2 (f32 vregs)
    o_ref[...] = out.astype(o_ref.dtype)


def fold_node_emb_params(w1, b1, w2, b2, *, compute_dtype=jnp.bfloat16):
    """Fold both residual adds into the weights. Call ONCE at param-load time.

      x @ (W1 + pad(I)) == x @ W1 + zero-pad(x, d_emb)
      h @ (W2 + I)      == h @ W2 + h

    compute_dtype: MXU operand dtype.  bf16 (default) halves weight/activation
    bytes with f32 accumulation; jnp.float32 gives the exact PyTorch numerics
    (the kernel then uses Precision.HIGHEST matmuls).
    """
    d_in, d_emb = w1.shape
    assert d_in <= d_emb, "NodeEmb residual requires input_emb_size <= node_emb_size"
    assert w2.shape == (d_emb, d_emb) and b1.shape == (d_emb,) and b2.shape == (d_emb,)
    w1_eff = (w1.astype(jnp.float32)
              + jnp.eye(d_in, d_emb, dtype=jnp.float32)).astype(compute_dtype)
    w2_eff = (w2.astype(jnp.float32)
              + jnp.eye(d_emb, dtype=jnp.float32)).astype(compute_dtype)
    b1_2d = b1.reshape(1, d_emb).astype(jnp.float32)
    b2_2d = b2.reshape(1, d_emb).astype(jnp.float32)
    return w1_eff, b1_2d, w2_eff, b2_2d


def node_emb_forward_folded(x, w1_eff, b1_2d, w2_eff, b2_2d, *,
                            tm=1024, out_dtype=None):
    """NodeEmb forward with pre-folded parameters (see fold_node_emb_params)."""
    N, d_in = x.shape
    assert w1_eff.shape[0] == d_in
    d_emb = w1_eff.shape[1]
    assert w2_eff.shape == (d_emb, d_emb)
    assert b1_2d.shape == (1, d_emb) and b2_2d.shape == (1, d_emb)

    compute_dtype = w1_eff.dtype
    if out_dtype is None:
        out_dtype = x.dtype

    # Exact f32 path uses HIGHEST precision matmuls (full f32 parity);
    # bf16 operands use the default single-pass MXU path.
    precision = (lax.Precision.HIGHEST if compute_dtype == jnp.float32
                 else lax.Precision.DEFAULT)

    # Row-tile selection: big enough to amortize per-step overhead, aligned to
    # the sublane packing of the streamed dtypes, and small enough that the
    # grid keeps >= 2 steps so both v7x TensorCores get work.
    row_align = max(_row_align(x.dtype), _row_align(out_dtype))
    tm = min(tm, _round_up(N, row_align))
    tm = min(tm, _round_up(pl.cdiv(N, 2), row_align))
    tm = max(tm, row_align)
    grid = (pl.cdiv(N, tm),)   # ragged last block; OOB output rows discarded

    # Real VMEM footprint (double-buffered x/out tiles, single-buffered
    # weights, f32 intermediates) + headroom; never ask for v7x's whole VMEM.
    w_isz = jnp.dtype(compute_dtype).itemsize
    vmem_bytes = (2 * tm * d_in * jnp.dtype(x.dtype).itemsize      # x tile x2
                  + 2 * tm * d_emb * jnp.dtype(out_dtype).itemsize  # out tile x2
                  + (d_in + d_emb) * d_emb * w_isz                  # weights x1
                  + 2 * d_emb * 4                                   # biases
                  + 2 * tm * d_emb * 4)                             # f32 h/out temps
    vmem_limit = int(max(32 * 1024 * 1024, 1.5 * vmem_bytes))

    def _const_spec(shape):
        # Grid-invariant operand: constant index_map (DMA'd once) and
        # single-buffered to halve its VMEM footprint.
        return pl.BlockSpec(shape, lambda i: (0, 0),
                            pipeline_mode=pl.Buffered(1))

    kernel = functools.partial(_node_emb_kernel, precision=precision)

    return pl.pallas_call(
        kernel,
        out_shape=jax.ShapeDtypeStruct((N, d_emb), out_dtype),
        grid_spec=pltpu.PrefetchScalarGridSpec(
            num_scalar_prefetch=0,
            grid=grid,
            in_specs=[
                pl.BlockSpec((tm, d_in), lambda i: (i, 0)),   # x tile (streams)
                _const_spec((d_in, d_emb)),                   # W1 + pad(I)
                _const_spec((1, d_emb)),                      # b1
                _const_spec((d_emb, d_emb)),                  # W2 + I
                _const_spec((1, d_emb)),                      # b2
            ],
            out_specs=pl.BlockSpec((tm, d_emb), lambda i: (i, 0)),
        ),
        compiler_params=pltpu.CompilerParams(
            dimension_semantics=("parallel",),
            vmem_limit_bytes=vmem_limit,
        ),
    )(x, w1_eff, b1_2d, w2_eff, b2_2d)


def node_emb_forward(x, w1, b1, w2, b2, *, tm=1024,
                     compute_dtype=jnp.bfloat16, out_dtype=None):
    """One-shot convenience wrapper (folds params per call).

    For repeated calls, fold once with fold_node_emb_params() and call
    node_emb_forward_folded() to avoid rewriting the weights every call.
    """
    params = fold_node_emb_params(w1, b1, w2, b2, compute_dtype=compute_dtype)
    return node_emb_forward_folded(x, *params, tm=tm, out_dtype=out_dtype)


def node_emb_reference(x, w1, b1, w2, b2):
    """Pure-JAX reference with the original (un-folded) module semantics."""
    N, d_in = x.shape
    d_emb = w1.shape[1]
    res = x if d_in == d_emb else jnp.pad(x, ((0, 0), (0, d_emb - d_in)))
    h = jnp.maximum(
        jnp.dot(x, w1, precision=lax.Precision.HIGHEST) + b1 + res, 0.0)
    return jnp.maximum(
        jnp.dot(h, w2, precision=lax.Precision.HIGHEST) + b2 + h, 0.0)


if __name__ == "__main__":
    # Small shapes consistent with the module (input_emb_size -> node_emb_size).
    # N is deliberately not a multiple of the row tile to exercise the ragged
    # last block and the >=2-step grid clamp.
    N = 300
    input_emb_size = 128
    node_emb_size = 256

    key = jax.random.PRNGKey(0)
    kx, kw1, kb1, kw2, kb2 = jax.random.split(key, 5)

    x = jax.random.normal(kx, (N, input_emb_size), dtype=jnp.float32)

    # Deterministic init mimicking nn.Linear: U(-1/sqrt(fan_in), 1/sqrt(fan_in)).
    lim1 = 1.0 / jnp.sqrt(jnp.float32(input_emb_size))
    lim2 = 1.0 / jnp.sqrt(jnp.float32(node_emb_size))
    # Stored pre-transposed as [D_in, D_out].
    w1 = jax.random.uniform(kw1, (input_emb_size, node_emb_size), jnp.float32, -lim1, lim1)
    b1 = jax.random.uniform(kb1, (node_emb_size,), jnp.float32, -lim1, lim1)
    w2 = jax.random.uniform(kw2, (node_emb_size, node_emb_size), jnp.float32, -lim2, lim2)
    b2 = jax.random.uniform(kb2, (node_emb_size,), jnp.float32, -lim2, lim2)

    ref = node_emb_reference(x, w1, b1, w2, b2)

    # Exact path: f32 operands + HIGHEST-precision matmuls (PyTorch semantics).
    p_f32 = fold_node_emb_params(w1, b1, w2, b2, compute_dtype=jnp.float32)
    out_f32 = jax.block_until_ready(node_emb_forward_folded(x, *p_f32))
    assert out_f32.shape == (N, node_emb_size)
    assert jnp.allclose(out_f32, ref, atol=1e-4, rtol=1e-4), "f32 kernel mismatch vs reference"

    # Default fast path: bf16 MXU operands, f32 accumulation, f32 output.
    p_bf16 = fold_node_emb_params(w1, b1, w2, b2)  # compute_dtype=bf16 default
    out_fast = jax.block_until_ready(node_emb_forward_folded(x, *p_bf16))
    assert out_fast.shape == (N, node_emb_size)
    assert jnp.allclose(out_fast, ref, atol=2e-1, rtol=5e-2), "bf16 kernel mismatch vs reference"

    # Convenience wrapper with bf16 output (halves output HBM traffic).
    out_bf16 = jax.block_until_ready(
        node_emb_forward(x, w1, b1, w2, b2, out_dtype=jnp.bfloat16))
    assert out_bf16.shape == (N, node_emb_size)
    assert out_bf16.dtype == jnp.bfloat16
    assert jnp.allclose(out_bf16.astype(jnp.float32), ref, atol=2.5e-1, rtol=5e-2), \
        "bf16-out kernel mismatch vs reference"

    print("KERNEL_OK")
</pallas_src>

<mosaic_0001>
module attributes {stable_mosaic.version = 11 : i64} {
  func.func @_node_emb_kernel(%arg0: i32, %arg1: memref<152x128xf32, #tpu.memory_space<vmem>>, %arg2: memref<128x256xf32, #tpu.memory_space<vmem>>, %arg3: memref<1x256xf32, #tpu.memory_space<vmem>>, %arg4: memref<256x256xf32, #tpu.memory_space<vmem>>, %arg5: memref<1x256xf32, #tpu.memory_space<vmem>>, %arg6: memref<152x256xf32, #tpu.memory_space<vmem>>) attributes {dimension_semantics = [#tpu.dimension_semantics<parallel>], iteration_bounds = array<i64: 2>, scalar_prefetch = 0 : i64, scratch_operands = 0 : i64, tpu.core_type = #tpu.core_type<tc>, window_params = [{transform_indices = @transform_0, window_bounds = array<i64: 152, 128>}, {pipeline_mode = #tpu.pipeline_mode<synchronous>, transform_indices = @transform_1, window_bounds = array<i64: 128, 256>}, {pipeline_mode = #tpu.pipeline_mode<synchronous>, transform_indices = @transform_2, window_bounds = array<i64: 1, 256>}, {pipeline_mode = #tpu.pipeline_mode<synchronous>, transform_indices = @transform_3, window_bounds = array<i64: 256, 256>}, {pipeline_mode = #tpu.pipeline_mode<synchronous>, transform_indices = @transform_4, window_bounds = array<i64: 1, 256>}, {transform_indices = @transform_5, window_bounds = array<i64: 152, 256>}]} {
    %c0 = arith.constant 0 : index
    %c0_0 = arith.constant 0 : index
    %0 = vector.load %arg1[%c0, %c0_0] : memref<152x128xf32, #tpu.memory_space<vmem>>, vector<152x128xf32>
    %c0_1 = arith.constant 0 : index
    %c0_2 = arith.constant 0 : index
    %1 = vector.load %arg2[%c0_1, %c0_2] : memref<128x256xf32, #tpu.memory_space<vmem>>, vector<128x256xf32>
    %cst = arith.constant dense<0.000000e+00> : vector<152x256xf32>
    %2 = tpu.matmul %0, %1, %cst {dimension_numbers = #tpu.dot_dimension_numbers<[1], [0], [0], [1], [0, 0, 1, 1], [], []>, precision = #tpu.contract_precision<fp32>} : vector<152x128xf32>, vector<128x256xf32>, vector<152x256xf32> -> vector<152x256xf32>
    %c0_3 = arith.constant 0 : index
    %c0_4 = arith.constant 0 : index
    %3 = vector.load %arg3[%c0_3, %c0_4] : memref<1x256xf32, #tpu.memory_space<vmem>>, vector<1x256xf32>
    %4 = vector.broadcast %3 : vector<1x256xf32> to vector<152x256xf32>
    %5 = arith.addf %2, %4 : vector<152x256xf32>
    %cst_5 = arith.constant 0.000000e+00 : f32
    %6 = vector.broadcast %cst_5 : f32 to vector<152x256xf32>
    %7 = arith.maximumf %5, %6 : vector<152x256xf32>
    %c0_6 = arith.constant 0 : index
    %c0_7 = arith.constant 0 : index
    %8 = vector.load %arg4[%c0_6, %c0_7] : memref<256x256xf32, #tpu.memory_space<vmem>>, vector<256x256xf32>
    %cst_8 = arith.constant dense<0.000000e+00> : vector<152x256xf32>
    %9 = tpu.matmul %7, %8, %cst_8 {dimension_numbers = #tpu.dot_dimension_numbers<[1], [0], [0], [1], [0, 0, 1, 1], [], []>, precision = #tpu.contract_precision<fp32>} : vector<152x256xf32>, vector<256x256xf32>, vector<152x256xf32> -> vector<152x256xf32>
    %c0_9 = arith.constant 0 : index
    %c0_10 = arith.constant 0 : index
    %10 = vector.load %arg5[%c0_9, %c0_10] : memref<1x256xf32, #tpu.memory_space<vmem>>, vector<1x256xf32>
    %11 = vector.broadcast %10 : vector<1x256xf32> to vector<152x256xf32>
    %12 = arith.addf %9, %11 : vector<152x256xf32>
    %cst_11 = arith.constant 0.000000e+00 : f32
    %13 = vector.broadcast %cst_11 : f32 to vector<152x256xf32>
    %14 = arith.maximumf %12, %13 : vector<152x256xf32>
    %c0_12 = arith.constant 0 : index
    %c0_13 = arith.constant 0 : index
    %15 = vector.load %arg6[%c0_12, %c0_13] : memref<152x256xf32, #tpu.memory_space<vmem>>, vector<152x256xf32>
    tpu.vector_store %arg6[%c0_12, %c0_13], %14 {strides = array<i32>} : memref<152x256xf32, #tpu.memory_space<vmem>>, vector<152x256xf32>,
    return
  }
  func.func @transform_0(%arg0: i32) -> (i32, i32) {
    %c0_i32 = arith.constant 0 : i32
    %c0_i32_0 = arith.constant 0 : i32
    return %arg0, %c0_i32 : i32, i32
  }
  func.func @transform_1(%arg0: i32) -> (i32, i32) {
    %c0_i32 = arith.constant 0 : i32
    %c0_i32_0 = arith.constant 0 : i32
    %c0_i32_1 = arith.constant 0 : i32
    return %c0_i32, %c0_i32_0 : i32, i32
  }
  func.func @transform_2(%arg0: i32) -> (i32, i32) {
    %c0_i32 = arith.constant 0 : i32
    %c0_i32_0 = arith.constant 0 : i32
    %c0_i32_1 = arith.constant 0 : i32
    return %c0_i32, %c0_i32_0 : i32, i32
  }
  func.func @transform_3(%arg0: i32) -> (i32, i32) {
    %c0_i32 = arith.constant 0 : i32
    %c0_i32_0 = arith.constant 0 : i32
    %c0_i32_1 = arith.constant 0 : i32
    return %c0_i32, %c0_i32_0 : i32, i32
  }
  func.func @transform_4(%arg0: i32) -> (i32, i32) {
    %c0_i32 = arith.constant 0 : i32
    %c0_i32_0 = arith.constant 0 : i32
    %c0_i32_1 = arith.constant 0 : i32
    return %c0_i32, %c0_i32_0 : i32, i32
  }
  func.func @transform_5(%arg0: i32) -> (i32, i32) {
    %c0_i32 = arith.constant 0 : i32
    %c0_i32_0 = arith.constant 0 : i32
    return %arg0, %c0_i32 : i32, i32
  }
}

</mosaic_0001>

<llo_original>
// kernel: tpu_custom_call.1
$region0: #{tpu_custom_call.1}
  #allocation0 [shape = 'u32[]', space=smem, size = 0x4, offset = 0x4, fixed_abs, tag = 'smem constant byte address 0x4 - core index']
  #allocation1 [shape = 'u32[72,128]{1,0:T(1,128)}', space=vmem, size = 0x9000, scoped, tag = 'internal scratch']
  %s0 = inlined_call_operand.hbm [shape: f32[300,128], index: 0, kind: input, shape index: {}]
  %s1 = inlined_call_operand.hbm [shape: f32[128,256], index: 1, kind: input, shape index: {}]
  %s2 = inlined_call_operand.hbm [shape: f32[1,256], index: 2, kind: input, shape index: {}]
  %s3 = inlined_call_operand.hbm [shape: f32[256,256], index: 3, kind: input, shape index: {}]
  %s4 = inlined_call_operand.vmem [shape: f32[1,256], index: 4, kind: input, shape index: {}]
  %s5 = inlined_call_operand.hbm [shape: f32[300,256], index: 5, kind: output, shape index: {}]
  %s6 = sld [smem:[#allocation0]]
  $region69: #{tpu_custom_call.1} parent=0
    _
  %s8 = ssub.s32 1, %s6
  %s9 = scalar_select 0, %s8, %s6
  $region1: #{tpu_custom_call.1} parent=0
    #allocation2 [shape = 'u8[155648]{0}', space=vmem, size = 0x26000, scoped, tag = 'input window, operand 0']
    #allocation3 [shape = 's32[2]{0}', space=sflag, size = 0x8, scoped, tag = 'scoped memory for tpu_custom_call.1']
    #allocation4 [shape = 's32[2]{0}', space=sflag, size = 0x8, scoped, tag = 'scoped memory for tpu_custom_call.1']
    #allocation5 [shape = 'u8[131072]{0}', space=vmem, size = 0x20000, scoped, tag = 'input window, operand 1, single buffered']
    #allocation6 [shape = 's32[1]{0}', space=sflag, size = 0x4, scoped, tag = 'scoped memory for tpu_custom_call.1']
    #allocation7 [shape = 'u8[1024]{0}', space=vmem, size = 0x400, scoped, tag = 'input window, operand 2, single buffered']
    #allocation8 [shape = 'u8[262144]{0}', space=vmem, size = 0x40000, scoped, tag = 'input window, operand 3, single buffered']
    #allocation9 [shape = 's32[1]{0}', space=sflag, size = 0x4, scoped, tag = 'scoped memory for tpu_custom_call.1']
    #allocation10 [shape = 'u8[311296]{0}', space=vmem, size = 0x4c000, scoped, tag = 'output window, operand 0']
    %10 = vsyncpa [#allocation3], 0
    %s11 = scalar_lea.sflag [#allocation3], 1
    %12 = vsyncpa %s11, 0
    %13 = vsyncpa [#allocation6], 0
    %14 = vsyncpa [#allocation9], 0
    %15 = vsyncpa [#allocation4], 0
    %s16 = scalar_lea.sflag [#allocation4], 1
    %17 = vsyncpa %s16, 0
    loop: start=0, step=1, limit=4
    $region2: #{tpu_custom_call.1} parent=1 // loop_pre_header
      _
    $region3: #{tpu_custom_call.1} parent=1 // loop_header
      %s19 = sphi 0, %s23
      %p20 = scmp.ge.s32.totalorder %s19, 4
      %s29 = sphi 0, %s31
      %s32 = sphi 0, %s29
      %s33 = sphi 0, %s32
      %s49 = sphi 0, %s33
      %s53 = sphi 0, %s53
      %s55 = sphi 0, %s53
      %s56 = sphi 0, %s55
      %s70 = sphi 0, %s56
      %s74 = sphi 0, %s74
      %s76 = sphi 0, %s74
      %s77 = sphi 0, %s76
      %s91 = sphi 0, %s77
      %s95 = sphi 0, %s95
      %s97 = sphi 0, %s95
      %s98 = sphi 0, %s97
      %s112 = sphi 0, %s98
      %s116 = sphi 0, %s116
      %s118 = sphi 0, %s116
      %s119 = sphi 0, %s118
      %s133 = sphi 0, %s119
      %s139 = sphi 0, %s141
      %s142 = sphi 0, %s139
      %s143 = sphi 0, %s142
      %s159 = sphi 0, %s143
    $region4: #{tpu_custom_call.1} parent=1 // loop_header_branch
      %22 = sbr.rel (%p20) target = $region8
    $region5: #{tpu_custom_call.1} parent=1 // loop_body
      %s24 = ssub.s32 %s19, 1
      %s25 = ssub.s32 %s19, 2
      %s26 = sadd.s32 %s19, 1
      %s27 = ssub.s32 %s19, %s26
      %p28 = scmp.eq.s32.totalorder %s27, 0
      %s30 = sadd.s32 %s29, 1
      %s31 = scalar_select %p28, %s29, %s30
      %p34 = pneg %p28
      %p35 = scmp.eq.s32.totalorder %s19, 1
      %p36 = por %p34, %p35
      %p37 = scmp.ne.s32.totalorder %s29, %s32
      %p38 = scmp.eq.s32.totalorder %s19, 0
      %p39 = por %p37, %p38
      %p40 = scmp.ne.s32.totalorder %s29, %s32
      %p41 = scmp.eq.s32.totalorder %s24, 1
      %p42 = por %p40, %p41
      %p43 = scmp.ne.s32.totalorder %s32, %s33
      %p44 = scmp.eq.s32.totalorder %s24, 0
      %p45 = por %p43, %p44
      %p46 = scmp.ne.s32.totalorder %s32, %s33
      %p47 = scmp.eq.s32.totalorder %s25, 1
      %p48 = por %p46, %p47
      %p50 = scmp.ne.s32.totalorder %s33, %s49
      %p51 = scmp.eq.s32.totalorder %s25, 0
      %p52 = por %p50, %p51
      %s54 = sadd.s32 %s53, 1
      %p57 = scmp.eq.s32.totalorder %s19, 1
      %p58 = scmp.ne.s32.totalorder %s53, %s55
      %p59 = scmp.eq.s32.totalorder %s19, 0
      %p60 = por %p58, %p59
      %p61 = scmp.ne.s32.totalorder %s53, %s55
      %p62 = scmp.eq.s32.totalorder %s24, 1
      %p63 = por %p61, %p62
      %p64 = scmp.ne.s32.totalorder %s55, %s56
      %p65 = scmp.eq.s32.totalorder %s24, 0
      %p66 = por %p64, %p65
      %p67 = scmp.ne.s32.totalorder %s55, %s56
      %p68 = scmp.eq.s32.totalorder %s25, 1
      %p69 = por %p67, %p68
      %p71 = scmp.ne.s32.totalorder %s56, %s70
      %p72 = scmp.eq.s32.totalorder %s25, 0
      %p73 = por %p71, %p72
      %s75 = sadd.s32 %s74, 1
      %p78 = scmp.eq.s32.totalorder %s19, 1
      %p79 = scmp.ne.s32.totalorder %s74, %s76
      %p80 = scmp.eq.s32.totalorder %s19, 0
      %p81 = por %p79, %p80
      %p82 = scmp.ne.s32.totalorder %s74, %s76
      %p83 = scmp.eq.s32.totalorder %s24, 1
      %p84 = por %p82, %p83
      %p85 = scmp.ne.s32.totalorder %s76, %s77
      %p86 = scmp.eq.s32.totalorder %s24, 0
      %p87 = por %p85, %p86
      %p88 = scmp.ne.s32.totalorder %s76, %s77
      %p89 = scmp.eq.s32.totalorder %s25, 1
      %p90 = por %p88, %p89
      %p92 = scmp.ne.s32.totalorder %s77, %s91
      %p93 = scmp.eq.s32.totalorder %s25, 0
      %p94 = por %p92, %p93
      %s96 = sadd.s32 %s95, 1
      %p99 = scmp.eq.s32.totalorder %s19, 1
      %p100 = scmp.ne.s32.totalorder %s95, %s97
      %p101 = scmp.eq.s32.totalorder %s19, 0
      %p102 = por %p100, %p101
      %p103 = scmp.ne.s32.totalorder %s95, %s97
      %p104 = scmp.eq.s32.totalorder %s24, 1
      %p105 = por %p103, %p104
      %p106 = scmp.ne.s32.totalorder %s97, %s98
      %p107 = scmp.eq.s32.totalorder %s24, 0
      %p108 = por %p106, %p107
      %p109 = scmp.ne.s32.totalorder %s97, %s98
      %p110 = scmp.eq.s32.totalorder %s25, 1
      %p111 = por %p109, %p110
      %p113 = scmp.ne.s32.totalorder %s98, %s112
      %p114 = scmp.eq.s32.totalorder %s25, 0
      %p115 = por %p113, %p114
      %s117 = sadd.s32 %s116, 1
      %p120 = scmp.eq.s32.totalorder %s19, 1
      %p121 = scmp.ne.s32.totalorder %s116, %s118
      %p122 = scmp.eq.s32.totalorder %s19, 0
      %p123 = por %p121, %p122
      %p124 = scmp.ne.s32.totalorder %s116, %s118
      %p125 = scmp.eq.s32.totalorder %s24, 1
      %p126 = por %p124, %p125
      %p127 = scmp.ne.s32.totalorder %s118, %s119
      %p128 = scmp.eq.s32.totalorder %s24, 0
      %p129 = por %p127, %p128
      %p130 = scmp.ne.s32.totalorder %s118, %s119
      %p131 = scmp.eq.s32.totalorder %s25, 1
      %p132 = por %p130, %p131
      %p134 = scmp.ne.s32.totalorder %s119, %s133
      %p135 = scmp.eq.s32.totalorder %s25, 0
      %p136 = por %p134, %p135
      %s137 = ssub.s32 %s19, %s26
      %p138 = scmp.eq.s32.totalorder %s137, 0
      %s140 = sadd.s32 %s139, 1
      %s141 = scalar_select %p138, %s139, %s140
      %p144 = pneg %p138
      %p145 = scmp.eq.s32.totalorder %s19, 1
      %p146 = por %p144, %p145
      %p147 = scmp.ne.s32.totalorder %s139, %s142
      %p148 = scmp.eq.s32.totalorder %s19, 0
      %p149 = por %p147, %p148
      %p150 = scmp.ne.s32.totalorder %s139, %s142
      %p151 = scmp.eq.s32.totalorder %s24, 1
      %p152 = por %p150, %p151
      %p153 = scmp.ne.s32.totalorder %s142, %s143
      %p154 = scmp.eq.s32.totalorder %s24, 0
      %p155 = por %p153, %p154
      %p156 = scmp.ne.s32.totalorder %s142, %s143
      %p157 = scmp.eq.s32.totalorder %s25, 1
      %p158 = por %p156, %p157
      %p160 = scmp.ne.s32.totalorder %s143, %s159
      %p161 = scmp.eq.s32.totalorder %s25, 0
      %p162 = por %p160, %p161
      %p163 = scmp.le.s32.totalorder 1, %s19
      %p164 = scmp.lt.s32.totalorder %s19, 3
      %p165 = pnand %p163, %p164
      %p166 = pneg %p165
      // Predicated region
      $region9: #{tpu_custom_call.1} parent=5 // pred_check
        _
      $region10: #{tpu_custom_call.1} parent=5 // pred_check_branch
        %168 = sbr.rel (%p165) target = $region12
      $region11: #{tpu_custom_call.1} parent=5 // pred_region
        %s169 = ssub.s32 %s19, 1
        // Predicated region
        $region13: #{tpu_custom_call.1} parent=11 // pred_check
          %p170 = pneg %p66
        $region14: #{tpu_custom_call.1} parent=11 // pred_check_branch
          %172 = sbr.rel (%p170) target = $region16
        $region15: #{tpu_custom_call.1} parent=11 // pred_region
          %174 = vsyncadd [#allocation6], 0
          %s175 = sshll.u32 %s1, 4
          %s176 = int_to_ptr.hbm [resolvable:$true] %s175
          %s177 = sshll.u32 [#allocation5], 4
          %s178 = int_to_ptr.vmem [resolvable:$true] %s177
          %183 = dma.hbm_to_vmem [thread:$0]  %s176, 4096, %s178, [#allocation6], 256, 256, 16
        $region16: #{tpu_custom_call.1} parent=11 // pred_fallthru
          _
        // Predicated region
        $region17: #{tpu_custom_call.1} parent=11 // pred_check
          %p184 = pneg %p87
        $region18: #{tpu_custom_call.1} parent=11 // pred_check_branch
          %186 = sbr.rel (%p184) target = $region20
        $region19: #{tpu_custom_call.1} parent=11 // pred_region
          %188 = vsyncadd [#allocation6], 0
          %s190 = sshll.u32 %s2, 4
          %s191 = int_to_ptr.hbm [resolvable:$true] %s190
          %s192 = sshll.u32 [#allocation7], 4
          %s193 = int_to_ptr.vmem [resolvable:$true] %s192
          %195 = dma.hbm_to_vmem [thread:$0]  %s191, 32, %s193, [#allocation6]
        $region20: #{tpu_custom_call.1} parent=11 // pred_fallthru
          _
        // Predicated region
        $region21: #{tpu_custom_call.1} parent=11 // pred_check
          %p196 = pneg %p108
        $region22: #{tpu_custom_call.1} parent=11 // pred_check_branch
          %198 = sbr.rel (%p196) target = $region24
        $region23: #{tpu_custom_call.1} parent=11 // pred_region
          %200 = vsyncadd [#allocation9], 0
          %s201 = sshll.u32 %s3, 4
          %s202 = int_to_ptr.hbm [resolvable:$true] %s201
          %s203 = sshll.u32 [#allocation8], 4
          %s204 = int_to_ptr.vmem [resolvable:$true] %s203
          %209 = dma.hbm_to_vmem [thread:$0]  %s202, 8192, %s204, [#allocation9], 256, 256, 16
        $region24: #{tpu_custom_call.1} parent=11 // pred_fallthru
          _
        // Predicated region
        $region25: #{tpu_custom_call.1} parent=11 // pred_check
          %p210 = pneg %p129
        $region26: #{tpu_custom_call.1} parent=11 // pred_check_branch
          %212 = sbr.rel (%p210) target = $region28
        $region27: #{tpu_custom_call.1} parent=11 // pred_region
          _
        $region28: #{tpu_custom_call.1} parent=11 // pred_fallthru
          _
      $region12: #{tpu_custom_call.1} parent=5 // pred_fallthru
        _
      %p213 = scmp.lt.s32.totalorder %s19, 2
      // Predicated region
      $region29: #{tpu_custom_call.1} parent=5 // pred_check
        %p214 = pneg %p213
      $region30: #{tpu_custom_call.1} parent=5 // pred_check_branch
        %216 = sbr.rel (%p214) target = $region32
      $region31: #{tpu_custom_call.1} parent=5 // pred_region
        // Predicated region
        $region33: #{tpu_custom_call.1} parent=31 // pred_check
          %p217 = pneg %p39
        $region34: #{tpu_custom_call.1} parent=31 // pred_check_branch
          %219 = sbr.rel (%p217) target = $region36
        $region35: #{tpu_custom_call.1} parent=31 // pred_region
          %s220 = sand.u32 %s29, 1
          %s221 = scalar_lea.sflag [#allocation3], %s220
          %s222 = sand.u32 %s29, 1
          %s223 = smul.addr %s222, 152
          %s224 = scalar_lea.vmem [#allocation2], %s223
          %s225 = smul.u32 19, %s19
          %227 = vsyncadd %s221, 0
          %s228 = smul.addr %s225, 8
          %s229 = scalar_lea.hbm %s0, %s228
          %s230 = sshll.u32 %s229, 4
          %s231 = int_to_ptr.hbm [resolvable:$true] %s230
          %s232 = sshll.u32 %s224, 4
          %s233 = int_to_ptr.vmem [resolvable:$true] %s232
          %238 = dma.hbm_to_vmem [thread:$0]  %s231, 2432, %s233, %s221, 128, 128, 8
        $region36: #{tpu_custom_call.1} parent=31 // pred_fallthru
          _
      $region32: #{tpu_custom_call.1} parent=5 // pred_fallthru
        _
      %p239 = scmp.le.s32.totalorder 1, %s19
      %p240 = scmp.lt.s32.totalorder %s19, 3
      %p241 = pnand %p239, %p240
      %p242 = pneg %p241
      // Predicated region
      $region37: #{tpu_custom_call.1} parent=5 // pred_check
        _
      $region38: #{tpu_custom_call.1} parent=5 // pred_check_branch
        %244 = sbr.rel (%p241) target = $region40
      $region39: #{tpu_custom_call.1} parent=5 // pred_region
        %s245 = ssub.s32 %s19, 1
        %s246 = sand.u32 %s32, 1
        %s247 = scalar_lea.sflag [#allocation3], %s246
        %s248 = sand.u32 %s32, 1
        %s249 = smul.addr %s248, 152
        %s250 = scalar_lea.vmem [#allocation2], %s249
        // Predicated region
        $region41: #{tpu_custom_call.1} parent=39 // pred_check
          %p251 = pneg %p45
        $region42: #{tpu_custom_call.1} parent=39 // pred_check_branch
          %253 = sbr.rel (%p251) target = $region44
        $region43: #{tpu_custom_call.1} parent=39 // pred_region
          %255 = dma.done %s247, 2432
        $region44: #{tpu_custom_call.1} parent=39 // pred_fallthru
          _
        // Predicated region
        $region45: #{tpu_custom_call.1} parent=39 // pred_check
          %p256 = pneg %p66
        $region46: #{tpu_custom_call.1} parent=39 // pred_check_branch
          %258 = sbr.rel (%p256) target = $region48
        $region47: #{tpu_custom_call.1} parent=39 // pred_region
          %260 = dma.done [#allocation6], 4096
        $region48: #{tpu_custom_call.1} parent=39 // pred_fallthru
          _
        // Predicated region
        $region49: #{tpu_custom_call.1} parent=39 // pred_check
          %p261 = pneg %p87
        $region50: #{tpu_custom_call.1} parent=39 // pred_check_branch
          %263 = sbr.rel (%p261) target = $region52
        $region51: #{tpu_custom_call.1} parent=39 // pred_region
          %265 = dma.done [#allocation6], 32
        $region52: #{tpu_custom_call.1} parent=39 // pred_fallthru
          _
        // Predicated region
        $region53: #{tpu_custom_call.1} parent=39 // pred_check
          %p266 = pneg %p108
        $region54: #{tpu_custom_call.1} parent=39 // pred_check_branch
          %268 = sbr.rel (%p266) target = $region56
        $region55: #{tpu_custom_call.1} parent=39 // pred_region
          %270 = dma.done [#allocation9], 8192
        $region56: #{tpu_custom_call.1} parent=39 // pred_fallthru
          _
        %s271 = sand.u32 %s32, 1
        %s272 = scalar_lea.sflag [#allocation3], %s271
        %s273 = sand.u32 %s32, 1
        %s274 = smul.addr %s273, 152
        %s275 = scalar_lea.vmem [#allocation2], %s274
        %p276 = pneg %p45
        %p277 = pneg %p42
        %p278 = pneg %p66
        %p279 = pneg %p63
        %p280 = pneg %p87
        %p281 = pneg %p84
        %p282 = pneg %p108
        %p283 = pneg %p105
        %p284 = pneg %p129
        %p285 = pneg %p126
        %p286 = pneg %p155
        %p287 = pneg %p152
        %s288 = sand.u32 %s142, 1
        %s289 = scalar_lea.sflag [#allocation4], %s288
        %s290 = sand.u32 %s142, 1
        %s291 = smul.addr %s290, 304
        %s292 = scalar_lea.vmem [#allocation10], %s291
        %s293 = smul.u32 19, %s24
        %s294 = smul.u32 19, %s24
        %v295 = vld [vmem:[%s250] sm:$0xff]
        %v296 = vld [vmem:[%s250 + $0x8] sm:$0xff]
        %v297 = vld [vmem:[%s250 + $0x10] sm:$0xff]
        %v298 = vld [vmem:[%s250 + $0x18] sm:$0xff]
        %v299 = vld [vmem:[%s250 + $0x20] sm:$0xff]
        %v300 = vld [vmem:[%s250 + $0x28] sm:$0xff]
        %v301 = vld [vmem:[%s250 + $0x30] sm:$0xff]
        %v302 = vld [vmem:[%s250 + $0x38] sm:$0xff]
        %v303 = vld [vmem:[%s250 + $0x40] sm:$0xff]
        %v304 = vld [vmem:[%s250 + $0x48] sm:$0xff]
        %v305 = vld [vmem:[%s250 + $0x50] sm:$0xff]
        %v306 = vld [vmem:[%s250 + $0x58] sm:$0xff]
        %v307 = vld [vmem:[%s250 + $0x60] sm:$0xff]
        %v308 = vld [vmem:[%s250 + $0x68] sm:$0xff]
        %v309 = vld [vmem:[%s250 + $0x70] sm:$0xff]
        %v310 = vld [vmem:[%s250 + $0x78] sm:$0xff]
        %v311 = vld [vmem:[%s250 + $0x80] sm:$0xff]
        %v312 = vld [vmem:[%s250 + $0x88] sm:$0xff]
        %v313 = vld [vmem:[%s250 + $0x90] sm:$0xff]
        %v314 = vld [vmem:[#allocation5] sm:$0xff]
        %v315 = vld [vmem:[#allocation5 + $0x8] sm:$0xff]
        %v316 = vld [vmem:[#allocation5 + $0x10] sm:$0xff]
        %v317 = vld [vmem:[#allocation5 + $0x18] sm:$0xff]
        %v318 = vld [vmem:[#allocation5 + $0x20] sm:$0xff]
        %v319 = vld [vmem:[#allocation5 + $0x28] sm:$0xff]
        %v320 = vld [vmem:[#allocation5 + $0x30] sm:$0xff]
        %v321 = vld [vmem:[#allocation5 + $0x38] sm:$0xff]
        %v322 = vld [vmem:[#allocation5 + $0x40] sm:$0xff]
        %v323 = vld [vmem:[#allocation5 + $0x48] sm:$0xff]
        %v324 = vld [vmem:[#allocation5 + $0x50] sm:$0xff]
        %v325 = vld [vmem:[#allocation5 + $0x58] sm:$0xff]
        %v326 = vld [vmem:[#allocation5 + $0x60] sm:$0xff]
        %v327 = vld [vmem:[#allocation5 + $0x68] sm:$0xff]
        %v328 = vld [vmem:[#allocation5 + $0x70] sm:$0xff]
        %v329 = vld [vmem:[#allocation5 + $0x78] sm:$0xff]
        %v330 = vld [vmem:[#allocation5 + $0x80] sm:$0xff]
        %v331 = vld [vmem:[#allocation5 + $0x88] sm:$0xff]
        %v332 = vld [vmem:[#allocation5 + $0x90] sm:$0xff]
        %v333 = vld [vmem:[#allocation5 + $0x98] sm:$0xff]
        %v334 = vld [vmem:[#allocation5 + $0xa0] sm:$0xff]
        %v335 = vld [vmem:[#allocation5 + $0xa8] sm:$0xff]
        %v336 = vld [vmem:[#allocation5 + $0xb0] sm:$0xff]
        %v337 = vld [vmem:[#allocation5 + $0xb8] sm:$0xff]
        %v338 = vld [vmem:[#allocation5 + $0xc0] sm:$0xff]
        %v339 = vld [vmem:[#allocation5 + $0xc8] sm:$0xff]
        %v340 = vld [vmem:[#allocation5 + $0xd0] sm:$0xff]
        %v341 = vld [vmem:[#allocation5 + $0xd8] sm:$0xff]
        %v342 = vld [vmem:[#allocation5 + $0xe0] sm:$0xff]
        %v343 = vld [vmem:[#allocation5 + $0xe8] sm:$0xff]
        %v344 = vld [vmem:[#allocation5 + $0xf0] sm:$0xff]
        %v345 = vld [vmem:[#allocation5 + $0xf8] sm:$0xff]
        %v346 = vld [vmem:[#allocation7] sm:$0x3]
        %v348 = vperm.slane %v346, 0
        %v349 = vperm.slane %v346, 1
        %v352 = vand.u32 %v344, 4294901760
        %353 = vmatpush.msra.mxu0 %v352
        %v354 = vand.u32 %v342, 4294901760
        %355 = vmatpush.msra.mxu0 %v354
        %v356 = vand.u32 %v340, 4294901760
        %357 = vmatpush.msra.mxu0 %v356
        %v358 = vand.u32 %v338, 4294901760
        %359 = vmatpush.msra.mxu0 %v358
        %v360 = vand.u32 %v336, 4294901760
        %361 = vmatpush.msra.mxu0 %v360
        %v362 = vand.u32 %v334, 4294901760
        %363 = vmatpush.msra.mxu0 %v362
        %v364 = vand.u32 %v332, 4294901760
        %365 = vmatpush.msra.mxu0 %v364
        %v366 = vand.u32 %v330, 4294901760
        %367 = vmatpush.msra.mxu0 %v366
        %v368 = vand.u32 %v328, 4294901760
        %369 = vmatpush.msra.mxu0 %v368
        %v370 = vand.u32 %v326, 4294901760
        %371 = vmatpush.msra.mxu0 %v370
        %v372 = vand.u32 %v324, 4294901760
        %373 = vmatpush.msra.mxu0 %v372
        %v374 = vand.u32 %v322, 4294901760
        %375 = vmatpush.msra.mxu0 %v374
        %v376 = vand.u32 %v320, 4294901760
        %377 = vmatpush.msra.mxu0 %v376
        %v378 = vand.u32 %v318, 4294901760
        %379 = vmatpush.msra.mxu0 %v378
        %v380 = vand.u32 %v316, 4294901760
        %381 = vmatpush.msra.mxu0 %v380
        %v382 = vand.u32 %v314, 4294901760
        %383 = vmatpush.msra.mxu0 %v382
        %v384 = vand.u32 %v295, 4294901760
        %v385 = vsub.f32 %v295, %v384
        %v386 = vand.u32 %v385, 4294901760
        %v387 = vsub.f32 %v385, %v386
        %v388 = vand.u32 %v387, 4294901760
        %389 = vmatmul.f32.gmra.mxu0 %v388
        %v390 = vpop.f32.mrf.mxu0
        %v391 = vadd.f32 %v348, %v390
        %v392 = vand.u32 %v296, 4294901760
        %v393 = vsub.f32 %v296, %v392
        %v394 = vand.u32 %v393, 4294901760
        %v395 = vsub.f32 %v393, %v394
        %v396 = vand.u32 %v395, 4294901760
        %397 = vmatmul.f32.gmra.mxu0 %v396
        %v398 = vpop.f32.mrf.mxu0
        %v399 = vadd.f32 %v348, %v398
        %v400 = vand.u32 %v297, 4294901760
        %v401 = vsub.f32 %v297, %v400
        %v402 = vand.u32 %v401, 4294901760
        %v403 = vsub.f32 %v401, %v402
        %v404 = vand.u32 %v403, 4294901760
        %405 = vmatmul.f32.gmra.mxu0 %v404
        %v406 = vpop.f32.mrf.mxu0
        %v407 = vadd.f32 %v348, %v406
        %v408 = vand.u32 %v298, 4294901760
        %v409 = vsub.f32 %v298, %v408
        %v410 = vand.u32 %v409, 4294901760
        %v411 = vsub.f32 %v409, %v410
        %v412 = vand.u32 %v411, 4294901760
        %413 = vmatmul.f32.gmra.mxu0 %v412
        %v414 = vpop.f32.mrf.mxu0
        %v415 = vadd.f32 %v348, %v414
        %v416 = vand.u32 %v299, 4294901760
        %v417 = vsub.f32 %v299, %v416
        %v418 = vand.u32 %v417, 4294901760
        %v419 = vsub.f32 %v417, %v418
        %v420 = vand.u32 %v419, 4294901760
        %421 = vmatmul.f32.gmra.mxu0 %v420
        %v422 = vpop.f32.mrf.mxu0
        %v423 = vadd.f32 %v348, %v422
        %v424 = vand.u32 %v300, 4294901760
        %v425 = vsub.f32 %v300, %v424
        %v426 = vand.u32 %v425, 4294901760
        %v427 = vsub.f32 %v425, %v426
        %v428 = vand.u32 %v427, 4294901760
        %429 = vmatmul.f32.gmra.mxu0 %v428
        %v430 = vpop.f32.mrf.mxu0
        %v431 = vadd.f32 %v348, %v430
        %v432 = vand.u32 %v301, 4294901760
        %v433 = vsub.f32 %v301, %v432
        %v434 = vand.u32 %v433, 4294901760
        %v435 = vsub.f32 %v433, %v434
        %v436 = vand.u32 %v435, 4294901760
        %437 = vmatmul.f32.gmra.mxu0 %v436
        %v438 = vpop.f32.mrf.mxu0
        %v439 = vadd.f32 %v348, %v438
        %v440 = vand.u32 %v302, 4294901760
        %v441 = vsub.f32 %v302, %v440
        %v442 = vand.u32 %v441, 4294901760
        %v443 = vsub.f32 %v441, %v442
        %v444 = vand.u32 %v443, 4294901760
        %445 = vmatmul.f32.gmra.mxu0 %v444
        %v446 = vpop.f32.mrf.mxu0
        %v447 = vadd.f32 %v348, %v446
        %v448 = vand.u32 %v303, 4294901760
        %v449 = vsub.f32 %v303, %v448
        %v450 = vand.u32 %v449, 4294901760
        %v451 = vsub.f32 %v449, %v450
        %v452 = vand.u32 %v451, 4294901760
        %453 = vmatmul.f32.gmra.mxu0 %v452
        %v454 = vpop.f32.mrf.mxu0
        %v455 = vadd.f32 %v348, %v454
        %v456 = vand.u32 %v304, 4294901760
        %v457 = vsub.f32 %v304, %v456
        %v458 = vand.u32 %v457, 4294901760
        %v459 = vsub.f32 %v457, %v458
        %v460 = vand.u32 %v459, 4294901760
        %461 = vmatmul.f32.gmra.mxu0 %v460
        %v462 = vpop.f32.mrf.mxu0
        %v463 = vadd.f32 %v348, %v462
        %v464 = vand.u32 %v305, 4294901760
        %v465 = vsub.f32 %v305, %v464
        %v466 = vand.u32 %v465, 4294901760
        %v467 = vsub.f32 %v465, %v466
        %v468 = vand.u32 %v467, 4294901760
        %469 = vmatmul.f32.gmra.mxu0 %v468
        %v470 = vpop.f32.mrf.mxu0
        %v471 = vadd.f32 %v348, %v470
        %v472 = vand.u32 %v306, 4294901760
        %v473 = vsub.f32 %v306, %v472
        %v474 = vand.u32 %v473, 4294901760
        %v475 = vsub.f32 %v473, %v474
        %v476 = vand.u32 %v475, 4294901760
        %477 = vmatmul.f32.gmra.mxu0 %v476
        %v478 = vpop.f32.mrf.mxu0
        %v479 = vadd.f32 %v348, %v478
        %v480 = vand.u32 %v307, 4294901760
        %v481 = vsub.f32 %v307, %v480
        %v482 = vand.u32 %v481, 4294901760
        %v483 = vsub.f32 %v481, %v482
        %v484 = vand.u32 %v483, 4294901760
        %485 = vmatmul.f32.gmra.mxu0 %v484
        %v486 = vpop.f32.mrf.mxu0
        %v487 = vadd.f32 %v348, %v486
        %v488 = vand.u32 %v308, 4294901760
        %v489 = vsub.f32 %v308, %v488
        %v490 = vand.u32 %v489, 4294901760
        %v491 = vsub.f32 %v489, %v490
        %v492 = vand.u32 %v491, 4294901760
        %493 = vmatmul.f32.gmra.mxu0 %v492
        %v494 = vpop.f32.mrf.mxu0
        %v495 = vadd.f32 %v348, %v494
        %v496 = vand.u32 %v309, 4294901760
        %v497 = vsub.f32 %v309, %v496
        %v498 = vand.u32 %v497, 4294901760
        %v499 = vsub.f32 %v497, %v498
        %v500 = vand.u32 %v499, 4294901760
        %501 = vmatmul.f32.gmra.mxu0 %v500
        %v502 = vpop.f32.mrf.mxu0
        %v503 = vadd.f32 %v348, %v502
        %v504 = vand.u32 %v310, 4294901760
        %v505 = vsub.f32 %v310, %v504
        %v506 = vand.u32 %v505, 4294901760
        %v507 = vsub.f32 %v505, %v506
        %v508 = vand.u32 %v507, 4294901760
        %509 = vmatmul.f32.gmra.mxu0 %v508
        %v510 = vpop.f32.mrf.mxu0
        %v511 = vadd.f32 %v348, %v510
        %v512 = vand.u32 %v311, 4294901760
        %v513 = vsub.f32 %v311, %v512
        %v514 = vand.u32 %v513, 4294901760
        %v515 = vsub.f32 %v513, %v514
        %v516 = vand.u32 %v515, 4294901760
        %517 = vmatmul.f32.gmra.mxu0 %v516
        %v518 = vpop.f32.mrf.mxu0
        %v519 = vadd.f32 %v348, %v518
        %v520 = vand.u32 %v312, 4294901760
        %v521 = vsub.f32 %v312, %v520
        %v522 = vand.u32 %v521, 4294901760
        %v523 = vsub.f32 %v521, %v522
        %v524 = vand.u32 %v523, 4294901760
        %525 = vmatmul.f32.gmra.mxu0 %v524
        %v526 = vpop.f32.mrf.mxu0
        %v527 = vadd.f32 %v348, %v526
        %v528 = vand.u32 %v313, 4294901760
        %v529 = vsub.f32 %v313, %v528
        %v530 = vand.u32 %v529, 4294901760
        %v531 = vsub.f32 %v529, %v530
        %v532 = vand.u32 %v531, 4294901760
        %533 = vmatmul.f32.gmra.mxu0 %v532
        %v534 = vpop.f32.mrf.mxu0
        %v535 = vadd.f32 %v348, %v534
        %536 = vdwg.mxu0
        %v537 = vand.u32 %v344, 4294901760
        %v538 = vsub.f32 %v344, %v537
        %v539 = vand.u32 %v538, 4294901760
        %v540 = vsub.f32 %v538, %v539
        %v541 = vand.u32 %v540, 4294901760
        %542 = vmatpush.msra.mxu0 %v541
        %v543 = vand.u32 %v342, 4294901760
        %v544 = vsub.f32 %v342, %v543
        %v545 = vand.u32 %v544, 4294901760
        %v546 = vsub.f32 %v544, %v545
        %v547 = vand.u32 %v546, 4294901760
        %548 = vmatpush.msra.mxu0 %v547
        %v549 = vand.u32 %v340, 4294901760
        %v550 = vsub.f32 %v340, %v549
        %v551 = vand.u32 %v550, 4294901760
        %v552 = vsub.f32 %v550, %v551
        %v553 = vand.u32 %v552, 4294901760
        %554 = vmatpush.msra.mxu0 %v553
        %v555 = vand.u32 %v338, 4294901760
        %v556 = vsub.f32 %v338, %v555
        %v557 = vand.u32 %v556, 4294901760
        %v558 = vsub.f32 %v556, %v557
        %v559 = vand.u32 %v558, 4294901760
        %560 = vmatpush.msra.mxu0 %v559
        %v561 = vand.u32 %v336, 4294901760
        %v562 = vsub.f32 %v336, %v561
        %v563 = vand.u32 %v562, 4294901760
        %v564 = vsub.f32 %v562, %v563
        %v565 = vand.u32 %v564, 4294901760
        %566 = vmatpush.msra.mxu0 %v565
        %v567 = vand.u32 %v334, 4294901760
        %v568 = vsub.f32 %v334, %v567
        %v569 = vand.u32 %v568, 4294901760
        %v570 = vsub.f32 %v568, %v569
        %v571 = vand.u32 %v570, 4294901760
        %572 = vmatpush.msra.mxu0 %v571
        %v573 = vand.u32 %v332, 4294901760
        %v574 = vsub.f32 %v332, %v573
        %v575 = vand.u32 %v574, 4294901760
        %v576 = vsub.f32 %v574, %v575
        %v577 = vand.u32 %v576, 4294901760
        %578 = vmatpush.msra.mxu0 %v577
        %v579 = vand.u32 %v330, 4294901760
        %v580 = vsub.f32 %v330, %v579
        %v581 = vand.u32 %v580, 4294901760
        %v582 = vsub.f32 %v580, %v581
        %v583 = vand.u32 %v582, 4294901760
        %584 = vmatpush.msra.mxu0 %v583
        %v585 = vand.u32 %v328, 4294901760
        %v586 = vsub.f32 %v328, %v585
        %v587 = vand.u32 %v586, 4294901760
        %v588 = vsub.f32 %v586, %v587
        %v589 = vand.u32 %v588, 4294901760
        %590 = vmatpush.msra.mxu0 %v589
        %v591 = vand.u32 %v326, 4294901760
        %v592 = vsub.f32 %v326, %v591
        %v593 = vand.u32 %v592, 4294901760
        %v594 = vsub.f32 %v592, %v593
        %v595 = vand.u32 %v594, 4294901760
        %596 = vmatpush.msra.mxu0 %v595
        %v597 = vand.u32 %v324, 4294901760
        %v598 = vsub.f32 %v324, %v597
        %v599 = vand.u32 %v598, 4294901760
        %v600 = vsub.f32 %v598, %v599
        %v601 = vand.u32 %v600, 4294901760
        %602 = vmatpush.msra.mxu0 %v601
        %v603 = vand.u32 %v322, 4294901760
        %v604 = vsub.f32 %v322, %v603
        %v605 = vand.u32 %v604, 4294901760
        %v606 = vsub.f32 %v604, %v605
        %v607 = vand.u32 %v606, 4294901760
        %608 = vmatpush.msra.mxu0 %v607
        %v609 = vand.u32 %v320, 4294901760
        %v610 = vsub.f32 %v320, %v609
        %v611 = vand.u32 %v610, 4294901760
        %v612 = vsub.f32 %v610, %v611
        %v613 = vand.u32 %v612, 4294901760
        %614 = vmatpush.msra.mxu0 %v613
        %v615 = vand.u32 %v318, 4294901760
        %v616 = vsub.f32 %v318, %v615
        %v617 = vand.u32 %v616, 4294901760
        %v618 = vsub.f32 %v616, %v617
        %v619 = vand.u32 %v618, 4294901760
        %620 = vmatpush.msra.mxu0 %v619
        %v621 = vand.u32 %v316, 4294901760
        %v622 = vsub.f32 %v316, %v621
        %v623 = vand.u32 %v622, 4294901760
        %v624 = vsub.f32 %v622, %v623
        %v625 = vand.u32 %v624, 4294901760
        %626 = vmatpush.msra.mxu0 %v625
        %v627 = vand.u32 %v314, 4294901760
        %v628 = vsub.f32 %v314, %v627
        %v629 = vand.u32 %v628, 4294901760
        %v630 = vsub.f32 %v628, %v629
        %v631 = vand.u32 %v630, 4294901760
        %632 = vmatpush.msra.mxu0 %v631
        %v633 = vand.u32 %v295, 4294901760
        %634 = vmatmul.f32.gmra.mxu0 %v633
        %v635 = vpop.f32.mrf.mxu0
        %v636 = vadd.f32 %v391, %v635
        %v637 = vand.u32 %v296, 4294901760
        %638 = vmatmul.f32.gmra.mxu0 %v637
        %v639 = vpop.f32.mrf.mxu0
        %v640 = vadd.f32 %v399, %v639
        %v641 = vand.u32 %v297, 4294901760
        %642 = vmatmul.f32.gmra.mxu0 %v641
        %v643 = vpop.f32.mrf.mxu0
        %v644 = vadd.f32 %v407, %v643
        %v645 = vand.u32 %v298, 4294901760
        %646 = vmatmul.f32.gmra.mxu0 %v645
        %v647 = vpop.f32.mrf.mxu0
        %v648 = vadd.f32 %v415, %v647
        %v649 = vand.u32 %v299, 4294901760
        %650 = vmatmul.f32.gmra.mxu0 %v649
        %v651 = vpop.f32.mrf.mxu0
        %v652 = vadd.f32 %v423, %v651
        %v653 = vand.u32 %v300, 4294901760
        %654 = vmatmul.f32.gmra.mxu0 %v653
        %v655 = vpop.f32.mrf.mxu0
        %v656 = vadd.f32 %v431, %v655
        %v657 = vand.u32 %v301, 4294901760
        %658 = vmatmul.f32.gmra.mxu0 %v657
        %v659 = vpop.f32.mrf.mxu0
        %v660 = vadd.f32 %v439, %v659
        %v661 = vand.u32 %v302, 4294901760
        %662 = vmatmul.f32.gmra.mxu0 %v661
        %v663 = vpop.f32.mrf.mxu0
        %v664 = vadd.f32 %v447, %v663
        %v665 = vand.u32 %v303, 4294901760
        %666 = vmatmul.f32.gmra.mxu0 %v665
        %v667 = vpop.f32.mrf.mxu0
        %v668 = vadd.f32 %v455, %v667
        %v669 = vand.u32 %v304, 4294901760
        %670 = vmatmul.f32.gmra.mxu0 %v669
        %v671 = vpop.f32.mrf.mxu0
        %v672 = vadd.f32 %v463, %v671
        %v673 = vand.u32 %v305, 4294901760
        %674 = vmatmul.f32.gmra.mxu0 %v673
        %v675 = vpop.f32.mrf.mxu0
        %v676 = vadd.f32 %v471, %v675
        %v677 = vand.u32 %v306, 4294901760
        %678 = vmatmul.f32.gmra.mxu0 %v677
        %v679 = vpop.f32.mrf.mxu0
        %v680 = vadd.f32 %v479, %v679
        %v681 = vand.u32 %v307, 4294901760
        %682 = vmatmul.f32.gmra.mxu0 %v681
        %v683 = vpop.f32.mrf.mxu0
        %v684 = vadd.f32 %v487, %v683
        %v685 = vand.u32 %v308, 4294901760
        %686 = vmatmul.f32.gmra.mxu0 %v685
        %v687 = vpop.f32.mrf.mxu0
        %v688 = vadd.f32 %v495, %v687
        %v689 = vand.u32 %v309, 4294901760
        %690 = vmatmul.f32.gmra.mxu0 %v689
        %v691 = vpop.f32.mrf.mxu0
        %v692 = vadd.f32 %v503, %v691
        %v693 = vand.u32 %v310, 4294901760
        %694 = vmatmul.f32.gmra.mxu0 %v693
        %v695 = vpop.f32.mrf.mxu0
        %v696 = vadd.f32 %v511, %v695
        %v697 = vand.u32 %v311, 4294901760
        %698 = vmatmul.f32.gmra.mxu0 %v697
        %v699 = vpop.f32.mrf.mxu0
        %v700 = vadd.f32 %v519, %v699
        %v701 = vand.u32 %v312, 4294901760
        %702 = vmatmul.f32.gmra.mxu0 %v701
        %v703 = vpop.f32.mrf.mxu0
        %v704 = vadd.f32 %v527, %v703
        %v705 = vand.u32 %v313, 4294901760
        %706 = vmatmul.f32.gmra.mxu0 %v705
        %v707 = vpop.f32.mrf.mxu0
        %v708 = vadd.f32 %v535, %v707
        %709 = vdwg.mxu0
        %v710 = vand.u32 %v344, 4294901760
        %v711 = vsub.f32 %v344, %v710
        %712 = vmatpush.msra.mxu0 %v711
        %v713 = vand.u32 %v342, 4294901760
        %v714 = vsub.f32 %v342, %v713
        %715 = vmatpush.msra.mxu0 %v714
        %v716 = vand.u32 %v340, 4294901760
        %v717 = vsub.f32 %v340, %v716
        %718 = vmatpush.msra.mxu0 %v717
        %v719 = vand.u32 %v338, 4294901760
        %v720 = vsub.f32 %v338, %v719
        %721 = vmatpush.msra.mxu0 %v720
        %v722 = vand.u32 %v336, 4294901760
        %v723 = vsub.f32 %v336, %v722
        %724 = vmatpush.msra.mxu0 %v723
        %v725 = vand.u32 %v334, 4294901760
        %v726 = vsub.f32 %v334, %v725
        %727 = vmatpush.msra.mxu0 %v726
        %v728 = vand.u32 %v332, 4294901760
        %v729 = vsub.f32 %v332, %v728
        %730 = vmatpush.msra.mxu0 %v729
        %v731 = vand.u32 %v330, 4294901760
        %v732 = vsub.f32 %v330, %v731
        %733 = vmatpush.msra.mxu0 %v732
        %v734 = vand.u32 %v328, 4294901760
        %v735 = vsub.f32 %v328, %v734
        %736 = vmatpush.msra.mxu0 %v735
        %v737 = vand.u32 %v326, 4294901760
        %v738 = vsub.f32 %v326, %v737
        %739 = vmatpush.msra.mxu0 %v738
        %v740 = vand.u32 %v324, 4294901760
        %v741 = vsub.f32 %v324, %v740
        %742 = vmatpush.msra.mxu0 %v741
        %v743 = vand.u32 %v322, 4294901760
        %v744 = vsub.f32 %v322, %v743
        %745 = vmatpush.msra.mxu0 %v744
        %v746 = vand.u32 %v320, 4294901760
        %v747 = vsub.f32 %v320, %v746
        %748 = vmatpush.msra.mxu0 %v747
        %v749 = vand.u32 %v318, 4294901760
        %v750 = vsub.f32 %v318, %v749
        %751 = vmatpush.msra.mxu0 %v750
        %v752 = vand.u32 %v316, 4294901760
        %v753 = vsub.f32 %v316, %v752
        %754 = vmatpush.msra.mxu0 %v753
        %v755 = vand.u32 %v314, 4294901760
        %v756 = vsub.f32 %v314, %v755
        %757 = vmatpush.msra.mxu0 %v756
        %v758 = vand.u32 %v295, 4294901760
        %v759 = vsub.f32 %v295, %v758
        %760 = vmatmul.f32.gmra.mxu0 %v759
        %v761 = vpop.f32.mrf.mxu0
        %v762 = vadd.f32 %v636, %v761
        %v763 = vand.u32 %v296, 4294901760
        %v764 = vsub.f32 %v296, %v763
        %765 = vmatmul.f32.gmra.mxu0 %v764
        %v766 = vpop.f32.mrf.mxu0
        %v767 = vadd.f32 %v640, %v766
        %v768 = vand.u32 %v297, 4294901760
        %v769 = vsub.f32 %v297, %v768
        %770 = vmatmul.f32.gmra.mxu0 %v769
        %v771 = vpop.f32.mrf.mxu0
        %v772 = vadd.f32 %v644, %v771
        %v773 = vand.u32 %v298, 4294901760
        %v774 = vsub.f32 %v298, %v773
        %775 = vmatmul.f32.gmra.mxu0 %v774
        %v776 = vpop.f32.mrf.mxu0
        %v777 = vadd.f32 %v648, %v776
        %v778 = vand.u32 %v299, 4294901760
        %v779 = vsub.f32 %v299, %v778
        %780 = vmatmul.f32.gmra.mxu0 %v779
        %v781 = vpop.f32.mrf.mxu0
        %v782 = vadd.f32 %v652, %v781
        %v783 = vand.u32 %v300, 4294901760
        %v784 = vsub.f32 %v300, %v783
        %785 = vmatmul.f32.gmra.mxu0 %v784
        %v786 = vpop.f32.mrf.mxu0
        %v787 = vadd.f32 %v656, %v786
        %v788 = vand.u32 %v301, 4294901760
        %v789 = vsub.f32 %v301, %v788
        %790 = vmatmul.f32.gmra.mxu0 %v789
        %v791 = vpop.f32.mrf.mxu0
        %v792 = vadd.f32 %v660, %v791
        %v793 = vand.u32 %v302, 4294901760
        %v794 = vsub.f32 %v302, %v793
        %795 = vmatmul.f32.gmra.mxu0 %v794
        %v796 = vpop.f32.mrf.mxu0
        %v797 = vadd.f32 %v664, %v796
        %v798 = vand.u32 %v303, 4294901760
        %v799 = vsub.f32 %v303, %v798
        %800 = vmatmul.f32.gmra.mxu0 %v799
        %v801 = vpop.f32.mrf.mxu0
        %v802 = vadd.f32 %v668, %v801
        %v803 = vand.u32 %v304, 4294901760
        %v804 = vsub.f32 %v304, %v803
        %805 = vmatmul.f32.gmra.mxu0 %v804
        %v806 = vpop.f32.mrf.mxu0
        %v807 = vadd.f32 %v672, %v806
        %v808 = vand.u32 %v305, 4294901760
        %v809 = vsub.f32 %v305, %v808
        %810 = vmatmul.f32.gmra.mxu0 %v809
        %v811 = vpop.f32.mrf.mxu0
        %v812 = vadd.f32 %v676, %v811
        %v813 = vand.u32 %v306, 4294901760
        %v814 = vsub.f32 %v306, %v813
        %815 = vmatmul.f32.gmra.mxu0 %v814
        %v816 = vpop.f32.mrf.mxu0
        %v817 = vadd.f32 %v680, %v816
        %v818 = vand.u32 %v307, 4294901760
        %v819 = vsub.f32 %v307, %v818
        %820 = vmatmul.f32.gmra.mxu0 %v819
        %v821 = vpop.f32.mrf.mxu0
        %v822 = vadd.f32 %v684, %v821
        %v823 = vand.u32 %v308, 4294901760
        %v824 = vsub.f32 %v308, %v823
        %825 = vmatmul.f32.gmra.mxu0 %v824
        %v826 = vpop.f32.mrf.mxu0
        %v827 = vadd.f32 %v688, %v826
        %v828 = vand.u32 %v309, 4294901760
        %v829 = vsub.f32 %v309, %v828
        %830 = vmatmul.f32.gmra.mxu0 %v829
        %v831 = vpop.f32.mrf.mxu0
        %v832 = vadd.f32 %v692, %v831
        %v833 = vand.u32 %v310, 4294901760
        %v834 = vsub.f32 %v310, %v833
        %835 = vmatmul.f32.gmra.mxu0 %v834
        %v836 = vpop.f32.mrf.mxu0
        %v837 = vadd.f32 %v696, %v836
        %v838 = vand.u32 %v311, 4294901760
        %v839 = vsub.f32 %v311, %v838
        %840 = vmatmul.f32.gmra.mxu0 %v839
        %v841 = vpop.f32.mrf.mxu0
        %v842 = vadd.f32 %v700, %v841
        %v843 = vand.u32 %v312, 4294901760
        %v844 = vsub.f32 %v312, %v843
        %845 = vmatmul.f32.gmra.mxu0 %v844
        %v846 = vpop.f32.mrf.mxu0
        %v847 = vadd.f32 %v704, %v846
        %v848 = vand.u32 %v313, 4294901760
        %v849 = vsub.f32 %v313, %v848
        %850 = vmatmul.f32.gmra.mxu0 %v849
        %v851 = vpop.f32.mrf.mxu0
        %v852 = vadd.f32 %v708, %v851
        %853 = vdwg.mxu0
        %v854 = vand.u32 %v344, 4294901760
        %855 = vmatpush.msra.mxu0 %v854
        %v856 = vand.u32 %v342, 4294901760
        %857 = vmatpush.msra.mxu0 %v856
        %v858 = vand.u32 %v340, 4294901760
        %859 = vmatpush.msra.mxu0 %v858
        %v860 = vand.u32 %v338, 4294901760
        %861 = vmatpush.msra.mxu0 %v860
        %v862 = vand.u32 %v336, 4294901760
        %863 = vmatpush.msra.mxu0 %v862
        %v864 = vand.u32 %v334, 4294901760
        %865 = vmatpush.msra.mxu0 %v864
        %v866 = vand.u32 %v332, 4294901760
        %867 = vmatpush.msra.mxu0 %v866
        %v868 = vand.u32 %v330, 4294901760
        %869 = vmatpush.msra.mxu0 %v868
        %v870 = vand.u32 %v328, 4294901760
        %871 = vmatpush.msra.mxu0 %v870
        %v872 = vand.u32 %v326, 4294901760
        %873 = vmatpush.msra.mxu0 %v872
        %v874 = vand.u32 %v324, 4294901760
        %875 = vmatpush.msra.mxu0 %v874
        %v876 = vand.u32 %v322, 4294901760
        %877 = vmatpush.msra.mxu0 %v876
        %v878 = vand.u32 %v320, 4294901760
        %879 = vmatpush.msra.mxu0 %v878
        %v880 = vand.u32 %v318, 4294901760
        %881 = vmatpush.msra.mxu0 %v880
        %v882 = vand.u32 %v316, 4294901760
        %883 = vmatpush.msra.mxu0 %v882
        %v884 = vand.u32 %v314, 4294901760
        %885 = vmatpush.msra.mxu0 %v884
        %v886 = vand.u32 %v295, 4294901760
        %v887 = vsub.f32 %v295, %v886
        %v888 = vand.u32 %v887, 4294901760
        %889 = vmatmul.f32.gmra.mxu0 %v888
        %v890 = vpop.f32.mrf.mxu0
        %v891 = vadd.f32 %v762, %v890
        %v892 = vand.u32 %v296, 4294901760
        %v893 = vsub.f32 %v296, %v892
        %v894 = vand.u32 %v893, 4294901760
        %895 = vmatmul.f32.gmra.mxu0 %v894
        %v896 = vpop.f32.mrf.mxu0
        %v897 = vadd.f32 %v767, %v896
        %v898 = vand.u32 %v297, 4294901760
        %v899 = vsub.f32 %v297, %v898
        %v900 = vand.u32 %v899, 4294901760
        %901 = vmatmul.f32.gmra.mxu0 %v900
        %v902 = vpop.f32.mrf.mxu0
        %v903 = vadd.f32 %v772, %v902
        %v904 = vand.u32 %v298, 4294901760
        %v905 = vsub.f32 %v298, %v904
        %v906 = vand.u32 %v905, 4294901760
        %907 = vmatmul.f32.gmra.mxu0 %v906
        %v908 = vpop.f32.mrf.mxu0
        %v909 = vadd.f32 %v777, %v908
        %v910 = vand.u32 %v299, 4294901760
        %v911 = vsub.f32 %v299, %v910
        %v912 = vand.u32 %v911, 4294901760
        %913 = vmatmul.f32.gmra.mxu0 %v912
        %v914 = vpop.f32.mrf.mxu0
        %v915 = vadd.f32 %v782, %v914
        %v916 = vand.u32 %v300, 4294901760
        %v917 = vsub.f32 %v300, %v916
        %v918 = vand.u32 %v917, 4294901760
        %919 = vmatmul.f32.gmra.mxu0 %v918
        %v920 = vpop.f32.mrf.mxu0
        %v921 = vadd.f32 %v787, %v920
        %v922 = vand.u32 %v301, 4294901760
        %v923 = vsub.f32 %v301, %v922
        %v924 = vand.u32 %v923, 4294901760
        %925 = vmatmul.f32.gmra.mxu0 %v924
        %v926 = vpop.f32.mrf.mxu0
        %v927 = vadd.f32 %v792, %v926
        %v928 = vand.u32 %v302, 4294901760
        %v929 = vsub.f32 %v302, %v928
        %v930 = vand.u32 %v929, 4294901760
        %931 = vmatmul.f32.gmra.mxu0 %v930
        %v932 = vpop.f32.mrf.mxu0
        %v933 = vadd.f32 %v797, %v932
        %v934 = vand.u32 %v303, 4294901760
        %v935 = vsub.f32 %v303, %v934
        %v936 = vand.u32 %v935, 4294901760
        %937 = vmatmul.f32.gmra.mxu0 %v936
        %v938 = vpop.f32.mrf.mxu0
        %v939 = vadd.f32 %v802, %v938
        %v940 = vand.u32 %v304, 4294901760
        %v941 = vsub.f32 %v304, %v940
        %v942 = vand.u32 %v941, 4294901760
        %943 = vmatmul.f32.gmra.mxu0 %v942
        %v944 = vpop.f32.mrf.mxu0
        %v945 = vadd.f32 %v807, %v944
        %v946 = vand.u32 %v305, 4294901760
        %v947 = vsub.f32 %v305, %v946
        %v948 = vand.u32 %v947, 4294901760
        %949 = vmatmul.f32.gmra.mxu0 %v948
        %v950 = vpop.f32.mrf.mxu0
        %v951 = vadd.f32 %v812, %v950
        %v952 = vand.u32 %v306, 4294901760
        %v953 = vsub.f32 %v306, %v952
        %v954 = vand.u32 %v953, 4294901760
        %955 = vmatmul.f32.gmra.mxu0 %v954
        %v956 = vpop.f32.mrf.mxu0
        %v957 = vadd.f32 %v817, %v956
        %v958 = vand.u32 %v307, 4294901760
        %v959 = vsub.f32 %v307, %v958
        %v960 = vand.u32 %v959, 4294901760
        %961 = vmatmul.f32.gmra.mxu0 %v960
        %v962 = vpop.f32.mrf.mxu0
        %v963 = vadd.f32 %v822, %v962
        %v964 = vand.u32 %v308, 4294901760
        %v965 = vsub.f32 %v308, %v964
        %v966 = vand.u32 %v965, 4294901760
        %967 = vmatmul.f32.gmra.mxu0 %v966
        %v968 = vpop.f32.mrf.mxu0
        %v969 = vadd.f32 %v827, %v968
        %v970 = vand.u32 %v309, 4294901760
        %v971 = vsub.f32 %v309, %v970
        %v972 = vand.u32 %v971, 4294901760
        %973 = vmatmul.f32.gmra.mxu0 %v972
        %v974 = vpop.f32.mrf.mxu0
        %v975 = vadd.f32 %v832, %v974
        %v976 = vand.u32 %v310, 4294901760
        %v977 = vsub.f32 %v310, %v976
        %v978 = vand.u32 %v977, 4294901760
        %979 = vmatmul.f32.gmra.mxu0 %v978
        %v980 = vpop.f32.mrf.mxu0
        %v981 = vadd.f32 %v837, %v980
        %v982 = vand.u32 %v311, 4294901760
        %v983 = vsub.f32 %v311, %v982
        %v984 = vand.u32 %v983, 4294901760
        %985 = vmatmul.f32.gmra.mxu0 %v984
        %v986 = vpop.f32.mrf.mxu0
        %v987 = vadd.f32 %v842, %v986
        %v988 = vand.u32 %v312, 4294901760
        %v989 = vsub.f32 %v312, %v988
        %v990 = vand.u32 %v989, 4294901760
        %991 = vmatmul.f32.gmra.mxu0 %v990
        %v992 = vpop.f32.mrf.mxu0
        %v993 = vadd.f32 %v847, %v992
        %v994 = vand.u32 %v313, 4294901760
        %v995 = vsub.f32 %v313, %v994
        %v996 = vand.u32 %v995, 4294901760
        %997 = vmatmul.f32.gmra.mxu0 %v996
        %v998 = vpop.f32.mrf.mxu0
        %v999 = vadd.f32 %v852, %v998
        %1000 = vdwg.mxu0
        %v1001 = vand.u32 %v344, 4294901760
        %v1002 = vsub.f32 %v344, %v1001
        %v1003 = vand.u32 %v1002, 4294901760
        %1004 = vmatpush.msra.mxu0 %v1003
        %v1005 = vand.u32 %v342, 4294901760
        %v1006 = vsub.f32 %v342, %v1005
        %v1007 = vand.u32 %v1006, 4294901760
        %1008 = vmatpush.msra.mxu0 %v1007
        %v1009 = vand.u32 %v340, 4294901760
        %v1010 = vsub.f32 %v340, %v1009
        %v1011 = vand.u32 %v1010, 4294901760
        %1012 = vmatpush.msra.mxu0 %v1011
        %v1013 = vand.u32 %v338, 4294901760
        %v1014 = vsub.f32 %v338, %v1013
        %v1015 = vand.u32 %v1014, 4294901760
        %1016 = vmatpush.msra.mxu0 %v1015
        %v1017 = vand.u32 %v336, 4294901760
        %v1018 = vsub.f32 %v336, %v1017
        %v1019 = vand.u32 %v1018, 4294901760
        %1020 = vmatpush.msra.mxu0 %v1019
        %v1021 = vand.u32 %v334, 4294901760
        %v1022 = vsub.f32 %v334, %v1021
        %v1023 = vand.u32 %v1022, 4294901760
        %1024 = vmatpush.msra.mxu0 %v1023
        %v1025 = vand.u32 %v332, 4294901760
        %v1026 = vsub.f32 %v332, %v1025
        %v1027 = vand.u32 %v1026, 4294901760
        %1028 = vmatpush.msra.mxu0 %v1027
        %v1029 = vand.u32 %v330, 4294901760
        %v1030 = vsub.f32 %v330, %v1029
        %v1031 = vand.u32 %v1030, 4294901760
        %1032 = vmatpush.msra.mxu0 %v1031
        %v1033 = vand.u32 %v328, 4294901760
        %v1034 = vsub.f32 %v328, %v1033
        %v1035 = vand.u32 %v1034, 4294901760
        %1036 = vmatpush.msra.mxu0 %v1035
        %v1037 = vand.u32 %v326, 4294901760
        %v1038 = vsub.f32 %v326, %v1037
        %v1039 = vand.u32 %v1038, 4294901760
        %1040 = vmatpush.msra.mxu0 %v1039
        %v1041 = vand.u32 %v324, 4294901760
        %v1042 = vsub.f32 %v324, %v1041
        %v1043 = vand.u32 %v1042, 4294901760
        %1044 = vmatpush.msra.mxu0 %v1043
        %v1045 = vand.u32 %v322, 4294901760
        %v1046 = vsub.f32 %v322, %v1045
        %v1047 = vand.u32 %v1046, 4294901760
        %1048 = vmatpush.msra.mxu0 %v1047
        %v1049 = vand.u32 %v320, 4294901760
        %v1050 = vsub.f32 %v320, %v1049
        %v1051 = vand.u32 %v1050, 4294901760
        %1052 = vmatpush.msra.mxu0 %v1051
        %v1053 = vand.u32 %v318, 4294901760
        %v1054 = vsub.f32 %v318, %v1053
        %v1055 = vand.u32 %v1054, 4294901760
        %1056 = vmatpush.msra.mxu0 %v1055
        %v1057 = vand.u32 %v316, 4294901760
        %v1058 = vsub.f32 %v316, %v1057
        %v1059 = vand.u32 %v1058, 4294901760
        %1060 = vmatpush.msra.mxu0 %v1059
        %v1061 = vand.u32 %v314, 4294901760
        %v1062 = vsub.f32 %v314, %v1061
        %v1063 = vand.u32 %v1062, 4294901760
        %1064 = vmatpush.msra.mxu0 %v1063
        %v1065 = vand.u32 %v295, 4294901760
        %1066 = vmatmul.f32.gmra.mxu0 %v1065
        %v1067 = vpop.f32.mrf.mxu0
        %v1068 = vadd.f32 %v891, %v1067
        %v1069 = vand.u32 %v296, 4294901760
        %1070 = vmatmul.f32.gmra.mxu0 %v1069
        %v1071 = vpop.f32.mrf.mxu0
        %v1072 = vadd.f32 %v897, %v1071
        %v1073 = vand.u32 %v297, 4294901760
        %1074 = vmatmul.f32.gmra.mxu0 %v1073
        %v1075 = vpop.f32.mrf.mxu0
        %v1076 = vadd.f32 %v903, %v1075
        %v1077 = vand.u32 %v298, 4294901760
        %1078 = vmatmul.f32.gmra.mxu0 %v1077
        %v1079 = vpop.f32.mrf.mxu0
        %v1080 = vadd.f32 %v909, %v1079
        %v1081 = vand.u32 %v299, 4294901760
        %1082 = vmatmul.f32.gmra.mxu0 %v1081
        %v1083 = vpop.f32.mrf.mxu0
        %v1084 = vadd.f32 %v915, %v1083
        %v1085 = vand.u32 %v300, 4294901760
        %1086 = vmatmul.f32.gmra.mxu0 %v1085
        %v1087 = vpop.f32.mrf.mxu0
        %v1088 = vadd.f32 %v921, %v1087
        %v1089 = vand.u32 %v301, 4294901760
        %1090 = vmatmul.f32.gmra.mxu0 %v1089
        %v1091 = vpop.f32.mrf.mxu0
        %v1092 = vadd.f32 %v927, %v1091
        %v1093 = vand.u32 %v302, 4294901760
        %1094 = vmatmul.f32.gmra.mxu0 %v1093
        %v1095 = vpop.f32.mrf.mxu0
        %v1096 = vadd.f32 %v933, %v1095
        %v1097 = vand.u32 %v303, 4294901760
        %1098 = vmatmul.f32.gmra.mxu0 %v1097
        %v1099 = vpop.f32.mrf.mxu0
        %v1100 = vadd.f32 %v939, %v1099
        %v1101 = vand.u32 %v304, 4294901760
        %1102 = vmatmul.f32.gmra.mxu0 %v1101
        %v1103 = vpop.f32.mrf.mxu0
        %v1104 = vadd.f32 %v945, %v1103
        %v1105 = vand.u32 %v305, 4294901760
        %1106 = vmatmul.f32.gmra.mxu0 %v1105
        %v1107 = vpop.f32.mrf.mxu0
        %v1108 = vadd.f32 %v951, %v1107
        %v1109 = vand.u32 %v306, 4294901760
        %1110 = vmatmul.f32.gmra.mxu0 %v1109
        %v1111 = vpop.f32.mrf.mxu0
        %v1112 = vadd.f32 %v957, %v1111
        %v1113 = vand.u32 %v307, 4294901760
        %1114 = vmatmul.f32.gmra.mxu0 %v1113
        %v1115 = vpop.f32.mrf.mxu0
        %v1116 = vadd.f32 %v963, %v1115
        %v1117 = vand.u32 %v308, 4294901760
        %1118 = vmatmul.f32.gmra.mxu0 %v1117
        %v1119 = vpop.f32.mrf.mxu0
        %v1120 = vadd.f32 %v969, %v1119
        %v1121 = vand.u32 %v309, 4294901760
        %1122 = vmatmul.f32.gmra.mxu0 %v1121
        %v1123 = vpop.f32.mrf.mxu0
        %v1124 = vadd.f32 %v975, %v1123
        %v1125 = vand.u32 %v310, 4294901760
        %1126 = vmatmul.f32.gmra.mxu0 %v1125
        %v1127 = vpop.f32.mrf.mxu0
        %v1128 = vadd.f32 %v981, %v1127
        %v1129 = vand.u32 %v311, 4294901760
        %1130 = vmatmul.f32.gmra.mxu0 %v1129
        %v1131 = vpop.f32.mrf.mxu0
        %v1132 = vadd.f32 %v987, %v1131
        %v1133 = vand.u32 %v312, 4294901760
        %1134 = vmatmul.f32.gmra.mxu0 %v1133
        %v1135 = vpop.f32.mrf.mxu0
        %v1136 = vadd.f32 %v993, %v1135
        %v1137 = vand.u32 %v313, 4294901760
        %1138 = vmatmul.f32.gmra.mxu0 %v1137
        %v1139 = vpop.f32.mrf.mxu0
        %v1140 = vadd.f32 %v999, %v1139
        %1141 = vdwg.mxu0
        %v1142 = vand.u32 %v344, 4294901760
        %1143 = vmatpush.msra.mxu0 %v1142
        %v1144 = vand.u32 %v342, 4294901760
        %1145 = vmatpush.msra.mxu0 %v1144
        %v1146 = vand.u32 %v340, 4294901760
        %1147 = vmatpush.msra.mxu0 %v1146
        %v1148 = vand.u32 %v338, 4294901760
        %1149 = vmatpush.msra.mxu0 %v1148
        %v1150 = vand.u32 %v336, 4294901760
        %1151 = vmatpush.msra.mxu0 %v1150
        %v1152 = vand.u32 %v334, 4294901760
        %1153 = vmatpush.msra.mxu0 %v1152
        %v1154 = vand.u32 %v332, 4294901760
        %1155 = vmatpush.msra.mxu0 %v1154
        %v1156 = vand.u32 %v330, 4294901760
        %1157 = vmatpush.msra.mxu0 %v1156
        %v1158 = vand.u32 %v328, 4294901760
        %1159 = vmatpush.msra.mxu0 %v1158
        %v1160 = vand.u32 %v326, 4294901760
        %1161 = vmatpush.msra.mxu0 %v1160
        %v1162 = vand.u32 %v324, 4294901760
        %1163 = vmatpush.msra.mxu0 %v1162
        %v1164 = vand.u32 %v322, 4294901760
        %1165 = vmatpush.msra.mxu0 %v1164
        %v1166 = vand.u32 %v320, 4294901760
        %1167 = vmatpush.msra.mxu0 %v1166
        %v1168 = vand.u32 %v318, 4294901760
        %1169 = vmatpush.msra.mxu0 %v1168
        %v1170 = vand.u32 %v316, 4294901760
        %1171 = vmatpush.msra.mxu0 %v1170
        %v1172 = vand.u32 %v314, 4294901760
        %1173 = vmatpush.msra.mxu0 %v1172
        %v1174 = vand.u32 %v295, 4294901760
        %1175 = vmatmul.f32.gmra.mxu0 %v1174
        %v1176 = vpop.f32.mrf.mxu0
        %v1177 = vadd.f32 %v1068, %v1176
        %v1178 = vand.u32 %v296, 4294901760
        %1179 = vmatmul.f32.gmra.mxu0 %v1178
        %v1180 = vpop.f32.mrf.mxu0
        %v1181 = vadd.f32 %v1072, %v1180
        %v1182 = vand.u32 %v297, 4294901760
        %1183 = vmatmul.f32.gmra.mxu0 %v1182
        %v1184 = vpop.f32.mrf.mxu0
        %v1185 = vadd.f32 %v1076, %v1184
        %v1186 = vand.u32 %v298, 4294901760
        %1187 = vmatmul.f32.gmra.mxu0 %v1186
        %v1188 = vpop.f32.mrf.mxu0
        %v1189 = vadd.f32 %v1080, %v1188
        %v1190 = vand.u32 %v299, 4294901760
        %1191 = vmatmul.f32.gmra.mxu0 %v1190
        %v1192 = vpop.f32.mrf.mxu0
        %v1193 = vadd.f32 %v1084, %v1192
        %v1194 = vand.u32 %v300, 4294901760
        %1195 = vmatmul.f32.gmra.mxu0 %v1194
        %v1196 = vpop.f32.mrf.mxu0
        %v1197 = vadd.f32 %v1088, %v1196
        %v1198 = vand.u32 %v301, 4294901760
        %1199 = vmatmul.f32.gmra.mxu0 %v1198
        %v1200 = vpop.f32.mrf.mxu0
        %v1201 = vadd.f32 %v1092, %v1200
        %v1202 = vand.u32 %v302, 4294901760
        %1203 = vmatmul.f32.gmra.mxu0 %v1202
        %v1204 = vpop.f32.mrf.mxu0
        %v1205 = vadd.f32 %v1096, %v1204
        %v1206 = vand.u32 %v303, 4294901760
        %1207 = vmatmul.f32.gmra.mxu0 %v1206
        %v1208 = vpop.f32.mrf.mxu0
        %v1209 = vadd.f32 %v1100, %v1208
        %v1210 = vand.u32 %v304, 4294901760
        %1211 = vmatmul.f32.gmra.mxu0 %v1210
        %v1212 = vpop.f32.mrf.mxu0
        %v1213 = vadd.f32 %v1104, %v1212
        %v1214 = vand.u32 %v305, 4294901760
        %1215 = vmatmul.f32.gmra.mxu0 %v1214
        %v1216 = vpop.f32.mrf.mxu0
        %v1217 = vadd.f32 %v1108, %v1216
        %v1218 = vand.u32 %v306, 4294901760
        %1219 = vmatmul.f32.gmra.mxu0 %v1218
        %v1220 = vpop.f32.mrf.mxu0
        %v1221 = vadd.f32 %v1112, %v1220
        %v1222 = vand.u32 %v307, 4294901760
        %1223 = vmatmul.f32.gmra.mxu0 %v1222
        %v1224 = vpop.f32.mrf.mxu0
        %v1225 = vadd.f32 %v1116, %v1224
        %v1226 = vand.u32 %v308, 4294901760
        %1227 = vmatmul.f32.gmra.mxu0 %v1226
        %v1228 = vpop.f32.mrf.mxu0
        %v1229 = vadd.f32 %v1120, %v1228
        %v1230 = vand.u32 %v309, 4294901760
        %1231 = vmatmul.f32.gmra.mxu0 %v1230
        %v1232 = vpop.f32.mrf.mxu0
        %v1233 = vadd.f32 %v1124, %v1232
        %v1234 = vand.u32 %v310, 4294901760
        %1235 = vmatmul.f32.gmra.mxu0 %v1234
        %v1236 = vpop.f32.mrf.mxu0
        %v1237 = vadd.f32 %v1128, %v1236
        %v1238 = vand.u32 %v311, 4294901760
        %1239 = vmatmul.f32.gmra.mxu0 %v1238
        %v1240 = vpop.f32.mrf.mxu0
        %v1241 = vadd.f32 %v1132, %v1240
        %v1242 = vand.u32 %v312, 4294901760
        %1243 = vmatmul.f32.gmra.mxu0 %v1242
        %v1244 = vpop.f32.mrf.mxu0
        %v1245 = vadd.f32 %v1136, %v1244
        %v1246 = vand.u32 %v313, 4294901760
        %1247 = vmatmul.f32.gmra.mxu0 %v1246
        %v1248 = vpop.f32.mrf.mxu0
        %v1249 = vadd.f32 %v1140, %v1248
        %1250 = vdwg.mxu0
        %v1251 = vand.u32 %v345, 4294901760
        %1252 = vmatpush.msra.mxu0 %v1251
        %v1253 = vand.u32 %v343, 4294901760
        %1254 = vmatpush.msra.mxu0 %v1253
        %v1255 = vand.u32 %v341, 4294901760
        %1256 = vmatpush.msra.mxu0 %v1255
        %v1257 = vand.u32 %v339, 4294901760
        %1258 = vmatpush.msra.mxu0 %v1257
        %v1259 = vand.u32 %v337, 4294901760
        %1260 = vmatpush.msra.mxu0 %v1259
        %v1261 = vand.u32 %v335, 4294901760
        %1262 = vmatpush.msra.mxu0 %v1261
        %v1263 = vand.u32 %v333, 4294901760
        %1264 = vmatpush.msra.mxu0 %v1263
        %v1265 = vand.u32 %v331, 4294901760
        %1266 = vmatpush.msra.mxu0 %v1265
        %v1267 = vand.u32 %v329, 4294901760
        %1268 = vmatpush.msra.mxu0 %v1267
        %v1269 = vand.u32 %v327, 4294901760
        %1270 = vmatpush.msra.mxu0 %v1269
        %v1271 = vand.u32 %v325, 4294901760
        %1272 = vmatpush.msra.mxu0 %v1271
        %v1273 = vand.u32 %v323, 4294901760
        %1274 = vmatpush.msra.mxu0 %v1273
        %v1275 = vand.u32 %v321, 4294901760
        %1276 = vmatpush.msra.mxu0 %v1275
        %v1277 = vand.u32 %v319, 4294901760
        %1278 = vmatpush.msra.mxu0 %v1277
        %v1279 = vand.u32 %v317, 4294901760
        %1280 = vmatpush.msra.mxu0 %v1279
        %v1281 = vand.u32 %v315, 4294901760
        %1282 = vmatpush.msra.mxu0 %v1281
        %v1283 = vand.u32 %v295, 4294901760
        %v1284 = vsub.f32 %v295, %v1283
        %v1285 = vand.u32 %v1284, 4294901760
        %v1286 = vsub.f32 %v1284, %v1285
        %v1287 = vand.u32 %v1286, 4294901760
        %1288 = vmatmul.f32.gmra.mxu0 %v1287
        %v1289 = vpop.f32.mrf.mxu0
        %v1290 = vadd.f32 %v349, %v1289
        %v1291 = vand.u32 %v296, 4294901760
        %v1292 = vsub.f32 %v296, %v1291
        %v1293 = vand.u32 %v1292, 4294901760
        %v1294 = vsub.f32 %v1292, %v1293
        %v1295 = vand.u32 %v1294, 4294901760
        %1296 = vmatmul.f32.gmra.mxu0 %v1295
        %v1297 = vpop.f32.mrf.mxu0
        %v1298 = vadd.f32 %v349, %v1297
        %v1299 = vand.u32 %v297, 4294901760
        %v1300 = vsub.f32 %v297, %v1299
        %v1301 = vand.u32 %v1300, 4294901760
        %v1302 = vsub.f32 %v1300, %v1301
        %v1303 = vand.u32 %v1302, 4294901760
        %1304 = vmatmul.f32.gmra.mxu0 %v1303
        %v1305 = vpop.f32.mrf.mxu0
        %v1306 = vadd.f32 %v349, %v1305
        %v1307 = vand.u32 %v298, 4294901760
        %v1308 = vsub.f32 %v298, %v1307
        %v1309 = vand.u32 %v1308, 4294901760
        %v1310 = vsub.f32 %v1308, %v1309
        %v1311 = vand.u32 %v1310, 4294901760
        %1312 = vmatmul.f32.gmra.mxu0 %v1311
        %v1313 = vpop.f32.mrf.mxu0
        %v1314 = vadd.f32 %v349, %v1313
        %v1315 = vand.u32 %v299, 4294901760
        %v1316 = vsub.f32 %v299, %v1315
        %v1317 = vand.u32 %v1316, 4294901760
        %v1318 = vsub.f32 %v1316, %v1317
        %v1319 = vand.u32 %v1318, 4294901760
        %1320 = vmatmul.f32.gmra.mxu0 %v1319
        %v1321 = vpop.f32.mrf.mxu0
        %v1322 = vadd.f32 %v349, %v1321
        %v1323 = vand.u32 %v300, 4294901760
        %v1324 = vsub.f32 %v300, %v1323
        %v1325 = vand.u32 %v1324, 4294901760
        %v1326 = vsub.f32 %v1324, %v1325
        %v1327 = vand.u32 %v1326, 4294901760
        %1328 = vmatmul.f32.gmra.mxu0 %v1327
        %v1329 = vpop.f32.mrf.mxu0
        %v1330 = vadd.f32 %v349, %v1329
        %v1331 = vand.u32 %v301, 4294901760
        %v1332 = vsub.f32 %v301, %v1331
        %v1333 = vand.u32 %v1332, 4294901760
        %v1334 = vsub.f32 %v1332, %v1333
        %v1335 = vand.u32 %v1334, 4294901760
        %1336 = vmatmul.f32.gmra.mxu0 %v1335
        %v1337 = vpop.f32.mrf.mxu0
        %v1338 = vadd.f32 %v349, %v1337
        %v1339 = vand.u32 %v302, 4294901760
        %v1340 = vsub.f32 %v302, %v1339
        %v1341 = vand.u32 %v1340, 4294901760
        %v1342 = vsub.f32 %v1340, %v1341
        %v1343 = vand.u32 %v1342, 4294901760
        %1344 = vmatmul.f32.gmra.mxu0 %v1343
        %v1345 = vpop.f32.mrf.mxu0
        %v1346 = vadd.f32 %v349, %v1345
        %v1347 = vand.u32 %v303, 4294901760
        %v1348 = vsub.f32 %v303, %v1347
        %v1349 = vand.u32 %v1348, 4294901760
        %v1350 = vsub.f32 %v1348, %v1349
        %v1351 = vand.u32 %v1350, 4294901760
        %1352 = vmatmul.f32.gmra.mxu0 %v1351
        %v1353 = vpop.f32.mrf.mxu0
        %v1354 = vadd.f32 %v349, %v1353
        %v1355 = vand.u32 %v304, 4294901760
        %v1356 = vsub.f32 %v304, %v1355
        %v1357 = vand.u32 %v1356, 4294901760
        %v1358 = vsub.f32 %v1356, %v1357
        %v1359 = vand.u32 %v1358, 4294901760
        %1360 = vmatmul.f32.gmra.mxu0 %v1359
        %v1361 = vpop.f32.mrf.mxu0
        %v1362 = vadd.f32 %v349, %v1361
        %v1363 = vand.u32 %v305, 4294901760
        %v1364 = vsub.f32 %v305, %v1363
        %v1365 = vand.u32 %v1364, 4294901760
        %v1366 = vsub.f32 %v1364, %v1365
        %v1367 = vand.u32 %v1366, 4294901760
        %1368 = vmatmul.f32.gmra.mxu0 %v1367
        %v1369 = vpop.f32.mrf.mxu0
        %v1370 = vadd.f32 %v349, %v1369
        %v1371 = vand.u32 %v306, 4294901760
        %v1372 = vsub.f32 %v306, %v1371
        %v1373 = vand.u32 %v1372, 4294901760
        %v1374 = vsub.f32 %v1372, %v1373
        %v1375 = vand.u32 %v1374, 4294901760
        %1376 = vmatmul.f32.gmra.mxu0 %v1375
        %v1377 = vpop.f32.mrf.mxu0
        %v1378 = vadd.f32 %v349, %v1377
        %v1379 = vand.u32 %v307, 4294901760
        %v1380 = vsub.f32 %v307, %v1379
        %v1381 = vand.u32 %v1380, 4294901760
        %v1382 = vsub.f32 %v1380, %v1381
        %v1383 = vand.u32 %v1382, 4294901760
        %1384 = vmatmul.f32.gmra.mxu0 %v1383
        %v1385 = vpop.f32.mrf.mxu0
        %v1386 = vadd.f32 %v349, %v1385
        %v1387 = vand.u32 %v308, 4294901760
        %v1388 = vsub.f32 %v308, %v1387
        %v1389 = vand.u32 %v1388, 4294901760
        %v1390 = vsub.f32 %v1388, %v1389
        %v1391 = vand.u32 %v1390, 4294901760
        %1392 = vmatmul.f32.gmra.mxu0 %v1391
        %v1393 = vpop.f32.mrf.mxu0
        %v1394 = vadd.f32 %v349, %v1393
        %v1395 = vand.u32 %v309, 4294901760
        %v1396 = vsub.f32 %v309, %v1395
        %v1397 = vand.u32 %v1396, 4294901760
        %v1398 = vsub.f32 %v1396, %v1397
        %v1399 = vand.u32 %v1398, 4294901760
        %1400 = vmatmul.f32.gmra.mxu0 %v1399
        %v1401 = vpop.f32.mrf.mxu0
        %v1402 = vadd.f32 %v349, %v1401
        %v1403 = vand.u32 %v310, 4294901760
        %v1404 = vsub.f32 %v310, %v1403
        %v1405 = vand.u32 %v1404, 4294901760
        %v1406 = vsub.f32 %v1404, %v1405
        %v1407 = vand.u32 %v1406, 4294901760
        %1408 = vmatmul.f32.gmra.mxu0 %v1407
        %v1409 = vpop.f32.mrf.mxu0
        %v1410 = vadd.f32 %v349, %v1409
        %v1411 = vand.u32 %v311, 4294901760
        %v1412 = vsub.f32 %v311, %v1411
        %v1413 = vand.u32 %v1412, 4294901760
        %v1414 = vsub.f32 %v1412, %v1413
        %v1415 = vand.u32 %v1414, 4294901760
        %1416 = vmatmul.f32.gmra.mxu0 %v1415
        %v1417 = vpop.f32.mrf.mxu0
        %v1418 = vadd.f32 %v349, %v1417
        %v1419 = vand.u32 %v312, 4294901760
        %v1420 = vsub.f32 %v312, %v1419
        %v1421 = vand.u32 %v1420, 4294901760
        %v1422 = vsub.f32 %v1420, %v1421
        %v1423 = vand.u32 %v1422, 4294901760
        %1424 = vmatmul.f32.gmra.mxu0 %v1423
        %v1425 = vpop.f32.mrf.mxu0
        %v1426 = vadd.f32 %v349, %v1425
        %v1427 = vand.u32 %v313, 4294901760
        %v1428 = vsub.f32 %v313, %v1427
        %v1429 = vand.u32 %v1428, 4294901760
        %v1430 = vsub.f32 %v1428, %v1429
        %v1431 = vand.u32 %v1430, 4294901760
        %1432 = vmatmul.f32.gmra.mxu0 %v1431
        %v1433 = vpop.f32.mrf.mxu0
        %v1434 = vadd.f32 %v349, %v1433
        %1435 = vdwg.mxu0
        %v1436 = vand.u32 %v345, 4294901760
        %v1437 = vsub.f32 %v345, %v1436
        %v1438 = vand.u32 %v1437, 4294901760
        %v1439 = vsub.f32 %v1437, %v1438
        %v1440 = vand.u32 %v1439, 4294901760
        %1441 = vmatpush.msra.mxu0 %v1440
        %v1442 = vand.u32 %v343, 4294901760
        %v1443 = vsub.f32 %v343, %v1442
        %v1444 = vand.u32 %v1443, 4294901760
        %v1445 = vsub.f32 %v1443, %v1444
        %v1446 = vand.u32 %v1445, 4294901760
        %1447 = vmatpush.msra.mxu0 %v1446
        %v1448 = vand.u32 %v341, 4294901760
        %v1449 = vsub.f32 %v341, %v1448
        %v1450 = vand.u32 %v1449, 4294901760
        %v1451 = vsub.f32 %v1449, %v1450
        %v1452 = vand.u32 %v1451, 4294901760
        %1453 = vmatpush.msra.mxu0 %v1452
        %v1454 = vand.u32 %v339, 4294901760
        %v1455 = vsub.f32 %v339, %v1454
        %v1456 = vand.u32 %v1455, 4294901760
        %v1457 = vsub.f32 %v1455, %v1456
        %v1458 = vand.u32 %v1457, 4294901760
        %1459 = vmatpush.msra.mxu0 %v1458
        %v1460 = vand.u32 %v337, 4294901760
        %v1461 = vsub.f32 %v337, %v1460
        %v1462 = vand.u32 %v1461, 4294901760
        %v1463 = vsub.f32 %v1461, %v1462
        %v1464 = vand.u32 %v1463, 4294901760
        %1465 = vmatpush.msra.mxu0 %v1464
        %v1466 = vand.u32 %v335, 4294901760
        %v1467 = vsub.f32 %v335, %v1466
        %v1468 = vand.u32 %v1467, 4294901760
        %v1469 = vsub.f32 %v1467, %v1468
        %v1470 = vand.u32 %v1469, 4294901760
        %1471 = vmatpush.msra.mxu0 %v1470
        %v1472 = vand.u32 %v333, 4294901760
        %v1473 = vsub.f32 %v333, %v1472
        %v1474 = vand.u32 %v1473, 4294901760
        %v1475 = vsub.f32 %v1473, %v1474
        %v1476 = vand.u32 %v1475, 4294901760
        %1477 = vmatpush.msra.mxu0 %v1476
        %v1478 = vand.u32 %v331, 4294901760
        %v1479 = vsub.f32 %v331, %v1478
        %v1480 = vand.u32 %v1479, 4294901760
        %v1481 = vsub.f32 %v1479, %v1480
        %v1482 = vand.u32 %v1481, 4294901760
        %1483 = vmatpush.msra.mxu0 %v1482
        %v1484 = vand.u32 %v329, 4294901760
        %v1485 = vsub.f32 %v329, %v1484
        %v1486 = vand.u32 %v1485, 4294901760
        %v1487 = vsub.f32 %v1485, %v1486
        %v1488 = vand.u32 %v1487, 4294901760
        %1489 = vmatpush.msra.mxu0 %v1488
        %v1490 = vand.u32 %v327, 4294901760
        %v1491 = vsub.f32 %v327, %v1490
        %v1492 = vand.u32 %v1491, 4294901760
        %v1493 = vsub.f32 %v1491, %v1492
        %v1494 = vand.u32 %v1493, 4294901760
        %1495 = vmatpush.msra.mxu0 %v1494
        %v1496 = vand.u32 %v325, 4294901760
        %v1497 = vsub.f32 %v325, %v1496
        %v1498 = vand.u32 %v1497, 4294901760
        %v1499 = vsub.f32 %v1497, %v1498
        %v1500 = vand.u32 %v1499, 4294901760
        %1501 = vmatpush.msra.mxu0 %v1500
        %v1502 = vand.u32 %v323, 4294901760
        %v1503 = vsub.f32 %v323, %v1502
        %v1504 = vand.u32 %v1503, 4294901760
        %v1505 = vsub.f32 %v1503, %v1504
        %v1506 = vand.u32 %v1505, 4294901760
        %1507 = vmatpush.msra.mxu0 %v1506
        %v1508 = vand.u32 %v321, 4294901760
        %v1509 = vsub.f32 %v321, %v1508
        %v1510 = vand.u32 %v1509, 4294901760
        %v1511 = vsub.f32 %v1509, %v1510
        %v1512 = vand.u32 %v1511, 4294901760
        %1513 = vmatpush.msra.mxu0 %v1512
        %v1514 = vand.u32 %v319, 4294901760
        %v1515 = vsub.f32 %v319, %v1514
        %v1516 = vand.u32 %v1515, 4294901760
        %v1517 = vsub.f32 %v1515, %v1516
        %v1518 = vand.u32 %v1517, 4294901760
        %1519 = vmatpush.msra.mxu0 %v1518
        %v1520 = vand.u32 %v317, 4294901760
        %v1521 = vsub.f32 %v317, %v1520
        %v1522 = vand.u32 %v1521, 4294901760
        %v1523 = vsub.f32 %v1521, %v1522
        %v1524 = vand.u32 %v1523, 4294901760
        %1525 = vmatpush.msra.mxu0 %v1524
        %v1526 = vand.u32 %v315, 4294901760
        %v1527 = vsub.f32 %v315, %v1526
        %v1528 = vand.u32 %v1527, 4294901760
        %v1529 = vsub.f32 %v1527, %v1528
        %v1530 = vand.u32 %v1529, 4294901760
        %1531 = vmatpush.msra.mxu0 %v1530
        %v1532 = vand.u32 %v295, 4294901760
        %1533 = vmatmul.f32.gmra.mxu0 %v1532
        %v1534 = vpop.f32.mrf.mxu0
        %v1535 = vadd.f32 %v1290, %v1534
        %v1536 = vand.u32 %v296, 4294901760
        %1537 = vmatmul.f32.gmra.mxu0 %v1536
        %v1538 = vpop.f32.mrf.mxu0
        %v1539 = vadd.f32 %v1298, %v1538
        %v1540 = vand.u32 %v297, 4294901760
        %1541 = vmatmul.f32.gmra.mxu0 %v1540
        %v1542 = vpop.f32.mrf.mxu0
        %v1543 = vadd.f32 %v1306, %v1542
        %v1544 = vand.u32 %v298, 4294901760
        %1545 = vmatmul.f32.gmra.mxu0 %v1544
        %v1546 = vpop.f32.mrf.mxu0
        %v1547 = vadd.f32 %v1314, %v1546
        %v1548 = vand.u32 %v299, 4294901760
        %1549 = vmatmul.f32.gmra.mxu0 %v1548
        %v1550 = vpop.f32.mrf.mxu0
        %v1551 = vadd.f32 %v1322, %v1550
        %v1552 = vand.u32 %v300, 4294901760
        %1553 = vmatmul.f32.gmra.mxu0 %v1552
        %v1554 = vpop.f32.mrf.mxu0
        %v1555 = vadd.f32 %v1330, %v1554
        %v1556 = vand.u32 %v301, 4294901760
        %1557 = vmatmul.f32.gmra.mxu0 %v1556
        %v1558 = vpop.f32.mrf.mxu0
        %v1559 = vadd.f32 %v1338, %v1558
        %v1560 = vand.u32 %v302, 4294901760
        %1561 = vmatmul.f32.gmra.mxu0 %v1560
        %v1562 = vpop.f32.mrf.mxu0
        %v1563 = vadd.f32 %v1346, %v1562
        %v1564 = vand.u32 %v303, 4294901760
        %1565 = vmatmul.f32.gmra.mxu0 %v1564
        %v1566 = vpop.f32.mrf.mxu0
        %v1567 = vadd.f32 %v1354, %v1566
        %v1568 = vand.u32 %v304, 4294901760
        %1569 = vmatmul.f32.gmra.mxu0 %v1568
        %v1570 = vpop.f32.mrf.mxu0
        %v1571 = vadd.f32 %v1362, %v1570
        %v1572 = vand.u32 %v305, 4294901760
        %1573 = vmatmul.f32.gmra.mxu0 %v1572
        %v1574 = vpop.f32.mrf.mxu0
        %v1575 = vadd.f32 %v1370, %v1574
        %v1576 = vand.u32 %v306, 4294901760
        %1577 = vmatmul.f32.gmra.mxu0 %v1576
        %v1578 = vpop.f32.mrf.mxu0
        %v1579 = vadd.f32 %v1378, %v1578
        %v1580 = vand.u32 %v307, 4294901760
        %1581 = vmatmul.f32.gmra.mxu0 %v1580
        %v1582 = vpop.f32.mrf.mxu0
        %v1583 = vadd.f32 %v1386, %v1582
        %v1584 = vand.u32 %v308, 4294901760
        %1585 = vmatmul.f32.gmra.mxu0 %v1584
        %v1586 = vpop.f32.mrf.mxu0
        %v1587 = vadd.f32 %v1394, %v1586
        %v1588 = vand.u32 %v309, 4294901760
        %1589 = vmatmul.f32.gmra.mxu0 %v1588
        %v1590 = vpop.f32.mrf.mxu0
        %v1591 = vadd.f32 %v1402, %v1590
        %v1592 = vand.u32 %v310, 4294901760
        %1593 = vmatmul.f32.gmra.mxu0 %v1592
        %v1594 = vpop.f32.mrf.mxu0
        %v1595 = vadd.f32 %v1410, %v1594
        %v1596 = vand.u32 %v311, 4294901760
        %1597 = vmatmul.f32.gmra.mxu0 %v1596
        %v1598 = vpop.f32.mrf.mxu0
        %v1599 = vadd.f32 %v1418, %v1598
        %v1600 = vand.u32 %v312, 4294901760
        %1601 = vmatmul.f32.gmra.mxu0 %v1600
        %v1602 = vpop.f32.mrf.mxu0
        %v1603 = vadd.f32 %v1426, %v1602
        %v1604 = vand.u32 %v313, 4294901760
        %1605 = vmatmul.f32.gmra.mxu0 %v1604
        %v1606 = vpop.f32.mrf.mxu0
        %v1607 = vadd.f32 %v1434, %v1606
        %1608 = vdwg.mxu0
        %v1609 = vand.u32 %v345, 4294901760
        %v1610 = vsub.f32 %v345, %v1609
        %1611 = vmatpush.msra.mxu0 %v1610
        %v1612 = vand.u32 %v343, 4294901760
        %v1613 = vsub.f32 %v343, %v1612
        %1614 = vmatpush.msra.mxu0 %v1613
        %v1615 = vand.u32 %v341, 4294901760
        %v1616 = vsub.f32 %v341, %v1615
        %1617 = vmatpush.msra.mxu0 %v1616
        %v1618 = vand.u32 %v339, 4294901760
        %v1619 = vsub.f32 %v339, %v1618
        %1620 = vmatpush.msra.mxu0 %v1619
        %v1621 = vand.u32 %v337, 4294901760
        %v1622 = vsub.f32 %v337, %v1621
        %1623 = vmatpush.msra.mxu0 %v1622
        %v1624 = vand.u32 %v335, 4294901760
        %v1625 = vsub.f32 %v335, %v1624
        %1626 = vmatpush.msra.mxu0 %v1625
        %v1627 = vand.u32 %v333, 4294901760
        %v1628 = vsub.f32 %v333, %v1627
        %1629 = vmatpush.msra.mxu0 %v1628
        %v1630 = vand.u32 %v331, 4294901760
        %v1631 = vsub.f32 %v331, %v1630
        %1632 = vmatpush.msra.mxu0 %v1631
        %v1633 = vand.u32 %v329, 4294901760
        %v1634 = vsub.f32 %v329, %v1633
        %1635 = vmatpush.msra.mxu0 %v1634
        %v1636 = vand.u32 %v327, 4294901760
        %v1637 = vsub.f32 %v327, %v1636
        %1638 = vmatpush.msra.mxu0 %v1637
        %v1639 = vand.u32 %v325, 4294901760
        %v1640 = vsub.f32 %v325, %v1639
        %1641 = vmatpush.msra.mxu0 %v1640
        %v1642 = vand.u32 %v323, 4294901760
        %v1643 = vsub.f32 %v323, %v1642
        %1644 = vmatpush.msra.mxu0 %v1643
        %v1645 = vand.u32 %v321, 4294901760
        %v1646 = vsub.f32 %v321, %v1645
        %1647 = vmatpush.msra.mxu0 %v1646
        %v1648 = vand.u32 %v319, 4294901760
        %v1649 = vsub.f32 %v319, %v1648
        %1650 = vmatpush.msra.mxu0 %v1649
        %v1651 = vand.u32 %v317, 4294901760
        %v1652 = vsub.f32 %v317, %v1651
        %1653 = vmatpush.msra.mxu0 %v1652
        %v1654 = vand.u32 %v315, 4294901760
        %v1655 = vsub.f32 %v315, %v1654
        %1656 = vmatpush.msra.mxu0 %v1655
        %v1657 = vand.u32 %v295, 4294901760
        %v1658 = vsub.f32 %v295, %v1657
        %1659 = vmatmul.f32.gmra.mxu0 %v1658
        %v1660 = vpop.f32.mrf.mxu0
        %v1661 = vadd.f32 %v1535, %v1660
        %v1662 = vand.u32 %v296, 4294901760
        %v1663 = vsub.f32 %v296, %v1662
        %1664 = vmatmul.f32.gmra.mxu0 %v1663
        %v1665 = vpop.f32.mrf.mxu0
        %v1666 = vadd.f32 %v1539, %v1665
        %v1667 = vand.u32 %v297, 4294901760
        %v1668 = vsub.f32 %v297, %v1667
        %1669 = vmatmul.f32.gmra.mxu0 %v1668
        %v1670 = vpop.f32.mrf.mxu0
        %v1671 = vadd.f32 %v1543, %v1670
        %v1672 = vand.u32 %v298, 4294901760
        %v1673 = vsub.f32 %v298, %v1672
        %1674 = vmatmul.f32.gmra.mxu0 %v1673
        %v1675 = vpop.f32.mrf.mxu0
        %v1676 = vadd.f32 %v1547, %v1675
        %v1677 = vand.u32 %v299, 4294901760
        %v1678 = vsub.f32 %v299, %v1677
        %1679 = vmatmul.f32.gmra.mxu0 %v1678
        %v1680 = vpop.f32.mrf.mxu0
        %v1681 = vadd.f32 %v1551, %v1680
        %v1682 = vand.u32 %v300, 4294901760
        %v1683 = vsub.f32 %v300, %v1682
        %1684 = vmatmul.f32.gmra.mxu0 %v1683
        %v1685 = vpop.f32.mrf.mxu0
        %v1686 = vadd.f32 %v1555, %v1685
        %v1687 = vand.u32 %v301, 4294901760
        %v1688 = vsub.f32 %v301, %v1687
        %1689 = vmatmul.f32.gmra.mxu0 %v1688
        %v1690 = vpop.f32.mrf.mxu0
        %v1691 = vadd.f32 %v1559, %v1690
        %v1692 = vand.u32 %v302, 4294901760
        %v1693 = vsub.f32 %v302, %v1692
        %1694 = vmatmul.f32.gmra.mxu0 %v1693
        %v1695 = vpop.f32.mrf.mxu0
        %v1696 = vadd.f32 %v1563, %v1695
        %v1697 = vand.u32 %v303, 4294901760
        %v1698 = vsub.f32 %v303, %v1697
        %1699 = vmatmul.f32.gmra.mxu0 %v1698
        %v1700 = vpop.f32.mrf.mxu0
        %v1701 = vadd.f32 %v1567, %v1700
        %v1702 = vand.u32 %v304, 4294901760
        %v1703 = vsub.f32 %v304, %v1702
        %1704 = vmatmul.f32.gmra.mxu0 %v1703
        %v1705 = vpop.f32.mrf.mxu0
        %v1706 = vadd.f32 %v1571, %v1705
        %v1707 = vand.u32 %v305, 4294901760
        %v1708 = vsub.f32 %v305, %v1707
        %1709 = vmatmul.f32.gmra.mxu0 %v1708
        %v1710 = vpop.f32.mrf.mxu0
        %v1711 = vadd.f32 %v1575, %v1710
        %v1712 = vand.u32 %v306, 4294901760
        %v1713 = vsub.f32 %v306, %v1712
        %1714 = vmatmul.f32.gmra.mxu0 %v1713
        %v1715 = vpop.f32.mrf.mxu0
        %v1716 = vadd.f32 %v1579, %v1715
        %v1717 = vand.u32 %v307, 4294901760
        %v1718 = vsub.f32 %v307, %v1717
        %1719 = vmatmul.f32.gmra.mxu0 %v1718
        %v1720 = vpop.f32.mrf.mxu0
        %v1721 = vadd.f32 %v1583, %v1720
        %v1722 = vand.u32 %v308, 4294901760
        %v1723 = vsub.f32 %v308, %v1722
        %1724 = vmatmul.f32.gmra.mxu0 %v1723
        %v1725 = vpop.f32.mrf.mxu0
        %v1726 = vadd.f32 %v1587, %v1725
        %v1727 = vand.u32 %v309, 4294901760
        %v1728 = vsub.f32 %v309, %v1727
        %1729 = vmatmul.f32.gmra.mxu0 %v1728
        %v1730 = vpop.f32.mrf.mxu0
        %v1731 = vadd.f32 %v1591, %v1730
        %v1732 = vand.u32 %v310, 4294901760
        %v1733 = vsub.f32 %v310, %v1732
        %1734 = vmatmul.f32.gmra.mxu0 %v1733
        %v1735 = vpop.f32.mrf.mxu0
        %v1736 = vadd.f32 %v1595, %v1735
        %v1737 = vand.u32 %v311, 4294901760
        %v1738 = vsub.f32 %v311, %v1737
        %1739 = vmatmul.f32.gmra.mxu0 %v1738
        %v1740 = vpop.f32.mrf.mxu0
        %v1741 = vadd.f32 %v1599, %v1740
        %v1742 = vand.u32 %v312, 4294901760
        %v1743 = vsub.f32 %v312, %v1742
        %1744 = vmatmul.f32.gmra.mxu0 %v1743
        %v1745 = vpop.f32.mrf.mxu0
        %v1746 = vadd.f32 %v1603, %v1745
        %v1747 = vand.u32 %v313, 4294901760
        %v1748 = vsub.f32 %v313, %v1747
        %1749 = vmatmul.f32.gmra.mxu0 %v1748
        %v1750 = vpop.f32.mrf.mxu0
        %v1751 = vadd.f32 %v1607, %v1750
        %1752 = vdwg.mxu0
        %v1753 = vand.u32 %v345, 4294901760
        %1754 = vmatpush.msra.mxu0 %v1753
        %v1755 = vand.u32 %v343, 4294901760
        %1756 = vmatpush.msra.mxu0 %v1755
        %v1757 = vand.u32 %v341, 4294901760
        %1758 = vmatpush.msra.mxu0 %v1757
        %v1759 = vand.u32 %v339, 4294901760
        %1760 = vmatpush.msra.mxu0 %v1759
        %v1761 = vand.u32 %v337, 4294901760
        %1762 = vmatpush.msra.mxu0 %v1761
        %v1763 = vand.u32 %v335, 4294901760
        %1764 = vmatpush.msra.mxu0 %v1763
        %v1765 = vand.u32 %v333, 4294901760
        %1766 = vmatpush.msra.mxu0 %v1765
        %v1767 = vand.u32 %v331, 4294901760
        %1768 = vmatpush.msra.mxu0 %v1767
        %v1769 = vand.u32 %v329, 4294901760
        %1770 = vmatpush.msra.mxu0 %v1769
        %v1771 = vand.u32 %v327, 4294901760
        %1772 = vmatpush.msra.mxu0 %v1771
        %v1773 = vand.u32 %v325, 4294901760
        %1774 = vmatpush.msra.mxu0 %v1773
        %v1775 = vand.u32 %v323, 4294901760
        %1776 = vmatpush.msra.mxu0 %v1775
        %v1777 = vand.u32 %v321, 4294901760
        %1778 = vmatpush.msra.mxu0 %v1777
        %v1779 = vand.u32 %v319, 4294901760
        %1780 = vmatpush.msra.mxu0 %v1779
        %v1781 = vand.u32 %v317, 4294901760
        %1782 = vmatpush.msra.mxu0 %v1781
        %v1783 = vand.u32 %v315, 4294901760
        %1784 = vmatpush.msra.mxu0 %v1783
        %v1785 = vand.u32 %v295, 4294901760
        %v1786 = vsub.f32 %v295, %v1785
        %v1787 = vand.u32 %v1786, 4294901760
        %1788 = vmatmul.f32.gmra.mxu0 %v1787
        %v1789 = vpop.f32.mrf.mxu0
        %v1790 = vadd.f32 %v1661, %v1789
        %v1791 = vand.u32 %v296, 4294901760
        %v1792 = vsub.f32 %v296, %v1791
        %v1793 = vand.u32 %v1792, 4294901760
        %1794 = vmatmul.f32.gmra.mxu0 %v1793
        %v1795 = vpop.f32.mrf.mxu0
        %v1796 = vadd.f32 %v1666, %v1795
        %v1797 = vand.u32 %v297, 4294901760
        %v1798 = vsub.f32 %v297, %v1797
        %v1799 = vand.u32 %v1798, 4294901760
        %1800 = vmatmul.f32.gmra.mxu0 %v1799
        %v1801 = vpop.f32.mrf.mxu0
        %v1802 = vadd.f32 %v1671, %v1801
        %v1803 = vand.u32 %v298, 4294901760
        %v1804 = vsub.f32 %v298, %v1803
        %v1805 = vand.u32 %v1804, 4294901760
        %1806 = vmatmul.f32.gmra.mxu0 %v1805
        %v1807 = vpop.f32.mrf.mxu0
        %v1808 = vadd.f32 %v1676, %v1807
        %v1809 = vand.u32 %v299, 4294901760
        %v1810 = vsub.f32 %v299, %v1809
        %v1811 = vand.u32 %v1810, 4294901760
        %1812 = vmatmul.f32.gmra.mxu0 %v1811
        %v1813 = vpop.f32.mrf.mxu0
        %v1814 = vadd.f32 %v1681, %v1813
        %v1815 = vand.u32 %v300, 4294901760
        %v1816 = vsub.f32 %v300, %v1815
        %v1817 = vand.u32 %v1816, 4294901760
        %1818 = vmatmul.f32.gmra.mxu0 %v1817
        %v1819 = vpop.f32.mrf.mxu0
        %v1820 = vadd.f32 %v1686, %v1819
        %v1821 = vand.u32 %v301, 4294901760
        %v1822 = vsub.f32 %v301, %v1821
        %v1823 = vand.u32 %v1822, 4294901760
        %1824 = vmatmul.f32.gmra.mxu0 %v1823
        %v1825 = vpop.f32.mrf.mxu0
        %v1826 = vadd.f32 %v1691, %v1825
        %v1827 = vand.u32 %v302, 4294901760
        %v1828 = vsub.f32 %v302, %v1827
        %v1829 = vand.u32 %v1828, 4294901760
        %1830 = vmatmul.f32.gmra.mxu0 %v1829
        %v1831 = vpop.f32.mrf.mxu0
        %v1832 = vadd.f32 %v1696, %v1831
        %v1833 = vand.u32 %v303, 4294901760
        %v1834 = vsub.f32 %v303, %v1833
        %v1835 = vand.u32 %v1834, 4294901760
        %1836 = vmatmul.f32.gmra.mxu0 %v1835
        %v1837 = vpop.f32.mrf.mxu0
        %v1838 = vadd.f32 %v1701, %v1837
        %v1839 = vand.u32 %v304, 4294901760
        %v1840 = vsub.f32 %v304, %v1839
        %v1841 = vand.u32 %v1840, 4294901760
        %1842 = vmatmul.f32.gmra.mxu0 %v1841
        %v1843 = vpop.f32.mrf.mxu0
        %v1844 = vadd.f32 %v1706, %v1843
        %v1845 = vand.u32 %v305, 4294901760
        %v1846 = vsub.f32 %v305, %v1845
        %v1847 = vand.u32 %v1846, 4294901760
        %1848 = vmatmul.f32.gmra.mxu0 %v1847
        %v1849 = vpop.f32.mrf.mxu0
        %v1850 = vadd.f32 %v1711, %v1849
        %v1851 = vand.u32 %v306, 4294901760
        %v1852 = vsub.f32 %v306, %v1851
        %v1853 = vand.u32 %v1852, 4294901760
        %1854 = vmatmul.f32.gmra.mxu0 %v1853
        %v1855 = vpop.f32.mrf.mxu0
        %v1856 = vadd.f32 %v1716, %v1855
        %v1857 = vand.u32 %v307, 4294901760
        %v1858 = vsub.f32 %v307, %v1857
        %v1859 = vand.u32 %v1858, 4294901760
        %1860 = vmatmul.f32.gmra.mxu0 %v1859
        %v1861 = vpop.f32.mrf.mxu0
        %v1862 = vadd.f32 %v1721, %v1861
        %v1863 = vand.u32 %v308, 4294901760
        %v1864 = vsub.f32 %v308, %v1863
        %v1865 = vand.u32 %v1864, 4294901760
        %1866 = vmatmul.f32.gmra.mxu0 %v1865
        %v1867 = vpop.f32.mrf.mxu0
        %v1868 = vadd.f32 %v1726, %v1867
        %v1869 = vand.u32 %v309, 4294901760
        %v1870 = vsub.f32 %v309, %v1869
        %v1871 = vand.u32 %v1870, 4294901760
        %1872 = vmatmul.f32.gmra.mxu0 %v1871
        %v1873 = vpop.f32.mrf.mxu0
        %v1874 = vadd.f32 %v1731, %v1873
        %v1875 = vand.u32 %v310, 4294901760
        %v1876 = vsub.f32 %v310, %v1875
        %v1877 = vand.u32 %v1876, 4294901760
        %1878 = vmatmul.f32.gmra.mxu0 %v1877
        %v1879 = vpop.f32.mrf.mxu0
        %v1880 = vadd.f32 %v1736, %v1879
        %v1881 = vand.u32 %v311, 4294901760
        %v1882 = vsub.f32 %v311, %v1881
        %v1883 = vand.u32 %v1882, 4294901760
        %1884 = vmatmul.f32.gmra.mxu0 %v1883
        %v1885 = vpop.f32.mrf.mxu0
        %v1886 = vadd.f32 %v1741, %v1885
        %v1887 = vand.u32 %v312, 4294901760
        %v1888 = vsub.f32 %v312, %v1887
        %v1889 = vand.u32 %v1888, 4294901760
        %1890 = vmatmul.f32.gmra.mxu0 %v1889
        %v1891 = vpop.f32.mrf.mxu0
        %v1892 = vadd.f32 %v1746, %v1891
        %v1893 = vand.u32 %v313, 4294901760
        %v1894 = vsub.f32 %v313, %v1893
        %v1895 = vand.u32 %v1894, 4294901760
        %1896 = vmatmul.f32.gmra.mxu0 %v1895
        %v1897 = vpop.f32.mrf.mxu0
        %v1898 = vadd.f32 %v1751, %v1897
        %1899 = vdwg.mxu0
        %v1900 = vand.u32 %v345, 4294901760
        %v1901 = vsub.f32 %v345, %v1900
        %v1902 = vand.u32 %v1901, 4294901760
        %1903 = vmatpush.msra.mxu0 %v1902
        %v1904 = vand.u32 %v343, 4294901760
        %v1905 = vsub.f32 %v343, %v1904
        %v1906 = vand.u32 %v1905, 4294901760
        %1907 = vmatpush.msra.mxu0 %v1906
        %v1908 = vand.u32 %v341, 4294901760
        %v1909 = vsub.f32 %v341, %v1908
        %v1910 = vand.u32 %v1909, 4294901760
        %1911 = vmatpush.msra.mxu0 %v1910
        %v1912 = vand.u32 %v339, 4294901760
        %v1913 = vsub.f32 %v339, %v1912
        %v1914 = vand.u32 %v1913, 4294901760
        %1915 = vmatpush.msra.mxu0 %v1914
        %v1916 = vand.u32 %v337, 4294901760
        %v1917 = vsub.f32 %v337, %v1916
        %v1918 = vand.u32 %v1917, 4294901760
        %1919 = vmatpush.msra.mxu0 %v1918
        %v1920 = vand.u32 %v335, 4294901760
        %v1921 = vsub.f32 %v335, %v1920
        %v1922 = vand.u32 %v1921, 4294901760
        %1923 = vmatpush.msra.mxu0 %v1922
        %v1924 = vand.u32 %v333, 4294901760
        %v1925 = vsub.f32 %v333, %v1924
        %v1926 = vand.u32 %v1925, 4294901760
        %1927 = vmatpush.msra.mxu0 %v1926
        %v1928 = vand.u32 %v331, 4294901760
        %v1929 = vsub.f32 %v331, %v1928
        %v1930 = vand.u32 %v1929, 4294901760
        %1931 = vmatpush.msra.mxu0 %v1930
        %v1932 = vand.u32 %v329, 4294901760
        %v1933 = vsub.f32 %v329, %v1932
        %v1934 = vand.u32 %v1933, 4294901760
        %1935 = vmatpush.msra.mxu0 %v1934
        %v1936 = vand.u32 %v327, 4294901760
        %v1937 = vsub.f32 %v327, %v1936
        %v1938 = vand.u32 %v1937, 4294901760
        %1939 = vmatpush.msra.mxu0 %v1938
        %v1940 = vand.u32 %v325, 4294901760
        %v1941 = vsub.f32 %v325, %v1940
        %v1942 = vand.u32 %v1941, 4294901760
        %1943 = vmatpush.msra.mxu0 %v1942
        %v1944 = vand.u32 %v323, 4294901760
        %v1945 = vsub.f32 %v323, %v1944
        %v1946 = vand.u32 %v1945, 4294901760
        %1947 = vmatpush.msra.mxu0 %v1946
        %v1948 = vand.u32 %v321, 4294901760
        %v1949 = vsub.f32 %v321, %v1948
        %v1950 = vand.u32 %v1949, 4294901760
        %1951 = vmatpush.msra.mxu0 %v1950
        %v1952 = vand.u32 %v319, 4294901760
        %v1953 = vsub.f32 %v319, %v1952
        %v1954 = vand.u32 %v1953, 4294901760
        %1955 = vmatpush.msra.mxu0 %v1954
        %v1956 = vand.u32 %v317, 4294901760
        %v1957 = vsub.f32 %v317, %v1956
        %v1958 = vand.u32 %v1957, 4294901760
        %1959 = vmatpush.msra.mxu0 %v1958
        %v1960 = vand.u32 %v315, 4294901760
        %v1961 = vsub.f32 %v315, %v1960
        %v1962 = vand.u32 %v1961, 4294901760
        %1963 = vmatpush.msra.mxu0 %v1962
        %v1964 = vand.u32 %v295, 4294901760
        %1965 = vmatmul.f32.gmra.mxu0 %v1964
        %v1966 = vpop.f32.mrf.mxu0
        %v1967 = vadd.f32 %v1790, %v1966
        %v1968 = vand.u32 %v296, 4294901760
        %1969 = vmatmul.f32.gmra.mxu0 %v1968
        %v1970 = vpop.f32.mrf.mxu0
        %v1971 = vadd.f32 %v1796, %v1970
        %v1972 = vand.u32 %v297, 4294901760
        %1973 = vmatmul.f32.gmra.mxu0 %v1972
        %v1974 = vpop.f32.mrf.mxu0
        %v1975 = vadd.f32 %v1802, %v1974
        %v1976 = vand.u32 %v298, 4294901760
        %1977 = vmatmul.f32.gmra.mxu0 %v1976
        %v1978 = vpop.f32.mrf.mxu0
        %v1979 = vadd.f32 %v1808, %v1978
        %v1980 = vand.u32 %v299, 4294901760
        %1981 = vmatmul.f32.gmra.mxu0 %v1980
        %v1982 = vpop.f32.mrf.mxu0
        %v1983 = vadd.f32 %v1814, %v1982
        %v1984 = vand.u32 %v300, 4294901760
        %1985 = vmatmul.f32.gmra.mxu0 %v1984
        %v1986 = vpop.f32.mrf.mxu0
        %v1987 = vadd.f32 %v1820, %v1986
        %v1988 = vand.u32 %v301, 4294901760
        %1989 = vmatmul.f32.gmra.mxu0 %v1988
        %v1990 = vpop.f32.mrf.mxu0
        %v1991 = vadd.f32 %v1826, %v1990
        %v1992 = vand.u32 %v302, 4294901760
        %1993 = vmatmul.f32.gmra.mxu0 %v1992
        %v1994 = vpop.f32.mrf.mxu0
        %v1995 = vadd.f32 %v1832, %v1994
        %v1996 = vand.u32 %v303, 4294901760
        %1997 = vmatmul.f32.gmra.mxu0 %v1996
        %v1998 = vpop.f32.mrf.mxu0
        %v1999 = vadd.f32 %v1838, %v1998
        %v2000 = vand.u32 %v304, 4294901760
        %2001 = vmatmul.f32.gmra.mxu0 %v2000
        %v2002 = vpop.f32.mrf.mxu0
        %v2003 = vadd.f32 %v1844, %v2002
        %v2004 = vand.u32 %v305, 4294901760
        %2005 = vmatmul.f32.gmra.mxu0 %v2004
        %v2006 = vpop.f32.mrf.mxu0
        %v2007 = vadd.f32 %v1850, %v2006
        %v2008 = vand.u32 %v306, 4294901760
        %2009 = vmatmul.f32.gmra.mxu0 %v2008
        %v2010 = vpop.f32.mrf.mxu0
        %v2011 = vadd.f32 %v1856, %v2010
        %v2012 = vand.u32 %v307, 4294901760
        %2013 = vmatmul.f32.gmra.mxu0 %v2012
        %v2014 = vpop.f32.mrf.mxu0
        %v2015 = vadd.f32 %v1862, %v2014
        %v2016 = vand.u32 %v308, 4294901760
        %2017 = vmatmul.f32.gmra.mxu0 %v2016
        %v2018 = vpop.f32.mrf.mxu0
        %v2019 = vadd.f32 %v1868, %v2018
        %v2020 = vand.u32 %v309, 4294901760
        %2021 = vmatmul.f32.gmra.mxu0 %v2020
        %v2022 = vpop.f32.mrf.mxu0
        %v2023 = vadd.f32 %v1874, %v2022
        %v2024 = vand.u32 %v310, 4294901760
        %2025 = vmatmul.f32.gmra.mxu0 %v2024
        %v2026 = vpop.f32.mrf.mxu0
        %v2027 = vadd.f32 %v1880, %v2026
        %v2028 = vand.u32 %v311, 4294901760
        %2029 = vmatmul.f32.gmra.mxu0 %v2028
        %v2030 = vpop.f32.mrf.mxu0
        %v2031 = vadd.f32 %v1886, %v2030
        %v2032 = vand.u32 %v312, 4294901760
        %2033 = vmatmul.f32.gmra.mxu0 %v2032
        %v2034 = vpop.f32.mrf.mxu0
        %v2035 = vadd.f32 %v1892, %v2034
        %v2036 = vand.u32 %v313, 4294901760
        %2037 = vmatmul.f32.gmra.mxu0 %v2036
        %v2038 = vpop.f32.mrf.mxu0
        %v2039 = vadd.f32 %v1898, %v2038
        %2040 = vdwg.mxu0
        %v2041 = vand.u32 %v345, 4294901760
        %2042 = vmatpush.msra.mxu0 %v2041
        %v2043 = vand.u32 %v343, 4294901760
        %2044 = vmatpush.msra.mxu0 %v2043
        %v2045 = vand.u32 %v341, 4294901760
        %2046 = vmatpush.msra.mxu0 %v2045
        %v2047 = vand.u32 %v339, 4294901760
        %2048 = vmatpush.msra.mxu0 %v2047
        %v2049 = vand.u32 %v337, 4294901760
        %2050 = vmatpush.msra.mxu0 %v2049
        %v2051 = vand.u32 %v335, 4294901760
        %2052 = vmatpush.msra.mxu0 %v2051
        %v2053 = vand.u32 %v333, 4294901760
        %2054 = vmatpush.msra.mxu0 %v2053
        %v2055 = vand.u32 %v331, 4294901760
        %2056 = vmatpush.msra.mxu0 %v2055
        %v2057 = vand.u32 %v329, 4294901760
        %2058 = vmatpush.msra.mxu0 %v2057
        %v2059 = vand.u32 %v327, 4294901760
        %2060 = vmatpush.msra.mxu0 %v2059
        %v2061 = vand.u32 %v325, 4294901760
        %2062 = vmatpush.msra.mxu0 %v2061
        %v2063 = vand.u32 %v323, 4294901760
        %2064 = vmatpush.msra.mxu0 %v2063
        %v2065 = vand.u32 %v321, 4294901760
        %2066 = vmatpush.msra.mxu0 %v2065
        %v2067 = vand.u32 %v319, 4294901760
        %2068 = vmatpush.msra.mxu0 %v2067
        %v2069 = vand.u32 %v317, 4294901760
        %2070 = vmatpush.msra.mxu0 %v2069
        %v2071 = vand.u32 %v315, 4294901760
        %2072 = vmatpush.msra.mxu0 %v2071
        %v2073 = vand.u32 %v295, 4294901760
        %2074 = vmatmul.f32.gmra.mxu0 %v2073
        %v2075 = vpop.f32.mrf.mxu0
        %v2076 = vadd.f32 %v1967, %v2075
        %v2077 = vand.u32 %v296, 4294901760
        %2078 = vmatmul.f32.gmra.mxu0 %v2077
        %v2079 = vpop.f32.mrf.mxu0
        %v2080 = vadd.f32 %v1971, %v2079
        %v2081 = vand.u32 %v297, 4294901760
        %2082 = vmatmul.f32.gmra.mxu0 %v2081
        %v2083 = vpop.f32.mrf.mxu0
        %v2084 = vadd.f32 %v1975, %v2083
        %v2085 = vand.u32 %v298, 4294901760
        %2086 = vmatmul.f32.gmra.mxu0 %v2085
        %v2087 = vpop.f32.mrf.mxu0
        %v2088 = vadd.f32 %v1979, %v2087
        %v2089 = vand.u32 %v299, 4294901760
        %2090 = vmatmul.f32.gmra.mxu0 %v2089
        %v2091 = vpop.f32.mrf.mxu0
        %v2092 = vadd.f32 %v1983, %v2091
        %v2093 = vand.u32 %v300, 4294901760
        %2094 = vmatmul.f32.gmra.mxu0 %v2093
        %v2095 = vpop.f32.mrf.mxu0
        %v2096 = vadd.f32 %v1987, %v2095
        %v2097 = vand.u32 %v301, 4294901760
        %2098 = vmatmul.f32.gmra.mxu0 %v2097
        %v2099 = vpop.f32.mrf.mxu0
        %v2100 = vadd.f32 %v1991, %v2099
        %v2101 = vand.u32 %v302, 4294901760
        %2102 = vmatmul.f32.gmra.mxu0 %v2101
        %v2103 = vpop.f32.mrf.mxu0
        %v2104 = vadd.f32 %v1995, %v2103
        %v2105 = vand.u32 %v303, 4294901760
        %2106 = vmatmul.f32.gmra.mxu0 %v2105
        %v2107 = vpop.f32.mrf.mxu0
        %v2108 = vadd.f32 %v1999, %v2107
        %v2109 = vand.u32 %v304, 4294901760
        %2110 = vmatmul.f32.gmra.mxu0 %v2109
        %v2111 = vpop.f32.mrf.mxu0
        %v2112 = vadd.f32 %v2003, %v2111
        %v2113 = vand.u32 %v305, 4294901760
        %2114 = vmatmul.f32.gmra.mxu0 %v2113
        %v2115 = vpop.f32.mrf.mxu0
        %v2116 = vadd.f32 %v2007, %v2115
        %v2117 = vand.u32 %v306, 4294901760
        %2118 = vmatmul.f32.gmra.mxu0 %v2117
        %v2119 = vpop.f32.mrf.mxu0
        %v2120 = vadd.f32 %v2011, %v2119
        %v2121 = vand.u32 %v307, 4294901760
        %2122 = vmatmul.f32.gmra.mxu0 %v2121
        %v2123 = vpop.f32.mrf.mxu0
        %v2124 = vadd.f32 %v2015, %v2123
        %v2125 = vand.u32 %v308, 4294901760
        %2126 = vmatmul.f32.gmra.mxu0 %v2125
        %v2127 = vpop.f32.mrf.mxu0
        %v2128 = vadd.f32 %v2019, %v2127
        %v2129 = vand.u32 %v309, 4294901760
        %2130 = vmatmul.f32.gmra.mxu0 %v2129
        %v2131 = vpop.f32.mrf.mxu0
        %v2132 = vadd.f32 %v2023, %v2131
        %v2133 = vand.u32 %v310, 4294901760
        %2134 = vmatmul.f32.gmra.mxu0 %v2133
        %v2135 = vpop.f32.mrf.mxu0
        %v2136 = vadd.f32 %v2027, %v2135
        %v2137 = vand.u32 %v311, 4294901760
        %2138 = vmatmul.f32.gmra.mxu0 %v2137
        %v2139 = vpop.f32.mrf.mxu0
        %v2140 = vadd.f32 %v2031, %v2139
        %v2141 = vand.u32 %v312, 4294901760
        %2142 = vmatmul.f32.gmra.mxu0 %v2141
        %v2143 = vpop.f32.mrf.mxu0
        %v2144 = vadd.f32 %v2035, %v2143
        %v2145 = vand.u32 %v313, 4294901760
        %2146 = vmatmul.f32.gmra.mxu0 %v2145
        %v2147 = vpop.f32.mrf.mxu0
        %v2148 = vadd.f32 %v2039, %v2147
        %2149 = vdwg.mxu0
        %v2150 = vmax.f32 %v1177, 0.0
        %v2151 = vmax.f32 %v2076, 0.0
        %v2152 = vmax.f32 %v1181, 0.0
        %v2153 = vmax.f32 %v2080, 0.0
        %v2154 = vmax.f32 %v1185, 0.0
        %v2155 = vmax.f32 %v2084, 0.0
        %v2156 = vmax.f32 %v1189, 0.0
        %v2157 = vmax.f32 %v2088, 0.0
        %v2158 = vmax.f32 %v1193, 0.0
        %v2159 = vmax.f32 %v2092, 0.0
        %v2160 = vmax.f32 %v1197, 0.0
        %v2161 = vmax.f32 %v2096, 0.0
        %v2162 = vmax.f32 %v1201, 0.0
        %v2163 = vmax.f32 %v2100, 0.0
        %v2164 = vmax.f32 %v1205, 0.0
        %v2165 = vmax.f32 %v2104, 0.0
        %v2166 = vmax.f32 %v1209, 0.0
        %v2167 = vmax.f32 %v2108, 0.0
        %v2168 = vmax.f32 %v1213, 0.0
        %v2169 = vmax.f32 %v2112, 0.0
        %v2170 = vmax.f32 %v1217, 0.0
        %v2171 = vmax.f32 %v2116, 0.0
        %v2172 = vmax.f32 %v1221, 0.0
        %v2173 = vmax.f32 %v2120, 0.0
        %v2174 = vmax.f32 %v1225, 0.0
        %v2175 = vmax.f32 %v2124, 0.0
        %v2176 = vmax.f32 %v1229, 0.0
        %v2177 = vmax.f32 %v2128, 0.0
        %v2178 = vmax.f32 %v1233, 0.0
        %v2179 = vmax.f32 %v2132, 0.0
        %v2180 = vmax.f32 %v1237, 0.0
        %v2181 = vmax.f32 %v2136, 0.0
        %v2182 = vmax.f32 %v1241, 0.0
        %v2183 = vmax.f32 %v2140, 0.0
        %v2184 = vmax.f32 %v1245, 0.0
        %v2185 = vmax.f32 %v2144, 0.0
        %v2186 = vmax.f32 %v1249, 0.0
        %v2187 = vmax.f32 %v2148, 0.0
        %v2188 = vld [vmem:[#allocation8] sm:$0xff]
        %v2189 = vld [vmem:[#allocation8 + $0x8] sm:$0xff]
        %v2190 = vld [vmem:[#allocation8 + $0x10] sm:$0xff]
        %v2191 = vld [vmem:[#allocation8 + $0x18] sm:$0xff]
        %v2192 = vld [vmem:[#allocation8 + $0x20] sm:$0xff]
        %v2193 = vld [vmem:[#allocation8 + $0x28] sm:$0xff]
        %v2194 = vld [vmem:[#allocation8 + $0x30] sm:$0xff]
        %v2195 = vld [vmem:[#allocation8 + $0x38] sm:$0xff]
        %v2196 = vld [vmem:[#allocation8 + $0x40] sm:$0xff]
        %v2197 = vld [vmem:[#allocation8 + $0x48] sm:$0xff]
        %v2198 = vld [vmem:[#allocation8 + $0x50] sm:$0xff]
        %v2199 = vld [vmem:[#allocation8 + $0x58] sm:$0xff]
        %v2200 = vld [vmem:[#allocation8 + $0x60] sm:$0xff]
        %v2201 = vld [vmem:[#allocation8 + $0x68] sm:$0xff]
        %v2202 = vld [vmem:[#allocation8 + $0x70] sm:$0xff]
        %v2203 = vld [vmem:[#allocation8 + $0x78] sm:$0xff]
        %v2204 = vld [vmem:[#allocation8 + $0x80] sm:$0xff]
        %v2205 = vld [vmem:[#allocation8 + $0x88] sm:$0xff]
        %v2206 = vld [vmem:[#allocation8 + $0x90] sm:$0xff]
        %v2207 = vld [vmem:[#allocation8 + $0x98] sm:$0xff]
        %v2208 = vld [vmem:[#allocation8 + $0xa0] sm:$0xff]
        %v2209 = vld [vmem:[#allocation8 + $0xa8] sm:$0xff]
        %v2210 = vld [vmem:[#allocation8 + $0xb0] sm:$0xff]
        %v2211 = vld [vmem:[#allocation8 + $0xb8] sm:$0xff]
        %v2212 = vld [vmem:[#allocation8 + $0xc0] sm:$0xff]
        %v2213 = vld [vmem:[#allocation8 + $0xc8] sm:$0xff]
        %v2214 = vld [vmem:[#allocation8 + $0xd0] sm:$0xff]
        %v2215 = vld [vmem:[#allocation8 + $0xd8] sm:$0xff]
        %v2216 = vld [vmem:[#allocation8 + $0xe0] sm:$0xff]
        %v2217 = vld [vmem:[#allocation8 + $0xe8] sm:$0xff]
        %v2218 = vld [vmem:[#allocation8 + $0xf0] sm:$0xff]
        %v2219 = vld [vmem:[#allocation8 + $0xf8] sm:$0xff]
        %v2220 = vld [vmem:[#allocation8 + $0x100] sm:$0xff]
        %v2221 = vld [vmem:[#allocation8 + $0x108] sm:$0xff]
        %v2222 = vld [vmem:[#allocation8 + $0x110] sm:$0xff]
        %v2223 = vld [vmem:[#allocation8 + $0x118] sm:$0xff]
        %v2224 = vld [vmem:[#allocation8 + $0x120] sm:$0xff]
        %v2225 = vld [vmem:[#allocation8 + $0x128] sm:$0xff]
        %v2226 = vld [vmem:[#allocation8 + $0x130] sm:$0xff]
        %v2227 = vld [vmem:[#allocation8 + $0x138] sm:$0xff]
        %v2228 = vld [vmem:[#allocation8 + $0x140] sm:$0xff]
        %v2229 = vld [vmem:[#allocation8 + $0x148] sm:$0xff]
        %v2230 = vld [vmem:[#allocation8 + $0x150] sm:$0xff]
        %v2231 = vld [vmem:[#allocation8 + $0x158] sm:$0xff]
        %v2232 = vld [vmem:[#allocation8 + $0x160] sm:$0xff]
        %v2233 = vld [vmem:[#allocation8 + $0x168] sm:$0xff]
        %v2234 = vld [vmem:[#allocation8 + $0x170] sm:$0xff]
        %v2235 = vld [vmem:[#allocation8 + $0x178] sm:$0xff]
        %v2236 = vld [vmem:[#allocation8 + $0x180] sm:$0xff]
        %v2237 = vld [vmem:[#allocation8 + $0x188] sm:$0xff]
        %v2238 = vld [vmem:[#allocation8 + $0x190] sm:$0xff]
        %v2239 = vld [vmem:[#allocation8 + $0x198] sm:$0xff]
        %v2240 = vld [vmem:[#allocation8 + $0x1a0] sm:$0xff]
        %v2241 = vld [vmem:[#allocation8 + $0x1a8] sm:$0xff]
        %v2242 = vld [vmem:[#allocation8 + $0x1b0] sm:$0xff]
        %v2243 = vld [vmem:[#allocation8 + $0x1b8] sm:$0xff]
        %v2244 = vld [vmem:[#allocation8 + $0x1c0] sm:$0xff]
        %v2245 = vld [vmem:[#allocation8 + $0x1c8] sm:$0xff]
        %v2246 = vld [vmem:[#allocation8 + $0x1d0] sm:$0xff]
        %v2247 = vld [vmem:[#allocation8 + $0x1d8] sm:$0xff]
        %v2248 = vld [vmem:[#allocation8 + $0x1e0] sm:$0xff]
        %v2249 = vld [vmem:[#allocation8 + $0x1e8] sm:$0xff]
        %v2250 = vld [vmem:[#allocation8 + $0x1f0] sm:$0xff]
        %v2251 = vld [vmem:[#allocation8 + $0x1f8] sm:$0xff]
        %v2252 = vld [vmem:[%s4] sm:$0x3]
        %v2254 = vperm.slane %v2252, 0
        %v2255 = vperm.slane %v2252, 1
        %v2258 = vand.u32 %v2218, 4294901760
        %2259 = vmatpush.msra.mxu0 %v2258
        %v2260 = vand.u32 %v2216, 4294901760
        %2261 = vmatpush.msra.mxu0 %v2260
        %v2262 = vand.u32 %v2214, 4294901760
        %2263 = vmatpush.msra.mxu0 %v2262
        %v2264 = vand.u32 %v2212, 4294901760
        %2265 = vmatpush.msra.mxu0 %v2264
        %v2266 = vand.u32 %v2210, 4294901760
        %2267 = vmatpush.msra.mxu0 %v2266
        %v2268 = vand.u32 %v2208, 4294901760
        %2269 = vmatpush.msra.mxu0 %v2268
        %v2270 = vand.u32 %v2206, 4294901760
        %2271 = vmatpush.msra.mxu0 %v2270
        %v2272 = vand.u32 %v2204, 4294901760
        %2273 = vmatpush.msra.mxu0 %v2272
        %v2274 = vand.u32 %v2202, 4294901760
        %2275 = vmatpush.msra.mxu0 %v2274
        %v2276 = vand.u32 %v2200, 4294901760
        %2277 = vmatpush.msra.mxu0 %v2276
        %v2278 = vand.u32 %v2198, 4294901760
        %2279 = vmatpush.msra.mxu0 %v2278
        %v2280 = vand.u32 %v2196, 4294901760
        %2281 = vmatpush.msra.mxu0 %v2280
        %v2282 = vand.u32 %v2194, 4294901760
        %2283 = vmatpush.msra.mxu0 %v2282
        %v2284 = vand.u32 %v2192, 4294901760
        %2285 = vmatpush.msra.mxu0 %v2284
        %v2286 = vand.u32 %v2190, 4294901760
        %2287 = vmatpush.msra.mxu0 %v2286
        %v2288 = vand.u32 %v2188, 4294901760
        %2289 = vmatpush.msra.mxu0 %v2288
        %v2290 = vand.u32 %v2150, 4294901760
        %v2291 = vsub.f32 %v2150, %v2290
        %v2292 = vand.u32 %v2291, 4294901760
        %v2293 = vsub.f32 %v2291, %v2292
        %v2294 = vand.u32 %v2293, 4294901760
        %2295 = vmatmul.f32.gmra.mxu0 %v2294
        %v2296 = vpop.f32.mrf.mxu0
        %v2297 = vadd.f32 %v2254, %v2296
        %v2298 = vand.u32 %v2152, 4294901760
        %v2299 = vsub.f32 %v2152, %v2298
        %v2300 = vand.u32 %v2299, 4294901760
        %v2301 = vsub.f32 %v2299, %v2300
        %v2302 = vand.u32 %v2301, 4294901760
        %2303 = vmatmul.f32.gmra.mxu0 %v2302
        %v2304 = vpop.f32.mrf.mxu0
        %v2305 = vadd.f32 %v2254, %v2304
        %v2306 = vand.u32 %v2154, 4294901760
        %v2307 = vsub.f32 %v2154, %v2306
        %v2308 = vand.u32 %v2307, 4294901760
        %v2309 = vsub.f32 %v2307, %v2308
        %v2310 = vand.u32 %v2309, 4294901760
        %2311 = vmatmul.f32.gmra.mxu0 %v2310
        %v2312 = vpop.f32.mrf.mxu0
        %v2313 = vadd.f32 %v2254, %v2312
        %v2314 = vand.u32 %v2156, 4294901760
        %v2315 = vsub.f32 %v2156, %v2314
        %v2316 = vand.u32 %v2315, 4294901760
        %v2317 = vsub.f32 %v2315, %v2316
        %v2318 = vand.u32 %v2317, 4294901760
        %2319 = vmatmul.f32.gmra.mxu0 %v2318
        %v2320 = vpop.f32.mrf.mxu0
        %v2321 = vadd.f32 %v2254, %v2320
        %v2322 = vand.u32 %v2158, 4294901760
        %v2323 = vsub.f32 %v2158, %v2322
        %v2324 = vand.u32 %v2323, 4294901760
        %v2325 = vsub.f32 %v2323, %v2324
        %v2326 = vand.u32 %v2325, 4294901760
        %2327 = vmatmul.f32.gmra.mxu0 %v2326
        %v2328 = vpop.f32.mrf.mxu0
        %v2329 = vadd.f32 %v2254, %v2328
        %v2330 = vand.u32 %v2160, 4294901760
        %v2331 = vsub.f32 %v2160, %v2330
        %v2332 = vand.u32 %v2331, 4294901760
        %v2333 = vsub.f32 %v2331, %v2332
        %v2334 = vand.u32 %v2333, 4294901760
        %2335 = vmatmul.f32.gmra.mxu0 %v2334
        %v2336 = vpop.f32.mrf.mxu0
        %v2337 = vadd.f32 %v2254, %v2336
        %v2338 = vand.u32 %v2162, 4294901760
        %v2339 = vsub.f32 %v2162, %v2338
        %v2340 = vand.u32 %v2339, 4294901760
        %v2341 = vsub.f32 %v2339, %v2340
        %v2342 = vand.u32 %v2341, 4294901760
        %2343 = vmatmul.f32.gmra.mxu0 %v2342
        %v2344 = vpop.f32.mrf.mxu0
        %v2345 = vadd.f32 %v2254, %v2344
        %v2346 = vand.u32 %v2164, 4294901760
        %v2347 = vsub.f32 %v2164, %v2346
        %v2348 = vand.u32 %v2347, 4294901760
        %v2349 = vsub.f32 %v2347, %v2348
        %v2350 = vand.u32 %v2349, 4294901760
        %2351 = vmatmul.f32.gmra.mxu0 %v2350
        %v2352 = vpop.f32.mrf.mxu0
        %v2353 = vadd.f32 %v2254, %v2352
        %v2354 = vand.u32 %v2166, 4294901760
        %v2355 = vsub.f32 %v2166, %v2354
        %v2356 = vand.u32 %v2355, 4294901760
        %v2357 = vsub.f32 %v2355, %v2356
        %v2358 = vand.u32 %v2357, 4294901760
        %2359 = vmatmul.f32.gmra.mxu0 %v2358
        %v2360 = vpop.f32.mrf.mxu0
        %v2361 = vadd.f32 %v2254, %v2360
        %v2362 = vand.u32 %v2168, 4294901760
        %v2363 = vsub.f32 %v2168, %v2362
        %v2364 = vand.u32 %v2363, 4294901760
        %v2365 = vsub.f32 %v2363, %v2364
        %v2366 = vand.u32 %v2365, 4294901760
        %2367 = vmatmul.f32.gmra.mxu0 %v2366
        %v2368 = vpop.f32.mrf.mxu0
        %v2369 = vadd.f32 %v2254, %v2368
        %v2370 = vand.u32 %v2170, 4294901760
        %v2371 = vsub.f32 %v2170, %v2370
        %v2372 = vand.u32 %v2371, 4294901760
        %v2373 = vsub.f32 %v2371, %v2372
        %v2374 = vand.u32 %v2373, 4294901760
        %2375 = vmatmul.f32.gmra.mxu0 %v2374
        %v2376 = vpop.f32.mrf.mxu0
        %v2377 = vadd.f32 %v2254, %v2376
        %v2378 = vand.u32 %v2172, 4294901760
        %v2379 = vsub.f32 %v2172, %v2378
        %v2380 = vand.u32 %v2379, 4294901760
        %v2381 = vsub.f32 %v2379, %v2380
        %v2382 = vand.u32 %v2381, 4294901760
        %2383 = vmatmul.f32.gmra.mxu0 %v2382
        %v2384 = vpop.f32.mrf.mxu0
        %v2385 = vadd.f32 %v2254, %v2384
        %v2386 = vand.u32 %v2174, 4294901760
        %v2387 = vsub.f32 %v2174, %v2386
        %v2388 = vand.u32 %v2387, 4294901760
        %v2389 = vsub.f32 %v2387, %v2388
        %v2390 = vand.u32 %v2389, 4294901760
        %2391 = vmatmul.f32.gmra.mxu0 %v2390
        %v2392 = vpop.f32.mrf.mxu0
        %v2393 = vadd.f32 %v2254, %v2392
        %v2394 = vand.u32 %v2176, 4294901760
        %v2395 = vsub.f32 %v2176, %v2394
        %v2396 = vand.u32 %v2395, 4294901760
        %v2397 = vsub.f32 %v2395, %v2396
        %v2398 = vand.u32 %v2397, 4294901760
        %2399 = vmatmul.f32.gmra.mxu0 %v2398
        %v2400 = vpop.f32.mrf.mxu0
        %v2401 = vadd.f32 %v2254, %v2400
        %v2402 = vand.u32 %v2178, 4294901760
        %v2403 = vsub.f32 %v2178, %v2402
        %v2404 = vand.u32 %v2403, 4294901760
        %v2405 = vsub.f32 %v2403, %v2404
        %v2406 = vand.u32 %v2405, 4294901760
        %2407 = vmatmul.f32.gmra.mxu0 %v2406
        %v2408 = vpop.f32.mrf.mxu0
        %v2409 = vadd.f32 %v2254, %v2408
        %v2410 = vand.u32 %v2180, 4294901760
        %v2411 = vsub.f32 %v2180, %v2410
        %v2412 = vand.u32 %v2411, 4294901760
        %v2413 = vsub.f32 %v2411, %v2412
        %v2414 = vand.u32 %v2413, 4294901760
        %2415 = vmatmul.f32.gmra.mxu0 %v2414
        %v2416 = vpop.f32.mrf.mxu0
        %v2417 = vadd.f32 %v2254, %v2416
        %v2418 = vand.u32 %v2182, 4294901760
        %v2419 = vsub.f32 %v2182, %v2418
        %v2420 = vand.u32 %v2419, 4294901760
        %v2421 = vsub.f32 %v2419, %v2420
        %v2422 = vand.u32 %v2421, 4294901760
        %2423 = vmatmul.f32.gmra.mxu0 %v2422
        %v2424 = vpop.f32.mrf.mxu0
        %v2425 = vadd.f32 %v2254, %v2424
        %v2426 = vand.u32 %v2184, 4294901760
        %v2427 = vsub.f32 %v2184, %v2426
        %v2428 = vand.u32 %v2427, 4294901760
        %v2429 = vsub.f32 %v2427, %v2428
        %v2430 = vand.u32 %v2429, 4294901760
        %2431 = vmatmul.f32.gmra.mxu0 %v2430
        %v2432 = vpop.f32.mrf.mxu0
        %v2433 = vadd.f32 %v2254, %v2432
        %v2434 = vand.u32 %v2186, 4294901760
        %v2435 = vsub.f32 %v2186, %v2434
        %v2436 = vand.u32 %v2435, 4294901760
        %v2437 = vsub.f32 %v2435, %v2436
        %v2438 = vand.u32 %v2437, 4294901760
        %2439 = vmatmul.f32.gmra.mxu0 %v2438
        %v2440 = vpop.f32.mrf.mxu0
        %v2441 = vadd.f32 %v2254, %v2440
        %2442 = vdwg.mxu0
        %v2443 = vand.u32 %v2218, 4294901760
        %v2444 = vsub.f32 %v2218, %v2443
        %v2445 = vand.u32 %v2444, 4294901760
        %v2446 = vsub.f32 %v2444, %v2445
        %v2447 = vand.u32 %v2446, 4294901760
        %2448 = vmatpush.msra.mxu0 %v2447
        %v2449 = vand.u32 %v2216, 4294901760
        %v2450 = vsub.f32 %v2216, %v2449
        %v2451 = vand.u32 %v2450, 4294901760
        %v2452 = vsub.f32 %v2450, %v2451
        %v2453 = vand.u32 %v2452, 4294901760
        %2454 = vmatpush.msra.mxu0 %v2453
        %v2455 = vand.u32 %v2214, 4294901760
        %v2456 = vsub.f32 %v2214, %v2455
        %v2457 = vand.u32 %v2456, 4294901760
        %v2458 = vsub.f32 %v2456, %v2457
        %v2459 = vand.u32 %v2458, 4294901760
        %2460 = vmatpush.msra.mxu0 %v2459
        %v2461 = vand.u32 %v2212, 4294901760
        %v2462 = vsub.f32 %v2212, %v2461
        %v2463 = vand.u32 %v2462, 4294901760
        %v2464 = vsub.f32 %v2462, %v2463
        %v2465 = vand.u32 %v2464, 4294901760
        %2466 = vmatpush.msra.mxu0 %v2465
        %v2467 = vand.u32 %v2210, 4294901760
        %v2468 = vsub.f32 %v2210, %v2467
        %v2469 = vand.u32 %v2468, 4294901760
        %v2470 = vsub.f32 %v2468, %v2469
        %v2471 = vand.u32 %v2470, 4294901760
        %2472 = vmatpush.msra.mxu0 %v2471
        %v2473 = vand.u32 %v2208, 4294901760
        %v2474 = vsub.f32 %v2208, %v2473
        %v2475 = vand.u32 %v2474, 4294901760
        %v2476 = vsub.f32 %v2474, %v2475
        %v2477 = vand.u32 %v2476, 4294901760
        %2478 = vmatpush.msra.mxu0 %v2477
        %v2479 = vand.u32 %v2206, 4294901760
        %v2480 = vsub.f32 %v2206, %v2479
        %v2481 = vand.u32 %v2480, 4294901760
        %v2482 = vsub.f32 %v2480, %v2481
        %v2483 = vand.u32 %v2482, 4294901760
        %2484 = vmatpush.msra.mxu0 %v2483
        %v2485 = vand.u32 %v2204, 4294901760
        %v2486 = vsub.f32 %v2204, %v2485
        %v2487 = vand.u32 %v2486, 4294901760
        %v2488 = vsub.f32 %v2486, %v2487
        %v2489 = vand.u32 %v2488, 4294901760
        %2490 = vmatpush.msra.mxu0 %v2489
        %v2491 = vand.u32 %v2202, 4294901760
        %v2492 = vsub.f32 %v2202, %v2491
        %v2493 = vand.u32 %v2492, 4294901760
        %v2494 = vsub.f32 %v2492, %v2493
        %v2495 = vand.u32 %v2494, 4294901760
        %2496 = vmatpush.msra.mxu0 %v2495
        %v2497 = vand.u32 %v2200, 4294901760
        %v2498 = vsub.f32 %v2200, %v2497
        %v2499 = vand.u32 %v2498, 4294901760
        %v2500 = vsub.f32 %v2498, %v2499
        %v2501 = vand.u32 %v2500, 4294901760
        %2502 = vmatpush.msra.mxu0 %v2501
        %v2503 = vand.u32 %v2198, 4294901760
        %v2504 = vsub.f32 %v2198, %v2503
        %v2505 = vand.u32 %v2504, 4294901760
        %v2506 = vsub.f32 %v2504, %v2505
        %v2507 = vand.u32 %v2506, 4294901760
        %2508 = vmatpush.msra.mxu0 %v2507
        %v2509 = vand.u32 %v2196, 4294901760
        %v2510 = vsub.f32 %v2196, %v2509
        %v2511 = vand.u32 %v2510, 4294901760
        %v2512 = vsub.f32 %v2510, %v2511
        %v2513 = vand.u32 %v2512, 4294901760
        %2514 = vmatpush.msra.mxu0 %v2513
        %v2515 = vand.u32 %v2194, 4294901760
        %v2516 = vsub.f32 %v2194, %v2515
        %v2517 = vand.u32 %v2516, 4294901760
        %v2518 = vsub.f32 %v2516, %v2517
        %v2519 = vand.u32 %v2518, 4294901760
        %2520 = vmatpush.msra.mxu0 %v2519
        %v2521 = vand.u32 %v2192, 4294901760
        %v2522 = vsub.f32 %v2192, %v2521
        %v2523 = vand.u32 %v2522, 4294901760
        %v2524 = vsub.f32 %v2522, %v2523
        %v2525 = vand.u32 %v2524, 4294901760
        %2526 = vmatpush.msra.mxu0 %v2525
        %v2527 = vand.u32 %v2190, 4294901760
        %v2528 = vsub.f32 %v2190, %v2527
        %v2529 = vand.u32 %v2528, 4294901760
        %v2530 = vsub.f32 %v2528, %v2529
        %v2531 = vand.u32 %v2530, 4294901760
        %2532 = vmatpush.msra.mxu0 %v2531
        %v2533 = vand.u32 %v2188, 4294901760
        %v2534 = vsub.f32 %v2188, %v2533
        %v2535 = vand.u32 %v2534, 4294901760
        %v2536 = vsub.f32 %v2534, %v2535
        %v2537 = vand.u32 %v2536, 4294901760
        %2538 = vmatpush.msra.mxu0 %v2537
        %v2539 = vand.u32 %v2150, 4294901760
        %2540 = vmatmul.f32.gmra.mxu0 %v2539
        %v2541 = vpop.f32.mrf.mxu0
        %v2542 = vadd.f32 %v2297, %v2541
        %v2543 = vand.u32 %v2152, 4294901760
        %2544 = vmatmul.f32.gmra.mxu0 %v2543
        %v2545 = vpop.f32.mrf.mxu0
        %v2546 = vadd.f32 %v2305, %v2545
        %v2547 = vand.u32 %v2154, 4294901760
        %2548 = vmatmul.f32.gmra.mxu0 %v2547
        %v2549 = vpop.f32.mrf.mxu0
        %v2550 = vadd.f32 %v2313, %v2549
        %v2551 = vand.u32 %v2156, 4294901760
        %2552 = vmatmul.f32.gmra.mxu0 %v2551
        %v2553 = vpop.f32.mrf.mxu0
        %v2554 = vadd.f32 %v2321, %v2553
        %v2555 = vand.u32 %v2158, 4294901760
        %2556 = vmatmul.f32.gmra.mxu0 %v2555
        %v2557 = vpop.f32.mrf.mxu0
        %v2558 = vadd.f32 %v2329, %v2557
        %v2559 = vand.u32 %v2160, 4294901760
        %2560 = vmatmul.f32.gmra.mxu0 %v2559
        %v2561 = vpop.f32.mrf.mxu0
        %v2562 = vadd.f32 %v2337, %v2561
        %v2563 = vand.u32 %v2162, 4294901760
        %2564 = vmatmul.f32.gmra.mxu0 %v2563
        %v2565 = vpop.f32.mrf.mxu0
        %v2566 = vadd.f32 %v2345, %v2565
        %v2567 = vand.u32 %v2164, 4294901760
        %2568 = vmatmul.f32.gmra.mxu0 %v2567
        %v2569 = vpop.f32.mrf.mxu0
        %v2570 = vadd.f32 %v2353, %v2569
        %v2571 = vand.u32 %v2166, 4294901760
        %2572 = vmatmul.f32.gmra.mxu0 %v2571
        %v2573 = vpop.f32.mrf.mxu0
        %v2574 = vadd.f32 %v2361, %v2573
        %v2575 = vand.u32 %v2168, 4294901760
        %2576 = vmatmul.f32.gmra.mxu0 %v2575
        %v2577 = vpop.f32.mrf.mxu0
        %v2578 = vadd.f32 %v2369, %v2577
        %v2579 = vand.u32 %v2170, 4294901760
        %2580 = vmatmul.f32.gmra.mxu0 %v2579
        %v2581 = vpop.f32.mrf.mxu0
        %v2582 = vadd.f32 %v2377, %v2581
        %v2583 = vand.u32 %v2172, 4294901760
        %2584 = vmatmul.f32.gmra.mxu0 %v2583
        %v2585 = vpop.f32.mrf.mxu0
        %v2586 = vadd.f32 %v2385, %v2585
        %v2587 = vand.u32 %v2174, 4294901760
        %2588 = vmatmul.f32.gmra.mxu0 %v2587
        %v2589 = vpop.f32.mrf.mxu0
        %v2590 = vadd.f32 %v2393, %v2589
        %v2591 = vand.u32 %v2176, 4294901760
        %2592 = vmatmul.f32.gmra.mxu0 %v2591
        %v2593 = vpop.f32.mrf.mxu0
        %v2594 = vadd.f32 %v2401, %v2593
        %v2595 = vand.u32 %v2178, 4294901760
        %2596 = vmatmul.f32.gmra.mxu0 %v2595
        %v2597 = vpop.f32.mrf.mxu0
        %v2598 = vadd.f32 %v2409, %v2597
        %v2599 = vand.u32 %v2180, 4294901760
        %2600 = vmatmul.f32.gmra.mxu0 %v2599
        %v2601 = vpop.f32.mrf.mxu0
        %v2602 = vadd.f32 %v2417, %v2601
        %v2603 = vand.u32 %v2182, 4294901760
        %2604 = vmatmul.f32.gmra.mxu0 %v2603
        %v2605 = vpop.f32.mrf.mxu0
        %v2606 = vadd.f32 %v2425, %v2605
        %v2607 = vand.u32 %v2184, 4294901760
        %2608 = vmatmul.f32.gmra.mxu0 %v2607
        %v2609 = vpop.f32.mrf.mxu0
        %v2610 = vadd.f32 %v2433, %v2609
        %v2611 = vand.u32 %v2186, 4294901760
        %2612 = vmatmul.f32.gmra.mxu0 %v2611
        %v2613 = vpop.f32.mrf.mxu0
        %v2614 = vadd.f32 %v2441, %v2613
        %2615 = vdwg.mxu0
        %v2616 = vand.u32 %v2218, 4294901760
        %v2617 = vsub.f32 %v2218, %v2616
        %2618 = vmatpush.msra.mxu0 %v2617
        %v2619 = vand.u32 %v2216, 4294901760
        %v2620 = vsub.f32 %v2216, %v2619
        %2621 = vmatpush.msra.mxu0 %v2620
        %v2622 = vand.u32 %v2214, 4294901760
        %v2623 = vsub.f32 %v2214, %v2622
        %2624 = vmatpush.msra.mxu0 %v2623
        %v2625 = vand.u32 %v2212, 4294901760
        %v2626 = vsub.f32 %v2212, %v2625
        %2627 = vmatpush.msra.mxu0 %v2626
        %v2628 = vand.u32 %v2210, 4294901760
        %v2629 = vsub.f32 %v2210, %v2628
        %2630 = vmatpush.msra.mxu0 %v2629
        %v2631 = vand.u32 %v2208, 4294901760
        %v2632 = vsub.f32 %v2208, %v2631
        %2633 = vmatpush.msra.mxu0 %v2632
        %v2634 = vand.u32 %v2206, 4294901760
        %v2635 = vsub.f32 %v2206, %v2634
        %2636 = vmatpush.msra.mxu0 %v2635
        %v2637 = vand.u32 %v2204, 4294901760
        %v2638 = vsub.f32 %v2204, %v2637
        %2639 = vmatpush.msra.mxu0 %v2638
        %v2640 = vand.u32 %v2202, 4294901760
        %v2641 = vsub.f32 %v2202, %v2640
        %2642 = vmatpush.msra.mxu0 %v2641
        %v2643 = vand.u32 %v2200, 4294901760
        %v2644 = vsub.f32 %v2200, %v2643
        %2645 = vmatpush.msra.mxu0 %v2644
        %v2646 = vand.u32 %v2198, 4294901760
        %v2647 = vsub.f32 %v2198, %v2646
        %2648 = vmatpush.msra.mxu0 %v2647
        %v2649 = vand.u32 %v2196, 4294901760
        %v2650 = vsub.f32 %v2196, %v2649
        %2651 = vmatpush.msra.mxu0 %v2650
        %v2652 = vand.u32 %v2194, 4294901760
        %v2653 = vsub.f32 %v2194, %v2652
        %2654 = vmatpush.msra.mxu0 %v2653
        %v2655 = vand.u32 %v2192, 4294901760
        %v2656 = vsub.f32 %v2192, %v2655
        %2657 = vmatpush.msra.mxu0 %v2656
        %v2658 = vand.u32 %v2190, 4294901760
        %v2659 = vsub.f32 %v2190, %v2658
        %2660 = vmatpush.msra.mxu0 %v2659
        %v2661 = vand.u32 %v2188, 4294901760
        %v2662 = vsub.f32 %v2188, %v2661
        %2663 = vmatpush.msra.mxu0 %v2662
        %v2664 = vand.u32 %v2150, 4294901760
        %v2665 = vsub.f32 %v2150, %v2664
        %2666 = vmatmul.f32.gmra.mxu0 %v2665
        %v2667 = vpop.f32.mrf.mxu0
        %v2668 = vadd.f32 %v2542, %v2667
        %v2669 = vand.u32 %v2152, 4294901760
        %v2670 = vsub.f32 %v2152, %v2669
        %2671 = vmatmul.f32.gmra.mxu0 %v2670
        %v2672 = vpop.f32.mrf.mxu0
        %v2673 = vadd.f32 %v2546, %v2672
        %v2674 = vand.u32 %v2154, 4294901760
        %v2675 = vsub.f32 %v2154, %v2674
        %2676 = vmatmul.f32.gmra.mxu0 %v2675
        %v2677 = vpop.f32.mrf.mxu0
        %v2678 = vadd.f32 %v2550, %v2677
        %v2679 = vand.u32 %v2156, 4294901760
        %v2680 = vsub.f32 %v2156, %v2679
        %2681 = vmatmul.f32.gmra.mxu0 %v2680
        %v2682 = vpop.f32.mrf.mxu0
        %v2683 = vadd.f32 %v2554, %v2682
        %v2684 = vand.u32 %v2158, 4294901760
        %v2685 = vsub.f32 %v2158, %v2684
        %2686 = vmatmul.f32.gmra.mxu0 %v2685
        %v2687 = vpop.f32.mrf.mxu0
        %v2688 = vadd.f32 %v2558, %v2687
        %v2689 = vand.u32 %v2160, 4294901760
        %v2690 = vsub.f32 %v2160, %v2689
        %2691 = vmatmul.f32.gmra.mxu0 %v2690
        %v2692 = vpop.f32.mrf.mxu0
        %v2693 = vadd.f32 %v2562, %v2692
        %v2694 = vand.u32 %v2162, 4294901760
        %v2695 = vsub.f32 %v2162, %v2694
        %2696 = vmatmul.f32.gmra.mxu0 %v2695
        %v2697 = vpop.f32.mrf.mxu0
        %v2698 = vadd.f32 %v2566, %v2697
        %v2699 = vand.u32 %v2164, 4294901760
        %v2700 = vsub.f32 %v2164, %v2699
        %2701 = vmatmul.f32.gmra.mxu0 %v2700
        %v2702 = vpop.f32.mrf.mxu0
        %v2703 = vadd.f32 %v2570, %v2702
        %v2704 = vand.u32 %v2166, 4294901760
        %v2705 = vsub.f32 %v2166, %v2704
        %2706 = vmatmul.f32.gmra.mxu0 %v2705
        %v2707 = vpop.f32.mrf.mxu0
        %v2708 = vadd.f32 %v2574, %v2707
        %v2709 = vand.u32 %v2168, 4294901760
        %v2710 = vsub.f32 %v2168, %v2709
        %2711 = vmatmul.f32.gmra.mxu0 %v2710
        %v2712 = vpop.f32.mrf.mxu0
        %v2713 = vadd.f32 %v2578, %v2712
        %v2714 = vand.u32 %v2170, 4294901760
        %v2715 = vsub.f32 %v2170, %v2714
        %2716 = vmatmul.f32.gmra.mxu0 %v2715
        %v2717 = vpop.f32.mrf.mxu0
        %v2718 = vadd.f32 %v2582, %v2717
        %v2719 = vand.u32 %v2172, 4294901760
        %v2720 = vsub.f32 %v2172, %v2719
        %2721 = vmatmul.f32.gmra.mxu0 %v2720
        %v2722 = vpop.f32.mrf.mxu0
        %v2723 = vadd.f32 %v2586, %v2722
        %v2724 = vand.u32 %v2174, 4294901760
        %v2725 = vsub.f32 %v2174, %v2724
        %2726 = vmatmul.f32.gmra.mxu0 %v2725
        %v2727 = vpop.f32.mrf.mxu0
        %v2728 = vadd.f32 %v2590, %v2727
        %v2729 = vand.u32 %v2176, 4294901760
        %v2730 = vsub.f32 %v2176, %v2729
        %2731 = vmatmul.f32.gmra.mxu0 %v2730
        %v2732 = vpop.f32.mrf.mxu0
        %v2733 = vadd.f32 %v2594, %v2732
        %v2734 = vand.u32 %v2178, 4294901760
        %v2735 = vsub.f32 %v2178, %v2734
        %2736 = vmatmul.f32.gmra.mxu0 %v2735
        %v2737 = vpop.f32.mrf.mxu0
        %v2738 = vadd.f32 %v2598, %v2737
        %v2739 = vand.u32 %v2180, 4294901760
        %v2740 = vsub.f32 %v2180, %v2739
        %2741 = vmatmul.f32.gmra.mxu0 %v2740
        %v2742 = vpop.f32.mrf.mxu0
        %v2743 = vadd.f32 %v2602, %v2742
        %v2744 = vand.u32 %v2182, 4294901760
        %v2745 = vsub.f32 %v2182, %v2744
        %2746 = vmatmul.f32.gmra.mxu0 %v2745
        %v2747 = vpop.f32.mrf.mxu0
        %v2748 = vadd.f32 %v2606, %v2747
        %v2749 = vand.u32 %v2184, 4294901760
        %v2750 = vsub.f32 %v2184, %v2749
        %2751 = vmatmul.f32.gmra.mxu0 %v2750
        %v2752 = vpop.f32.mrf.mxu0
        %v2753 = vadd.f32 %v2610, %v2752
        %v2754 = vand.u32 %v2186, 4294901760
        %v2755 = vsub.f32 %v2186, %v2754
        %2756 = vmatmul.f32.gmra.mxu0 %v2755
        %v2757 = vpop.f32.mrf.mxu0
        %v2758 = vadd.f32 %v2614, %v2757
        %2759 = vdwg.mxu0
        %v2760 = vand.u32 %v2218, 4294901760
        %2761 = vmatpush.msra.mxu0 %v2760
        %v2762 = vand.u32 %v2216, 4294901760
        %2763 = vmatpush.msra.mxu0 %v2762
        %v2764 = vand.u32 %v2214, 4294901760
        %2765 = vmatpush.msra.mxu0 %v2764
        %v2766 = vand.u32 %v2212, 4294901760
        %2767 = vmatpush.msra.mxu0 %v2766
        %v2768 = vand.u32 %v2210, 4294901760
        %2769 = vmatpush.msra.mxu0 %v2768
        %v2770 = vand.u32 %v2208, 4294901760
        %2771 = vmatpush.msra.mxu0 %v2770
        %v2772 = vand.u32 %v2206, 4294901760
        %2773 = vmatpush.msra.mxu0 %v2772
        %v2774 = vand.u32 %v2204, 4294901760
        %2775 = vmatpush.msra.mxu0 %v2774
        %v2776 = vand.u32 %v2202, 4294901760
        %2777 = vmatpush.msra.mxu0 %v2776
        %v2778 = vand.u32 %v2200, 4294901760
        %2779 = vmatpush.msra.mxu0 %v2778
        %v2780 = vand.u32 %v2198, 4294901760
        %2781 = vmatpush.msra.mxu0 %v2780
        %v2782 = vand.u32 %v2196, 4294901760
        %2783 = vmatpush.msra.mxu0 %v2782
        %v2784 = vand.u32 %v2194, 4294901760
        %2785 = vmatpush.msra.mxu0 %v2784
        %v2786 = vand.u32 %v2192, 4294901760
        %2787 = vmatpush.msra.mxu0 %v2786
        %v2788 = vand.u32 %v2190, 4294901760
        %2789 = vmatpush.msra.mxu0 %v2788
        %v2790 = vand.u32 %v2188, 4294901760
        %2791 = vmatpush.msra.mxu0 %v2790
        %v2792 = vand.u32 %v2150, 4294901760
        %v2793 = vsub.f32 %v2150, %v2792
        %v2794 = vand.u32 %v2793, 4294901760
        %2795 = vmatmul.f32.gmra.mxu0 %v2794
        %v2796 = vpop.f32.mrf.mxu0
        %v2797 = vadd.f32 %v2668, %v2796
        %v2798 = vand.u32 %v2152, 4294901760
        %v2799 = vsub.f32 %v2152, %v2798
        %v2800 = vand.u32 %v2799, 4294901760
        %2801 = vmatmul.f32.gmra.mxu0 %v2800
        %v2802 = vpop.f32.mrf.mxu0
        %v2803 = vadd.f32 %v2673, %v2802
        %v2804 = vand.u32 %v2154, 4294901760
        %v2805 = vsub.f32 %v2154, %v2804
        %v2806 = vand.u32 %v2805, 4294901760
        %2807 = vmatmul.f32.gmra.mxu0 %v2806
        %v2808 = vpop.f32.mrf.mxu0
        %v2809 = vadd.f32 %v2678, %v2808
        %v2810 = vand.u32 %v2156, 4294901760
        %v2811 = vsub.f32 %v2156, %v2810
        %v2812 = vand.u32 %v2811, 4294901760
        %2813 = vmatmul.f32.gmra.mxu0 %v2812
        %v2814 = vpop.f32.mrf.mxu0
        %v2815 = vadd.f32 %v2683, %v2814
        %v2816 = vand.u32 %v2158, 4294901760
        %v2817 = vsub.f32 %v2158, %v2816
        %v2818 = vand.u32 %v2817, 4294901760
        %2819 = vmatmul.f32.gmra.mxu0 %v2818
        %v2820 = vpop.f32.mrf.mxu0
        %v2821 = vadd.f32 %v2688, %v2820
        %v2822 = vand.u32 %v2160, 4294901760
        %v2823 = vsub.f32 %v2160, %v2822
        %v2824 = vand.u32 %v2823, 4294901760
        %2825 = vmatmul.f32.gmra.mxu0 %v2824
        %v2826 = vpop.f32.mrf.mxu0
        %v2827 = vadd.f32 %v2693, %v2826
        %v2828 = vand.u32 %v2162, 4294901760
        %v2829 = vsub.f32 %v2162, %v2828
        %v2830 = vand.u32 %v2829, 4294901760
        %2831 = vmatmul.f32.gmra.mxu0 %v2830
        %v2832 = vpop.f32.mrf.mxu0
        %v2833 = vadd.f32 %v2698, %v2832
        %v2834 = vand.u32 %v2164, 4294901760
        %v2835 = vsub.f32 %v2164, %v2834
        %v2836 = vand.u32 %v2835, 4294901760
        %2837 = vmatmul.f32.gmra.mxu0 %v2836
        %v2838 = vpop.f32.mrf.mxu0
        %v2839 = vadd.f32 %v2703, %v2838
        %v2840 = vand.u32 %v2166, 4294901760
        %v2841 = vsub.f32 %v2166, %v2840
        %v2842 = vand.u32 %v2841, 4294901760
        %2843 = vmatmul.f32.gmra.mxu0 %v2842
        %v2844 = vpop.f32.mrf.mxu0
        %v2845 = vadd.f32 %v2708, %v2844
        %v2846 = vand.u32 %v2168, 4294901760
        %v2847 = vsub.f32 %v2168, %v2846
        %v2848 = vand.u32 %v2847, 4294901760
        %2849 = vmatmul.f32.gmra.mxu0 %v2848
        %v2850 = vpop.f32.mrf.mxu0
        %v2851 = vadd.f32 %v2713, %v2850
        %v2852 = vand.u32 %v2170, 4294901760
        %v2853 = vsub.f32 %v2170, %v2852
        %v2854 = vand.u32 %v2853, 4294901760
        %2855 = vmatmul.f32.gmra.mxu0 %v2854
        %v2856 = vpop.f32.mrf.mxu0
        %v2857 = vadd.f32 %v2718, %v2856
        %v2858 = vand.u32 %v2172, 4294901760
        %v2859 = vsub.f32 %v2172, %v2858
        %v2860 = vand.u32 %v2859, 4294901760
        %2861 = vmatmul.f32.gmra.mxu0 %v2860
        %v2862 = vpop.f32.mrf.mxu0
        %v2863 = vadd.f32 %v2723, %v2862
        %v2864 = vand.u32 %v2174, 4294901760
        %v2865 = vsub.f32 %v2174, %v2864
        %v2866 = vand.u32 %v2865, 4294901760
        %2867 = vmatmul.f32.gmra.mxu0 %v2866
        %v2868 = vpop.f32.mrf.mxu0
        %v2869 = vadd.f32 %v2728, %v2868
        %v2870 = vand.u32 %v2176, 4294901760
        %v2871 = vsub.f32 %v2176, %v2870
        %v2872 = vand.u32 %v2871, 4294901760
        %2873 = vmatmul.f32.gmra.mxu0 %v2872
        %v2874 = vpop.f32.mrf.mxu0
        %v2875 = vadd.f32 %v2733, %v2874
        %v2876 = vand.u32 %v2178, 4294901760
        %v2877 = vsub.f32 %v2178, %v2876
        %v2878 = vand.u32 %v2877, 4294901760
        %2879 = vmatmul.f32.gmra.mxu0 %v2878
        %v2880 = vpop.f32.mrf.mxu0
        %v2881 = vadd.f32 %v2738, %v2880
        %v2882 = vand.u32 %v2180, 4294901760
        %v2883 = vsub.f32 %v2180, %v2882
        %v2884 = vand.u32 %v2883, 4294901760
        %2885 = vmatmul.f32.gmra.mxu0 %v2884
        %v2886 = vpop.f32.mrf.mxu0
        %v2887 = vadd.f32 %v2743, %v2886
        %v2888 = vand.u32 %v2182, 4294901760
        %v2889 = vsub.f32 %v2182, %v2888
        %v2890 = vand.u32 %v2889, 4294901760
        %2891 = vmatmul.f32.gmra.mxu0 %v2890
        %v2892 = vpop.f32.mrf.mxu0
        %v2893 = vadd.f32 %v2748, %v2892
        %v2894 = vand.u32 %v2184, 4294901760
        %v2895 = vsub.f32 %v2184, %v2894
        %v2896 = vand.u32 %v2895, 4294901760
        %2897 = vmatmul.f32.gmra.mxu0 %v2896
        %v2898 = vpop.f32.mrf.mxu0
        %v2899 = vadd.f32 %v2753, %v2898
        %v2900 = vand.u32 %v2186, 4294901760
        %v2901 = vsub.f32 %v2186, %v2900
        %v2902 = vand.u32 %v2901, 4294901760
        %2903 = vmatmul.f32.gmra.mxu0 %v2902
        %v2904 = vpop.f32.mrf.mxu0
        %v2905 = vadd.f32 %v2758, %v2904
        %2906 = vdwg.mxu0
        %v2907 = vand.u32 %v2218, 4294901760
        %v2908 = vsub.f32 %v2218, %v2907
        %v2909 = vand.u32 %v2908, 4294901760
        %2910 = vmatpush.msra.mxu0 %v2909
        %v2911 = vand.u32 %v2216, 4294901760
        %v2912 = vsub.f32 %v2216, %v2911
        %v2913 = vand.u32 %v2912, 4294901760
        %2914 = vmatpush.msra.mxu0 %v2913
        %v2915 = vand.u32 %v2214, 4294901760
        %v2916 = vsub.f32 %v2214, %v2915
        %v2917 = vand.u32 %v2916, 4294901760
        %2918 = vmatpush.msra.mxu0 %v2917
        %v2919 = vand.u32 %v2212, 4294901760
        %v2920 = vsub.f32 %v2212, %v2919
        %v2921 = vand.u32 %v2920, 4294901760
        %2922 = vmatpush.msra.mxu0 %v2921
        %v2923 = vand.u32 %v2210, 4294901760
        %v2924 = vsub.f32 %v2210, %v2923
        %v2925 = vand.u32 %v2924, 4294901760
        %2926 = vmatpush.msra.mxu0 %v2925
        %v2927 = vand.u32 %v2208, 4294901760
        %v2928 = vsub.f32 %v2208, %v2927
        %v2929 = vand.u32 %v2928, 4294901760
        %2930 = vmatpush.msra.mxu0 %v2929
        %v2931 = vand.u32 %v2206, 4294901760
        %v2932 = vsub.f32 %v2206, %v2931
        %v2933 = vand.u32 %v2932, 4294901760
        %2934 = vmatpush.msra.mxu0 %v2933
        %v2935 = vand.u32 %v2204, 4294901760
        %v2936 = vsub.f32 %v2204, %v2935
        %v2937 = vand.u32 %v2936, 4294901760
        %2938 = vmatpush.msra.mxu0 %v2937
        %v2939 = vand.u32 %v2202, 4294901760
        %v2940 = vsub.f32 %v2202, %v2939
        %v2941 = vand.u32 %v2940, 4294901760
        %2942 = vmatpush.msra.mxu0 %v2941
        %v2943 = vand.u32 %v2200, 4294901760
        %v2944 = vsub.f32 %v2200, %v2943
        %v2945 = vand.u32 %v2944, 4294901760
        %2946 = vmatpush.msra.mxu0 %v2945
        %v2947 = vand.u32 %v2198, 4294901760
        %v2948 = vsub.f32 %v2198, %v2947
        %v2949 = vand.u32 %v2948, 4294901760
        %2950 = vmatpush.msra.mxu0 %v2949
        %v2951 = vand.u32 %v2196, 4294901760
        %v2952 = vsub.f32 %v2196, %v2951
        %v2953 = vand.u32 %v2952, 4294901760
        %2954 = vmatpush.msra.mxu0 %v2953
        %v2955 = vand.u32 %v2194, 4294901760
        %v2956 = vsub.f32 %v2194, %v2955
        %v2957 = vand.u32 %v2956, 4294901760
        %2958 = vmatpush.msra.mxu0 %v2957
        %v2959 = vand.u32 %v2192, 4294901760
        %v2960 = vsub.f32 %v2192, %v2959
        %v2961 = vand.u32 %v2960, 4294901760
        %2962 = vmatpush.msra.mxu0 %v2961
        %v2963 = vand.u32 %v2190, 4294901760
        %v2964 = vsub.f32 %v2190, %v2963
        %v2965 = vand.u32 %v2964, 4294901760
        %2966 = vmatpush.msra.mxu0 %v2965
        %v2967 = vand.u32 %v2188, 4294901760
        %v2968 = vsub.f32 %v2188, %v2967
        %v2969 = vand.u32 %v2968, 4294901760
        %2970 = vmatpush.msra.mxu0 %v2969
        %v2971 = vand.u32 %v2150, 4294901760
        %2972 = vmatmul.f32.gmra.mxu0 %v2971
        %v2973 = vpop.f32.mrf.mxu0
        %v2974 = vadd.f32 %v2797, %v2973
        %v2975 = vand.u32 %v2152, 4294901760
        %2976 = vmatmul.f32.gmra.mxu0 %v2975
        %v2977 = vpop.f32.mrf.mxu0
        %v2978 = vadd.f32 %v2803, %v2977
        %v2979 = vand.u32 %v2154, 4294901760
        %2980 = vmatmul.f32.gmra.mxu0 %v2979
        %v2981 = vpop.f32.mrf.mxu0
        %v2982 = vadd.f32 %v2809, %v2981
        %v2983 = vand.u32 %v2156, 4294901760
        %2984 = vmatmul.f32.gmra.mxu0 %v2983
        %v2985 = vpop.f32.mrf.mxu0
        %v2986 = vadd.f32 %v2815, %v2985
        %v2987 = vand.u32 %v2158, 4294901760
        %2988 = vmatmul.f32.gmra.mxu0 %v2987
        %v2989 = vpop.f32.mrf.mxu0
        %v2990 = vadd.f32 %v2821, %v2989
        %v2991 = vand.u32 %v2160, 4294901760
        %2992 = vmatmul.f32.gmra.mxu0 %v2991
        %v2993 = vpop.f32.mrf.mxu0
        %v2994 = vadd.f32 %v2827, %v2993
        %v2995 = vand.u32 %v2162, 4294901760
        %2996 = vmatmul.f32.gmra.mxu0 %v2995
        %v2997 = vpop.f32.mrf.mxu0
        %v2998 = vadd.f32 %v2833, %v2997
        %v2999 = vand.u32 %v2164, 4294901760
        %3000 = vmatmul.f32.gmra.mxu0 %v2999
        %v3001 = vpop.f32.mrf.mxu0
        %v3002 = vadd.f32 %v2839, %v3001
        %v3003 = vand.u32 %v2166, 4294901760
        %3004 = vmatmul.f32.gmra.mxu0 %v3003
        %v3005 = vpop.f32.mrf.mxu0
        %v3006 = vadd.f32 %v2845, %v3005
        %v3007 = vand.u32 %v2168, 4294901760
        %3008 = vmatmul.f32.gmra.mxu0 %v3007
        %v3009 = vpop.f32.mrf.mxu0
        %v3010 = vadd.f32 %v2851, %v3009
        %v3011 = vand.u32 %v2170, 4294901760
        %3012 = vmatmul.f32.gmra.mxu0 %v3011
        %v3013 = vpop.f32.mrf.mxu0
        %v3014 = vadd.f32 %v2857, %v3013
        %v3015 = vand.u32 %v2172, 4294901760
        %3016 = vmatmul.f32.gmra.mxu0 %v3015
        %v3017 = vpop.f32.mrf.mxu0
        %v3018 = vadd.f32 %v2863, %v3017
        %v3019 = vand.u32 %v2174, 4294901760
        %3020 = vmatmul.f32.gmra.mxu0 %v3019
        %v3021 = vpop.f32.mrf.mxu0
        %v3022 = vadd.f32 %v2869, %v3021
        %v3023 = vand.u32 %v2176, 4294901760
        %3024 = vmatmul.f32.gmra.mxu0 %v3023
        %v3025 = vpop.f32.mrf.mxu0
        %v3026 = vadd.f32 %v2875, %v3025
        %v3027 = vand.u32 %v2178, 4294901760
        %3028 = vmatmul.f32.gmra.mxu0 %v3027
        %v3029 = vpop.f32.mrf.mxu0
        %v3030 = vadd.f32 %v2881, %v3029
        %v3031 = vand.u32 %v2180, 4294901760
        %3032 = vmatmul.f32.gmra.mxu0 %v3031
        %v3033 = vpop.f32.mrf.mxu0
        %v3034 = vadd.f32 %v2887, %v3033
        %v3035 = vand.u32 %v2182, 4294901760
        %3036 = vmatmul.f32.gmra.mxu0 %v3035
        %v3037 = vpop.f32.mrf.mxu0
        %v3038 = vadd.f32 %v2893, %v3037
        %v3039 = vand.u32 %v2184, 4294901760
        %3040 = vmatmul.f32.gmra.mxu0 %v3039
        %v3041 = vpop.f32.mrf.mxu0
        %v3042 = vadd.f32 %v2899, %v3041
        %v3043 = vand.u32 %v2186, 4294901760
        %3044 = vmatmul.f32.gmra.mxu0 %v3043
        %v3045 = vpop.f32.mrf.mxu0
        %v3046 = vadd.f32 %v2905, %v3045
        %3047 = vdwg.mxu0
        %v3048 = vand.u32 %v2218, 4294901760
        %3049 = vmatpush.msra.mxu0 %v3048
        %v3050 = vand.u32 %v2216, 4294901760
        %3051 = vmatpush.msra.mxu0 %v3050
        %v3052 = vand.u32 %v2214, 4294901760
        %3053 = vmatpush.msra.mxu0 %v3052
        %v3054 = vand.u32 %v2212, 4294901760
        %3055 = vmatpush.msra.mxu0 %v3054
        %v3056 = vand.u32 %v2210, 4294901760
        %3057 = vmatpush.msra.mxu0 %v3056
        %v3058 = vand.u32 %v2208, 4294901760
        %3059 = vmatpush.msra.mxu0 %v3058
        %v3060 = vand.u32 %v2206, 4294901760
        %3061 = vmatpush.msra.mxu0 %v3060
        %v3062 = vand.u32 %v2204, 4294901760
        %3063 = vmatpush.msra.mxu0 %v3062
        %v3064 = vand.u32 %v2202, 4294901760
        %3065 = vmatpush.msra.mxu0 %v3064
        %v3066 = vand.u32 %v2200, 4294901760
        %3067 = vmatpush.msra.mxu0 %v3066
        %v3068 = vand.u32 %v2198, 4294901760
        %3069 = vmatpush.msra.mxu0 %v3068
        %v3070 = vand.u32 %v2196, 4294901760
        %3071 = vmatpush.msra.mxu0 %v3070
        %v3072 = vand.u32 %v2194, 4294901760
        %3073 = vmatpush.msra.mxu0 %v3072
        %v3074 = vand.u32 %v2192, 4294901760
        %3075 = vmatpush.msra.mxu0 %v3074
        %v3076 = vand.u32 %v2190, 4294901760
        %3077 = vmatpush.msra.mxu0 %v3076
        %v3078 = vand.u32 %v2188, 4294901760
        %3079 = vmatpush.msra.mxu0 %v3078
        %v3080 = vand.u32 %v2150, 4294901760
        %3081 = vmatmul.f32.gmra.mxu0 %v3080
        %v3082 = vpop.f32.mrf.mxu0
        %v3083 = vadd.f32 %v2974, %v3082
        %v3084 = vand.u32 %v2152, 4294901760
        %3085 = vmatmul.f32.gmra.mxu0 %v3084
        %v3086 = vpop.f32.mrf.mxu0
        %v3087 = vadd.f32 %v2978, %v3086
        %v3088 = vand.u32 %v2154, 4294901760
        %3089 = vmatmul.f32.gmra.mxu0 %v3088
        %v3090 = vpop.f32.mrf.mxu0
        %v3091 = vadd.f32 %v2982, %v3090
        %v3092 = vand.u32 %v2156, 4294901760
        %3093 = vmatmul.f32.gmra.mxu0 %v3092
        %v3094 = vpop.f32.mrf.mxu0
        %v3095 = vadd.f32 %v2986, %v3094
        %v3096 = vand.u32 %v2158, 4294901760
        %3097 = vmatmul.f32.gmra.mxu0 %v3096
        %v3098 = vpop.f32.mrf.mxu0
        %v3099 = vadd.f32 %v2990, %v3098
        %v3100 = vand.u32 %v2160, 4294901760
        %3101 = vmatmul.f32.gmra.mxu0 %v3100
        %v3102 = vpop.f32.mrf.mxu0
        %v3103 = vadd.f32 %v2994, %v3102
        %v3104 = vand.u32 %v2162, 4294901760
        %3105 = vmatmul.f32.gmra.mxu0 %v3104
        %v3106 = vpop.f32.mrf.mxu0
        %v3107 = vadd.f32 %v2998, %v3106
        %v3108 = vand.u32 %v2164, 4294901760
        %3109 = vmatmul.f32.gmra.mxu0 %v3108
        %v3110 = vpop.f32.mrf.mxu0
        %v3111 = vadd.f32 %v3002, %v3110
        %v3112 = vand.u32 %v2166, 4294901760
        %3113 = vmatmul.f32.gmra.mxu0 %v3112
        %v3114 = vpop.f32.mrf.mxu0
        %v3115 = vadd.f32 %v3006, %v3114
        %v3116 = vand.u32 %v2168, 4294901760
        %3117 = vmatmul.f32.gmra.mxu0 %v3116
        %v3118 = vpop.f32.mrf.mxu0
        %v3119 = vadd.f32 %v3010, %v3118
        %v3120 = vand.u32 %v2170, 4294901760
        %3121 = vmatmul.f32.gmra.mxu0 %v3120
        %v3122 = vpop.f32.mrf.mxu0
        %v3123 = vadd.f32 %v3014, %v3122
        %v3124 = vand.u32 %v2172, 4294901760
        %3125 = vmatmul.f32.gmra.mxu0 %v3124
        %v3126 = vpop.f32.mrf.mxu0
        %v3127 = vadd.f32 %v3018, %v3126
        %v3128 = vand.u32 %v2174, 4294901760
        %3129 = vmatmul.f32.gmra.mxu0 %v3128
        %v3130 = vpop.f32.mrf.mxu0
        %v3131 = vadd.f32 %v3022, %v3130
        %v3132 = vand.u32 %v2176, 4294901760
        %3133 = vmatmul.f32.gmra.mxu0 %v3132
        %v3134 = vpop.f32.mrf.mxu0
        %v3135 = vadd.f32 %v3026, %v3134
        %v3136 = vand.u32 %v2178, 4294901760
        %3137 = vmatmul.f32.gmra.mxu0 %v3136
        %v3138 = vpop.f32.mrf.mxu0
        %v3139 = vadd.f32 %v3030, %v3138
        %v3140 = vand.u32 %v2180, 4294901760
        %3141 = vmatmul.f32.gmra.mxu0 %v3140
        %v3142 = vpop.f32.mrf.mxu0
        %v3143 = vadd.f32 %v3034, %v3142
        %v3144 = vand.u32 %v2182, 4294901760
        %3145 = vmatmul.f32.gmra.mxu0 %v3144
        %v3146 = vpop.f32.mrf.mxu0
        %v3147 = vadd.f32 %v3038, %v3146
        %v3148 = vand.u32 %v2184, 4294901760
        %3149 = vmatmul.f32.gmra.mxu0 %v3148
        %v3150 = vpop.f32.mrf.mxu0
        %v3151 = vadd.f32 %v3042, %v3150
        %v3152 = vand.u32 %v2186, 4294901760
        %3153 = vmatmul.f32.gmra.mxu0 %v3152
        %v3154 = vpop.f32.mrf.mxu0
        %v3155 = vadd.f32 %v3046, %v3154
        %3156 = vdwg.mxu0
        %v3157 = vand.u32 %v2250, 4294901760
        %3158 = vmatpush.msra.mxu0 %v3157
        %v3159 = vand.u32 %v2248, 4294901760
        %3160 = vmatpush.msra.mxu0 %v3159
        %v3161 = vand.u32 %v2246, 4294901760
        %3162 = vmatpush.msra.mxu0 %v3161
        %v3163 = vand.u32 %v2244, 4294901760
        %3164 = vmatpush.msra.mxu0 %v3163
        %v3165 = vand.u32 %v2242, 4294901760
        %3166 = vmatpush.msra.mxu0 %v3165
        %v3167 = vand.u32 %v2240, 4294901760
        %3168 = vmatpush.msra.mxu0 %v3167
        %v3169 = vand.u32 %v2238, 4294901760
        %3170 = vmatpush.msra.mxu0 %v3169
        %v3171 = vand.u32 %v2236, 4294901760
        %3172 = vmatpush.msra.mxu0 %v3171
        %v3173 = vand.u32 %v2234, 4294901760
        %3174 = vmatpush.msra.mxu0 %v3173
        %v3175 = vand.u32 %v2232, 4294901760
        %3176 = vmatpush.msra.mxu0 %v3175
        %v3177 = vand.u32 %v2230, 4294901760
        %3178 = vmatpush.msra.mxu0 %v3177
        %v3179 = vand.u32 %v2228, 4294901760
        %3180 = vmatpush.msra.mxu0 %v3179
        %v3181 = vand.u32 %v2226, 4294901760
        %3182 = vmatpush.msra.mxu0 %v3181
        %v3183 = vand.u32 %v2224, 4294901760
        %3184 = vmatpush.msra.mxu0 %v3183
        %v3185 = vand.u32 %v2222, 4294901760
        %3186 = vmatpush.msra.mxu0 %v3185
        %v3187 = vand.u32 %v2220, 4294901760
        %3188 = vmatpush.msra.mxu0 %v3187
        %v3189 = vand.u32 %v2151, 4294901760
        %v3190 = vsub.f32 %v2151, %v3189
        %v3191 = vand.u32 %v3190, 4294901760
        %v3192 = vsub.f32 %v3190, %v3191
        %v3193 = vand.u32 %v3192, 4294901760
        %3194 = vmatmul.f32.gmra.mxu0 %v3193
        %v3195 = vpop.f32.mrf.mxu0
        %v3196 = vadd.f32 %v3083, %v3195
        %v3197 = vand.u32 %v2153, 4294901760
        %v3198 = vsub.f32 %v2153, %v3197
        %v3199 = vand.u32 %v3198, 4294901760
        %v3200 = vsub.f32 %v3198, %v3199
        %v3201 = vand.u32 %v3200, 4294901760
        %3202 = vmatmul.f32.gmra.mxu0 %v3201
        %v3203 = vpop.f32.mrf.mxu0
        %v3204 = vadd.f32 %v3087, %v3203
        %v3205 = vand.u32 %v2155, 4294901760
        %v3206 = vsub.f32 %v2155, %v3205
        %v3207 = vand.u32 %v3206, 4294901760
        %v3208 = vsub.f32 %v3206, %v3207
        %v3209 = vand.u32 %v3208, 4294901760
        %3210 = vmatmul.f32.gmra.mxu0 %v3209
        %v3211 = vpop.f32.mrf.mxu0
        %v3212 = vadd.f32 %v3091, %v3211
        %v3213 = vand.u32 %v2157, 4294901760
        %v3214 = vsub.f32 %v2157, %v3213
        %v3215 = vand.u32 %v3214, 4294901760
        %v3216 = vsub.f32 %v3214, %v3215
        %v3217 = vand.u32 %v3216, 4294901760
        %3218 = vmatmul.f32.gmra.mxu0 %v3217
        %v3219 = vpop.f32.mrf.mxu0
        %v3220 = vadd.f32 %v3095, %v3219
        %v3221 = vand.u32 %v2159, 4294901760
        %v3222 = vsub.f32 %v2159, %v3221
        %v3223 = vand.u32 %v3222, 4294901760
        %v3224 = vsub.f32 %v3222, %v3223
        %v3225 = vand.u32 %v3224, 4294901760
        %3226 = vmatmul.f32.gmra.mxu0 %v3225
        %v3227 = vpop.f32.mrf.mxu0
        %v3228 = vadd.f32 %v3099, %v3227
        %v3229 = vand.u32 %v2161, 4294901760
        %v3230 = vsub.f32 %v2161, %v3229
        %v3231 = vand.u32 %v3230, 4294901760
        %v3232 = vsub.f32 %v3230, %v3231
        %v3233 = vand.u32 %v3232, 4294901760
        %3234 = vmatmul.f32.gmra.mxu0 %v3233
        %v3235 = vpop.f32.mrf.mxu0
        %v3236 = vadd.f32 %v3103, %v3235
        %v3237 = vand.u32 %v2163, 4294901760
        %v3238 = vsub.f32 %v2163, %v3237
        %v3239 = vand.u32 %v3238, 4294901760
        %v3240 = vsub.f32 %v3238, %v3239
        %v3241 = vand.u32 %v3240, 4294901760
        %3242 = vmatmul.f32.gmra.mxu0 %v3241
        %v3243 = vpop.f32.mrf.mxu0
        %v3244 = vadd.f32 %v3107, %v3243
        %v3245 = vand.u32 %v2165, 4294901760
        %v3246 = vsub.f32 %v2165, %v3245
        %v3247 = vand.u32 %v3246, 4294901760
        %v3248 = vsub.f32 %v3246, %v3247
        %v3249 = vand.u32 %v3248, 4294901760
        %3250 = vmatmul.f32.gmra.mxu0 %v3249
        %v3251 = vpop.f32.mrf.mxu0
        %v3252 = vadd.f32 %v3111, %v3251
        %v3253 = vand.u32 %v2167, 4294901760
        %v3254 = vsub.f32 %v2167, %v3253
        %v3255 = vand.u32 %v3254, 4294901760
        %v3256 = vsub.f32 %v3254, %v3255
        %v3257 = vand.u32 %v3256, 4294901760
        %3258 = vmatmul.f32.gmra.mxu0 %v3257
        %v3259 = vpop.f32.mrf.mxu0
        %v3260 = vadd.f32 %v3115, %v3259
        %v3261 = vand.u32 %v2169, 4294901760
        %v3262 = vsub.f32 %v2169, %v3261
        %v3263 = vand.u32 %v3262, 4294901760
        %v3264 = vsub.f32 %v3262, %v3263
        %v3265 = vand.u32 %v3264, 4294901760
        %3266 = vmatmul.f32.gmra.mxu0 %v3265
        %v3267 = vpop.f32.mrf.mxu0
        %v3268 = vadd.f32 %v3119, %v3267
        %v3269 = vand.u32 %v2171, 4294901760
        %v3270 = vsub.f32 %v2171, %v3269
        %v3271 = vand.u32 %v3270, 4294901760
        %v3272 = vsub.f32 %v3270, %v3271
        %v3273 = vand.u32 %v3272, 4294901760
        %3274 = vmatmul.f32.gmra.mxu0 %v3273
        %v3275 = vpop.f32.mrf.mxu0
        %v3276 = vadd.f32 %v3123, %v3275
        %v3277 = vand.u32 %v2173, 4294901760
        %v3278 = vsub.f32 %v2173, %v3277
        %v3279 = vand.u32 %v3278, 4294901760
        %v3280 = vsub.f32 %v3278, %v3279
        %v3281 = vand.u32 %v3280, 4294901760
        %3282 = vmatmul.f32.gmra.mxu0 %v3281
        %v3283 = vpop.f32.mrf.mxu0
        %v3284 = vadd.f32 %v3127, %v3283
        %v3285 = vand.u32 %v2175, 4294901760
        %v3286 = vsub.f32 %v2175, %v3285
        %v3287 = vand.u32 %v3286, 4294901760
        %v3288 = vsub.f32 %v3286, %v3287
        %v3289 = vand.u32 %v3288, 4294901760
        %3290 = vmatmul.f32.gmra.mxu0 %v3289
        %v3291 = vpop.f32.mrf.mxu0
        %v3292 = vadd.f32 %v3131, %v3291
        %v3293 = vand.u32 %v2177, 4294901760
        %v3294 = vsub.f32 %v2177, %v3293
        %v3295 = vand.u32 %v3294, 4294901760
        %v3296 = vsub.f32 %v3294, %v3295
        %v3297 = vand.u32 %v3296, 4294901760
        %3298 = vmatmul.f32.gmra.mxu0 %v3297
        %v3299 = vpop.f32.mrf.mxu0
        %v3300 = vadd.f32 %v3135, %v3299
        %v3301 = vand.u32 %v2179, 4294901760
        %v3302 = vsub.f32 %v2179, %v3301
        %v3303 = vand.u32 %v3302, 4294901760
        %v3304 = vsub.f32 %v3302, %v3303
        %v3305 = vand.u32 %v3304, 4294901760
        %3306 = vmatmul.f32.gmra.mxu0 %v3305
        %v3307 = vpop.f32.mrf.mxu0
        %v3308 = vadd.f32 %v3139, %v3307
        %v3309 = vand.u32 %v2181, 4294901760
        %v3310 = vsub.f32 %v2181, %v3309
        %v3311 = vand.u32 %v3310, 4294901760
        %v3312 = vsub.f32 %v3310, %v3311
        %v3313 = vand.u32 %v3312, 4294901760
        %3314 = vmatmul.f32.gmra.mxu0 %v3313
        %v3315 = vpop.f32.mrf.mxu0
        %v3316 = vadd.f32 %v3143, %v3315
        %v3317 = vand.u32 %v2183, 4294901760
        %v3318 = vsub.f32 %v2183, %v3317
        %v3319 = vand.u32 %v3318, 4294901760
        %v3320 = vsub.f32 %v3318, %v3319
        %v3321 = vand.u32 %v3320, 4294901760
        %3322 = vmatmul.f32.gmra.mxu0 %v3321
        %v3323 = vpop.f32.mrf.mxu0
        %v3324 = vadd.f32 %v3147, %v3323
        %v3325 = vand.u32 %v2185, 4294901760
        %v3326 = vsub.f32 %v2185, %v3325
        %v3327 = vand.u32 %v3326, 4294901760
        %v3328 = vsub.f32 %v3326, %v3327
        %v3329 = vand.u32 %v3328, 4294901760
        %3330 = vmatmul.f32.gmra.mxu0 %v3329
        %v3331 = vpop.f32.mrf.mxu0
        %v3332 = vadd.f32 %v3151, %v3331
        %v3333 = vand.u32 %v2187, 4294901760
        %v3334 = vsub.f32 %v2187, %v3333
        %v3335 = vand.u32 %v3334, 4294901760
        %v3336 = vsub.f32 %v3334, %v3335
        %v3337 = vand.u32 %v3336, 4294901760
        %3338 = vmatmul.f32.gmra.mxu0 %v3337
        %v3339 = vpop.f32.mrf.mxu0
        %v3340 = vadd.f32 %v3155, %v3339
        %3341 = vdwg.mxu0
        %v3342 = vand.u32 %v2250, 4294901760
        %v3343 = vsub.f32 %v2250, %v3342
        %v3344 = vand.u32 %v3343, 4294901760
        %v3345 = vsub.f32 %v3343, %v3344
        %v3346 = vand.u32 %v3345, 4294901760
        %3347 = vmatpush.msra.mxu0 %v3346
        %v3348 = vand.u32 %v2248, 4294901760
        %v3349 = vsub.f32 %v2248, %v3348
        %v3350 = vand.u32 %v3349, 4294901760
        %v3351 = vsub.f32 %v3349, %v3350
        %v3352 = vand.u32 %v3351, 4294901760
        %3353 = vmatpush.msra.mxu0 %v3352
        %v3354 = vand.u32 %v2246, 4294901760
        %v3355 = vsub.f32 %v2246, %v3354
        %v3356 = vand.u32 %v3355, 4294901760
        %v3357 = vsub.f32 %v3355, %v3356
        %v3358 = vand.u32 %v3357, 4294901760
        %3359 = vmatpush.msra.mxu0 %v3358
        %v3360 = vand.u32 %v2244, 4294901760
        %v3361 = vsub.f32 %v2244, %v3360
        %v3362 = vand.u32 %v3361, 4294901760
        %v3363 = vsub.f32 %v3361, %v3362
        %v3364 = vand.u32 %v3363, 4294901760
        %3365 = vmatpush.msra.mxu0 %v3364
        %v3366 = vand.u32 %v2242, 4294901760
        %v3367 = vsub.f32 %v2242, %v3366
        %v3368 = vand.u32 %v3367, 4294901760
        %v3369 = vsub.f32 %v3367, %v3368
        %v3370 = vand.u32 %v3369, 4294901760
        %3371 = vmatpush.msra.mxu0 %v3370
        %v3372 = vand.u32 %v2240, 4294901760
        %v3373 = vsub.f32 %v2240, %v3372
        %v3374 = vand.u32 %v3373, 4294901760
        %v3375 = vsub.f32 %v3373, %v3374
        %v3376 = vand.u32 %v3375, 4294901760
        %3377 = vmatpush.msra.mxu0 %v3376
        %v3378 = vand.u32 %v2238, 4294901760
        %v3379 = vsub.f32 %v2238, %v3378
        %v3380 = vand.u32 %v3379, 4294901760
        %v3381 = vsub.f32 %v3379, %v3380
        %v3382 = vand.u32 %v3381, 4294901760
        %3383 = vmatpush.msra.mxu0 %v3382
        %v3384 = vand.u32 %v2236, 4294901760
        %v3385 = vsub.f32 %v2236, %v3384
        %v3386 = vand.u32 %v3385, 4294901760
        %v3387 = vsub.f32 %v3385, %v3386
        %v3388 = vand.u32 %v3387, 4294901760
        %3389 = vmatpush.msra.mxu0 %v3388
        %v3390 = vand.u32 %v2234, 4294901760
        %v3391 = vsub.f32 %v2234, %v3390
        %v3392 = vand.u32 %v3391, 4294901760
        %v3393 = vsub.f32 %v3391, %v3392
        %v3394 = vand.u32 %v3393, 4294901760
        %3395 = vmatpush.msra.mxu0 %v3394
        %v3396 = vand.u32 %v2232, 4294901760
        %v3397 = vsub.f32 %v2232, %v3396
        %v3398 = vand.u32 %v3397, 4294901760
        %v3399 = vsub.f32 %v3397, %v3398
        %v3400 = vand.u32 %v3399, 4294901760
        %3401 = vmatpush.msra.mxu0 %v3400
        %v3402 = vand.u32 %v2230, 4294901760
        %v3403 = vsub.f32 %v2230, %v3402
        %v3404 = vand.u32 %v3403, 4294901760
        %v3405 = vsub.f32 %v3403, %v3404
        %v3406 = vand.u32 %v3405, 4294901760
        %3407 = vmatpush.msra.mxu0 %v3406
        %v3408 = vand.u32 %v2228, 4294901760
        %v3409 = vsub.f32 %v2228, %v3408
        %v3410 = vand.u32 %v3409, 4294901760
        %v3411 = vsub.f32 %v3409, %v3410
        %v3412 = vand.u32 %v3411, 4294901760
        %3413 = vmatpush.msra.mxu0 %v3412
        %v3414 = vand.u32 %v2226, 4294901760
        %v3415 = vsub.f32 %v2226, %v3414
        %v3416 = vand.u32 %v3415, 4294901760
        %v3417 = vsub.f32 %v3415, %v3416
        %v3418 = vand.u32 %v3417, 4294901760
        %3419 = vmatpush.msra.mxu0 %v3418
        %v3420 = vand.u32 %v2224, 4294901760
        %v3421 = vsub.f32 %v2224, %v3420
        %v3422 = vand.u32 %v3421, 4294901760
        %v3423 = vsub.f32 %v3421, %v3422
        %v3424 = vand.u32 %v3423, 4294901760
        %3425 = vmatpush.msra.mxu0 %v3424
        %v3426 = vand.u32 %v2222, 4294901760
        %v3427 = vsub.f32 %v2222, %v3426
        %v3428 = vand.u32 %v3427, 4294901760
        %v3429 = vsub.f32 %v3427, %v3428
        %v3430 = vand.u32 %v3429, 4294901760
        %3431 = vmatpush.msra.mxu0 %v3430
        %v3432 = vand.u32 %v2220, 4294901760
        %v3433 = vsub.f32 %v2220, %v3432
        %v3434 = vand.u32 %v3433, 4294901760
        %v3435 = vsub.f32 %v3433, %v3434
        %v3436 = vand.u32 %v3435, 4294901760
        %3437 = vmatpush.msra.mxu0 %v3436
        %v3438 = vand.u32 %v2151, 4294901760
        %3439 = vmatmul.f32.gmra.mxu0 %v3438
        %v3440 = vpop.f32.mrf.mxu0
        %v3441 = vadd.f32 %v3196, %v3440
        %v3442 = vand.u32 %v2153, 4294901760
        %3443 = vmatmul.f32.gmra.mxu0 %v3442
        %v3444 = vpop.f32.mrf.mxu0
        %v3445 = vadd.f32 %v3204, %v3444
        %v3446 = vand.u32 %v2155, 4294901760
        %3447 = vmatmul.f32.gmra.mxu0 %v3446
        %v3448 = vpop.f32.mrf.mxu0
        %v3449 = vadd.f32 %v3212, %v3448
        %v3450 = vand.u32 %v2157, 4294901760
        %3451 = vmatmul.f32.gmra.mxu0 %v3450
        %v3452 = vpop.f32.mrf.mxu0
        %v3453 = vadd.f32 %v3220, %v3452
        %v3454 = vand.u32 %v2159, 4294901760
        %3455 = vmatmul.f32.gmra.mxu0 %v3454
        %v3456 = vpop.f32.mrf.mxu0
        %v3457 = vadd.f32 %v3228, %v3456
        %v3458 = vand.u32 %v2161, 4294901760
        %3459 = vmatmul.f32.gmra.mxu0 %v3458
        %v3460 = vpop.f32.mrf.mxu0
        %v3461 = vadd.f32 %v3236, %v3460
        %v3462 = vand.u32 %v2163, 4294901760
        %3463 = vmatmul.f32.gmra.mxu0 %v3462
        %v3464 = vpop.f32.mrf.mxu0
        %v3465 = vadd.f32 %v3244, %v3464
        %v3466 = vand.u32 %v2165, 4294901760
        %3467 = vmatmul.f32.gmra.mxu0 %v3466
        %v3468 = vpop.f32.mrf.mxu0
        %v3469 = vadd.f32 %v3252, %v3468
        %v3470 = vand.u32 %v2167, 4294901760
        %3471 = vmatmul.f32.gmra.mxu0 %v3470
        %v3472 = vpop.f32.mrf.mxu0
        %v3473 = vadd.f32 %v3260, %v3472
        %v3474 = vand.u32 %v2169, 4294901760
        %3475 = vmatmul.f32.gmra.mxu0 %v3474
        %v3476 = vpop.f32.mrf.mxu0
        %v3477 = vadd.f32 %v3268, %v3476
        %v3478 = vand.u32 %v2171, 4294901760
        %3479 = vmatmul.f32.gmra.mxu0 %v3478
        %v3480 = vpop.f32.mrf.mxu0
        %v3481 = vadd.f32 %v3276, %v3480
        %v3482 = vand.u32 %v2173, 4294901760
        %3483 = vmatmul.f32.gmra.mxu0 %v3482
        %v3484 = vpop.f32.mrf.mxu0
        %v3485 = vadd.f32 %v3284, %v3484
        %v3486 = vand.u32 %v2175, 4294901760
        %3487 = vmatmul.f32.gmra.mxu0 %v3486
        %v3488 = vpop.f32.mrf.mxu0
        %v3489 = vadd.f32 %v3292, %v3488
        %v3490 = vand.u32 %v2177, 4294901760
        %3491 = vmatmul.f32.gmra.mxu0 %v3490
        %v3492 = vpop.f32.mrf.mxu0
        %v3493 = vadd.f32 %v3300, %v3492
        %v3494 = vand.u32 %v2179, 4294901760
        %3495 = vmatmul.f32.gmra.mxu0 %v3494
        %v3496 = vpop.f32.mrf.mxu0
        %v3497 = vadd.f32 %v3308, %v3496
        %v3498 = vand.u32 %v2181, 4294901760
        %3499 = vmatmul.f32.gmra.mxu0 %v3498
        %v3500 = vpop.f32.mrf.mxu0
        %v3501 = vadd.f32 %v3316, %v3500
        %v3502 = vand.u32 %v2183, 4294901760
        %3503 = vmatmul.f32.gmra.mxu0 %v3502
        %v3504 = vpop.f32.mrf.mxu0
        %v3505 = vadd.f32 %v3324, %v3504
        %v3506 = vand.u32 %v2185, 4294901760
        %3507 = vmatmul.f32.gmra.mxu0 %v3506
        %v3508 = vpop.f32.mrf.mxu0
        %v3509 = vadd.f32 %v3332, %v3508
        %v3510 = vand.u32 %v2187, 4294901760
        %3511 = vmatmul.f32.gmra.mxu0 %v3510
        %v3512 = vpop.f32.mrf.mxu0
        %v3513 = vadd.f32 %v3340, %v3512
        %3514 = vdwg.mxu0
        %v3515 = vand.u32 %v2250, 4294901760
        %v3516 = vsub.f32 %v2250, %v3515
        %3517 = vmatpush.msra.mxu0 %v3516
        %v3518 = vand.u32 %v2248, 4294901760
        %v3519 = vsub.f32 %v2248, %v3518
        %3520 = vmatpush.msra.mxu0 %v3519
        %v3521 = vand.u32 %v2246, 4294901760
        %v3522 = vsub.f32 %v2246, %v3521
        %3523 = vmatpush.msra.mxu0 %v3522
        %v3524 = vand.u32 %v2244, 4294901760
        %v3525 = vsub.f32 %v2244, %v3524
        %3526 = vmatpush.msra.mxu0 %v3525
        %v3527 = vand.u32 %v2242, 4294901760
        %v3528 = vsub.f32 %v2242, %v3527
        %3529 = vmatpush.msra.mxu0 %v3528
        %v3530 = vand.u32 %v2240, 4294901760
        %v3531 = vsub.f32 %v2240, %v3530
        %3532 = vmatpush.msra.mxu0 %v3531
        %v3533 = vand.u32 %v2238, 4294901760
        %v3534 = vsub.f32 %v2238, %v3533
        %3535 = vmatpush.msra.mxu0 %v3534
        %v3536 = vand.u32 %v2236, 4294901760
        %v3537 = vsub.f32 %v2236, %v3536
        %3538 = vmatpush.msra.mxu0 %v3537
        %v3539 = vand.u32 %v2234, 4294901760
        %v3540 = vsub.f32 %v2234, %v3539
        %3541 = vmatpush.msra.mxu0 %v3540
        %v3542 = vand.u32 %v2232, 4294901760
        %v3543 = vsub.f32 %v2232, %v3542
        %3544 = vmatpush.msra.mxu0 %v3543
        %v3545 = vand.u32 %v2230, 4294901760
        %v3546 = vsub.f32 %v2230, %v3545
        %3547 = vmatpush.msra.mxu0 %v3546
        %v3548 = vand.u32 %v2228, 4294901760
        %v3549 = vsub.f32 %v2228, %v3548
        %3550 = vmatpush.msra.mxu0 %v3549
        %v3551 = vand.u32 %v2226, 4294901760
        %v3552 = vsub.f32 %v2226, %v3551
        %3553 = vmatpush.msra.mxu0 %v3552
        %v3554 = vand.u32 %v2224, 4294901760
        %v3555 = vsub.f32 %v2224, %v3554
        %3556 = vmatpush.msra.mxu0 %v3555
        %v3557 = vand.u32 %v2222, 4294901760
        %v3558 = vsub.f32 %v2222, %v3557
        %3559 = vmatpush.msra.mxu0 %v3558
        %v3560 = vand.u32 %v2220, 4294901760
        %v3561 = vsub.f32 %v2220, %v3560
        %3562 = vmatpush.msra.mxu0 %v3561
        %v3563 = vand.u32 %v2151, 4294901760
        %v3564 = vsub.f32 %v2151, %v3563
        %3565 = vmatmul.f32.gmra.mxu0 %v3564
        %v3566 = vpop.f32.mrf.mxu0
        %v3567 = vadd.f32 %v3441, %v3566
        %v3568 = vand.u32 %v2153, 4294901760
        %v3569 = vsub.f32 %v2153, %v3568
        %3570 = vmatmul.f32.gmra.mxu0 %v3569
        %v3571 = vpop.f32.mrf.mxu0
        %v3572 = vadd.f32 %v3445, %v3571
        %v3573 = vand.u32 %v2155, 4294901760
        %v3574 = vsub.f32 %v2155, %v3573
        %3575 = vmatmul.f32.gmra.mxu0 %v3574
        %v3576 = vpop.f32.mrf.mxu0
        %v3577 = vadd.f32 %v3449, %v3576
        %v3578 = vand.u32 %v2157, 4294901760
        %v3579 = vsub.f32 %v2157, %v3578
        %3580 = vmatmul.f32.gmra.mxu0 %v3579
        %v3581 = vpop.f32.mrf.mxu0
        %v3582 = vadd.f32 %v3453, %v3581
        %v3583 = vand.u32 %v2159, 4294901760
        %v3584 = vsub.f32 %v2159, %v3583
        %3585 = vmatmul.f32.gmra.mxu0 %v3584
        %v3586 = vpop.f32.mrf.mxu0
        %v3587 = vadd.f32 %v3457, %v3586
        %v3588 = vand.u32 %v2161, 4294901760
        %v3589 = vsub.f32 %v2161, %v3588
        %3590 = vmatmul.f32.gmra.mxu0 %v3589
        %v3591 = vpop.f32.mrf.mxu0
        %v3592 = vadd.f32 %v3461, %v3591
        %v3593 = vand.u32 %v2163, 4294901760
        %v3594 = vsub.f32 %v2163, %v3593
        %3595 = vmatmul.f32.gmra.mxu0 %v3594
        %v3596 = vpop.f32.mrf.mxu0
        %v3597 = vadd.f32 %v3465, %v3596
        %v3598 = vand.u32 %v2165, 4294901760
        %v3599 = vsub.f32 %v2165, %v3598
        %3600 = vmatmul.f32.gmra.mxu0 %v3599
        %v3601 = vpop.f32.mrf.mxu0
        %v3602 = vadd.f32 %v3469, %v3601
        %v3603 = vand.u32 %v2167, 4294901760
        %v3604 = vsub.f32 %v2167, %v3603
        %3605 = vmatmul.f32.gmra.mxu0 %v3604
        %v3606 = vpop.f32.mrf.mxu0
        %v3607 = vadd.f32 %v3473, %v3606
        %v3608 = vand.u32 %v2169, 4294901760
        %v3609 = vsub.f32 %v2169, %v3608
        %3610 = vmatmul.f32.gmra.mxu0 %v3609
        %v3611 = vpop.f32.mrf.mxu0
        %v3612 = vadd.f32 %v3477, %v3611
        %v3613 = vand.u32 %v2171, 4294901760
        %v3614 = vsub.f32 %v2171, %v3613
        %3615 = vmatmul.f32.gmra.mxu0 %v3614
        %v3616 = vpop.f32.mrf.mxu0
        %v3617 = vadd.f32 %v3481, %v3616
        %v3618 = vand.u32 %v2173, 4294901760
        %v3619 = vsub.f32 %v2173, %v3618
        %3620 = vmatmul.f32.gmra.mxu0 %v3619
        %v3621 = vpop.f32.mrf.mxu0
        %v3622 = vadd.f32 %v3485, %v3621
        %v3623 = vand.u32 %v2175, 4294901760
        %v3624 = vsub.f32 %v2175, %v3623
        %3625 = vmatmul.f32.gmra.mxu0 %v3624
        %v3626 = vpop.f32.mrf.mxu0
        %v3627 = vadd.f32 %v3489, %v3626
        %v3628 = vand.u32 %v2177, 4294901760
        %v3629 = vsub.f32 %v2177, %v3628
        %3630 = vmatmul.f32.gmra.mxu0 %v3629
        %v3631 = vpop.f32.mrf.mxu0
        %v3632 = vadd.f32 %v3493, %v3631
        %v3633 = vand.u32 %v2179, 4294901760
        %v3634 = vsub.f32 %v2179, %v3633
        %3635 = vmatmul.f32.gmra.mxu0 %v3634
        %v3636 = vpop.f32.mrf.mxu0
        %v3637 = vadd.f32 %v3497, %v3636
        %v3638 = vand.u32 %v2181, 4294901760
        %v3639 = vsub.f32 %v2181, %v3638
        %3640 = vmatmul.f32.gmra.mxu0 %v3639
        %v3641 = vpop.f32.mrf.mxu0
        %v3642 = vadd.f32 %v3501, %v3641
        %v3643 = vand.u32 %v2183, 4294901760
        %v3644 = vsub.f32 %v2183, %v3643
        %3645 = vmatmul.f32.gmra.mxu0 %v3644
        %v3646 = vpop.f32.mrf.mxu0
        %v3647 = vadd.f32 %v3505, %v3646
        %v3648 = vand.u32 %v2185, 4294901760
        %v3649 = vsub.f32 %v2185, %v3648
        %3650 = vmatmul.f32.gmra.mxu0 %v3649
        %v3651 = vpop.f32.mrf.mxu0
        %v3652 = vadd.f32 %v3509, %v3651
        %v3653 = vand.u32 %v2187, 4294901760
        %v3654 = vsub.f32 %v2187, %v3653
        %3655 = vmatmul.f32.gmra.mxu0 %v3654
        %v3656 = vpop.f32.mrf.mxu0
        %v3657 = vadd.f32 %v3513, %v3656
        %3658 = vdwg.mxu0
        %v3659 = vand.u32 %v2250, 4294901760
        %3660 = vmatpush.msra.mxu0 %v3659
        %v3661 = vand.u32 %v2248, 4294901760
        %3662 = vmatpush.msra.mxu0 %v3661
        %v3663 = vand.u32 %v2246, 4294901760
        %3664 = vmatpush.msra.mxu0 %v3663
        %v3665 = vand.u32 %v2244, 4294901760
        %3666 = vmatpush.msra.mxu0 %v3665
        %v3667 = vand.u32 %v2242, 4294901760
        %3668 = vmatpush.msra.mxu0 %v3667
        %v3669 = vand.u32 %v2240, 4294901760
        %3670 = vmatpush.msra.mxu0 %v3669
        %v3671 = vand.u32 %v2238, 4294901760
        %3672 = vmatpush.msra.mxu0 %v3671
        %v3673 = vand.u32 %v2236, 4294901760
        %3674 = vmatpush.msra.mxu0 %v3673
        %v3675 = vand.u32 %v2234, 4294901760
        %3676 = vmatpush.msra.mxu0 %v3675
        %v3677 = vand.u32 %v2232, 4294901760
        %3678 = vmatpush.msra.mxu0 %v3677
        %v3679 = vand.u32 %v2230, 4294901760
        %3680 = vmatpush.msra.mxu0 %v3679
        %v3681 = vand.u32 %v2228, 4294901760
        %3682 = vmatpush.msra.mxu0 %v3681
        %v3683 = vand.u32 %v2226, 4294901760
        %3684 = vmatpush.msra.mxu0 %v3683
        %v3685 = vand.u32 %v2224, 4294901760
        %3686 = vmatpush.msra.mxu0 %v3685
        %v3687 = vand.u32 %v2222, 4294901760
        %3688 = vmatpush.msra.mxu0 %v3687
        %v3689 = vand.u32 %v2220, 4294901760
        %3690 = vmatpush.msra.mxu0 %v3689
        %v3691 = vand.u32 %v2151, 4294901760
        %v3692 = vsub.f32 %v2151, %v3691
        %v3693 = vand.u32 %v3692, 4294901760
        %3694 = vmatmul.f32.gmra.mxu0 %v3693
        %v3695 = vpop.f32.mrf.mxu0
        %v3696 = vadd.f32 %v3567, %v3695
        %v3697 = vand.u32 %v2153, 4294901760
        %v3698 = vsub.f32 %v2153, %v3697
        %v3699 = vand.u32 %v3698, 4294901760
        %3700 = vmatmul.f32.gmra.mxu0 %v3699
        %v3701 = vpop.f32.mrf.mxu0
        %v3702 = vadd.f32 %v3572, %v3701
        %v3703 = vand.u32 %v2155, 4294901760
        %v3704 = vsub.f32 %v2155, %v3703
        %v3705 = vand.u32 %v3704, 4294901760
        %3706 = vmatmul.f32.gmra.mxu0 %v3705
        %v3707 = vpop.f32.mrf.mxu0
        %v3708 = vadd.f32 %v3577, %v3707
        %v3709 = vand.u32 %v2157, 4294901760
        %v3710 = vsub.f32 %v2157, %v3709
        %v3711 = vand.u32 %v3710, 4294901760
        %3712 = vmatmul.f32.gmra.mxu0 %v3711
        %v3713 = vpop.f32.mrf.mxu0
        %v3714 = vadd.f32 %v3582, %v3713
        %v3715 = vand.u32 %v2159, 4294901760
        %v3716 = vsub.f32 %v2159, %v3715
        %v3717 = vand.u32 %v3716, 4294901760
        %3718 = vmatmul.f32.gmra.mxu0 %v3717
        %v3719 = vpop.f32.mrf.mxu0
        %v3720 = vadd.f32 %v3587, %v3719
        %v3721 = vand.u32 %v2161, 4294901760
        %v3722 = vsub.f32 %v2161, %v3721
        %v3723 = vand.u32 %v3722, 4294901760
        %3724 = vmatmul.f32.gmra.mxu0 %v3723
        %v3725 = vpop.f32.mrf.mxu0
        %v3726 = vadd.f32 %v3592, %v3725
        %v3727 = vand.u32 %v2163, 4294901760
        %v3728 = vsub.f32 %v2163, %v3727
        %v3729 = vand.u32 %v3728, 4294901760
        %3730 = vmatmul.f32.gmra.mxu0 %v3729
        %v3731 = vpop.f32.mrf.mxu0
        %v3732 = vadd.f32 %v3597, %v3731
        %v3733 = vand.u32 %v2165, 4294901760
        %v3734 = vsub.f32 %v2165, %v3733
        %v3735 = vand.u32 %v3734, 4294901760
        %3736 = vmatmul.f32.gmra.mxu0 %v3735
        %v3737 = vpop.f32.mrf.mxu0
        %v3738 = vadd.f32 %v3602, %v3737
        %v3739 = vand.u32 %v2167, 4294901760
        %v3740 = vsub.f32 %v2167, %v3739
        %v3741 = vand.u32 %v3740, 4294901760
        %3742 = vmatmul.f32.gmra.mxu0 %v3741
        %v3743 = vpop.f32.mrf.mxu0
        %v3744 = vadd.f32 %v3607, %v3743
        %v3745 = vand.u32 %v2169, 4294901760
        %v3746 = vsub.f32 %v2169, %v3745
        %v3747 = vand.u32 %v3746, 4294901760
        %3748 = vmatmul.f32.gmra.mxu0 %v3747
        %v3749 = vpop.f32.mrf.mxu0
        %v3750 = vadd.f32 %v3612, %v3749
        %v3751 = vand.u32 %v2171, 4294901760
        %v3752 = vsub.f32 %v2171, %v3751
        %v3753 = vand.u32 %v3752, 4294901760
        %3754 = vmatmul.f32.gmra.mxu0 %v3753
        %v3755 = vpop.f32.mrf.mxu0
        %v3756 = vadd.f32 %v3617, %v3755
        %v3757 = vand.u32 %v2173, 4294901760
        %v3758 = vsub.f32 %v2173, %v3757
        %v3759 = vand.u32 %v3758, 4294901760
        %3760 = vmatmul.f32.gmra.mxu0 %v3759
        %v3761 = vpop.f32.mrf.mxu0
        %v3762 = vadd.f32 %v3622, %v3761
        %v3763 = vand.u32 %v2175, 4294901760
        %v3764 = vsub.f32 %v2175, %v3763
        %v3765 = vand.u32 %v3764, 4294901760
        %3766 = vmatmul.f32.gmra.mxu0 %v3765
        %v3767 = vpop.f32.mrf.mxu0
        %v3768 = vadd.f32 %v3627, %v3767
        %v3769 = vand.u32 %v2177, 4294901760
        %v3770 = vsub.f32 %v2177, %v3769
        %v3771 = vand.u32 %v3770, 4294901760
        %3772 = vmatmul.f32.gmra.mxu0 %v3771
        %v3773 = vpop.f32.mrf.mxu0
        %v3774 = vadd.f32 %v3632, %v3773
        %v3775 = vand.u32 %v2179, 4294901760
        %v3776 = vsub.f32 %v2179, %v3775
        %v3777 = vand.u32 %v3776, 4294901760
        %3778 = vmatmul.f32.gmra.mxu0 %v3777
        %v3779 = vpop.f32.mrf.mxu0
        %v3780 = vadd.f32 %v3637, %v3779
        %v3781 = vand.u32 %v2181, 4294901760
        %v3782 = vsub.f32 %v2181, %v3781
        %v3783 = vand.u32 %v3782, 4294901760
        %3784 = vmatmul.f32.gmra.mxu0 %v3783
        %v3785 = vpop.f32.mrf.mxu0
        %v3786 = vadd.f32 %v3642, %v3785
        %v3787 = vand.u32 %v2183, 4294901760
        %v3788 = vsub.f32 %v2183, %v3787
        %v3789 = vand.u32 %v3788, 4294901760
        %3790 = vmatmul.f32.gmra.mxu0 %v3789
        %v3791 = vpop.f32.mrf.mxu0
        %v3792 = vadd.f32 %v3647, %v3791
        %v3793 = vand.u32 %v2185, 4294901760
        %v3794 = vsub.f32 %v2185, %v3793
        %v3795 = vand.u32 %v3794, 4294901760
        %3796 = vmatmul.f32.gmra.mxu0 %v3795
        %v3797 = vpop.f32.mrf.mxu0
        %v3798 = vadd.f32 %v3652, %v3797
        %v3799 = vand.u32 %v2187, 4294901760
        %v3800 = vsub.f32 %v2187, %v3799
        %v3801 = vand.u32 %v3800, 4294901760
        %3802 = vmatmul.f32.gmra.mxu0 %v3801
        %v3803 = vpop.f32.mrf.mxu0
        %v3804 = vadd.f32 %v3657, %v3803
        %3805 = vdwg.mxu0
        %v3806 = vand.u32 %v2250, 4294901760
        %v3807 = vsub.f32 %v2250, %v3806
        %v3808 = vand.u32 %v3807, 4294901760
        %3809 = vmatpush.msra.mxu0 %v3808
        %v3810 = vand.u32 %v2248, 4294901760
        %v3811 = vsub.f32 %v2248, %v3810
        %v3812 = vand.u32 %v3811, 4294901760
        %3813 = vmatpush.msra.mxu0 %v3812
        %v3814 = vand.u32 %v2246, 4294901760
        %v3815 = vsub.f32 %v2246, %v3814
        %v3816 = vand.u32 %v3815, 4294901760
        %3817 = vmatpush.msra.mxu0 %v3816
        %v3818 = vand.u32 %v2244, 4294901760
        %v3819 = vsub.f32 %v2244, %v3818
        %v3820 = vand.u32 %v3819, 4294901760
        %3821 = vmatpush.msra.mxu0 %v3820
        %v3822 = vand.u32 %v2242, 4294901760
        %v3823 = vsub.f32 %v2242, %v3822
        %v3824 = vand.u32 %v3823, 4294901760
        %3825 = vmatpush.msra.mxu0 %v3824
        %v3826 = vand.u32 %v2240, 4294901760
        %v3827 = vsub.f32 %v2240, %v3826
        %v3828 = vand.u32 %v3827, 4294901760
        %3829 = vmatpush.msra.mxu0 %v3828
        %v3830 = vand.u32 %v2238, 4294901760
        %v3831 = vsub.f32 %v2238, %v3830
        %v3832 = vand.u32 %v3831, 4294901760
        %3833 = vmatpush.msra.mxu0 %v3832
        %v3834 = vand.u32 %v2236, 4294901760
        %v3835 = vsub.f32 %v2236, %v3834
        %v3836 = vand.u32 %v3835, 4294901760
        %3837 = vmatpush.msra.mxu0 %v3836
        %v3838 = vand.u32 %v2234, 4294901760
        %v3839 = vsub.f32 %v2234, %v3838
        %v3840 = vand.u32 %v3839, 4294901760
        %3841 = vmatpush.msra.mxu0 %v3840
        %v3842 = vand.u32 %v2232, 4294901760
        %v3843 = vsub.f32 %v2232, %v3842
        %v3844 = vand.u32 %v3843, 4294901760
        %3845 = vmatpush.msra.mxu0 %v3844
        %v3846 = vand.u32 %v2230, 4294901760
        %v3847 = vsub.f32 %v2230, %v3846
        %v3848 = vand.u32 %v3847, 4294901760
        %3849 = vmatpush.msra.mxu0 %v3848
        %v3850 = vand.u32 %v2228, 4294901760
        %v3851 = vsub.f32 %v2228, %v3850
        %v3852 = vand.u32 %v3851, 4294901760
        %3853 = vmatpush.msra.mxu0 %v3852
        %v3854 = vand.u32 %v2226, 4294901760
        %v3855 = vsub.f32 %v2226, %v3854
        %v3856 = vand.u32 %v3855, 4294901760
        %3857 = vmatpush.msra.mxu0 %v3856
        %v3858 = vand.u32 %v2224, 4294901760
        %v3859 = vsub.f32 %v2224, %v3858
        %v3860 = vand.u32 %v3859, 4294901760
        %3861 = vmatpush.msra.mxu0 %v3860
        %v3862 = vand.u32 %v2222, 4294901760
        %v3863 = vsub.f32 %v2222, %v3862
        %v3864 = vand.u32 %v3863, 4294901760
        %3865 = vmatpush.msra.mxu0 %v3864
        %v3866 = vand.u32 %v2220, 4294901760
        %v3867 = vsub.f32 %v2220, %v3866
        %v3868 = vand.u32 %v3867, 4294901760
        %3869 = vmatpush.msra.mxu0 %v3868
        %v3870 = vand.u32 %v2151, 4294901760
        %3871 = vmatmul.f32.gmra.mxu0 %v3870
        %v3872 = vpop.f32.mrf.mxu0
        %v3873 = vadd.f32 %v3696, %v3872
        %v3874 = vand.u32 %v2153, 4294901760
        %3875 = vmatmul.f32.gmra.mxu0 %v3874
        %v3876 = vpop.f32.mrf.mxu0
        %v3877 = vadd.f32 %v3702, %v3876
        %v3878 = vand.u32 %v2155, 4294901760
        %3879 = vmatmul.f32.gmra.mxu0 %v3878
        %v3880 = vpop.f32.mrf.mxu0
        %v3881 = vadd.f32 %v3708, %v3880
        %v3882 = vand.u32 %v2157, 4294901760
        %3883 = vmatmul.f32.gmra.mxu0 %v3882
        %v3884 = vpop.f32.mrf.mxu0
        %v3885 = vadd.f32 %v3714, %v3884
        %v3886 = vand.u32 %v2159, 4294901760
        %3887 = vmatmul.f32.gmra.mxu0 %v3886
        %v3888 = vpop.f32.mrf.mxu0
        %v3889 = vadd.f32 %v3720, %v3888
        %v3890 = vand.u32 %v2161, 4294901760
        %3891 = vmatmul.f32.gmra.mxu0 %v3890
        %v3892 = vpop.f32.mrf.mxu0
        %v3893 = vadd.f32 %v3726, %v3892
        %v3894 = vand.u32 %v2163, 4294901760
        %3895 = vmatmul.f32.gmra.mxu0 %v3894
        %v3896 = vpop.f32.mrf.mxu0
        %v3897 = vadd.f32 %v3732, %v3896
        %v3898 = vand.u32 %v2165, 4294901760
        %3899 = vmatmul.f32.gmra.mxu0 %v3898
        %v3900 = vpop.f32.mrf.mxu0
        %v3901 = vadd.f32 %v3738, %v3900
        %v3902 = vand.u32 %v2167, 4294901760
        %3903 = vmatmul.f32.gmra.mxu0 %v3902
        %v3904 = vpop.f32.mrf.mxu0
        %v3905 = vadd.f32 %v3744, %v3904
        %v3906 = vand.u32 %v2169, 4294901760
        %3907 = vmatmul.f32.gmra.mxu0 %v3906
        %v3908 = vpop.f32.mrf.mxu0
        %v3909 = vadd.f32 %v3750, %v3908
        %v3910 = vand.u32 %v2171, 4294901760
        %3911 = vmatmul.f32.gmra.mxu0 %v3910
        %v3912 = vpop.f32.mrf.mxu0
        %v3913 = vadd.f32 %v3756, %v3912
        %v3914 = vand.u32 %v2173, 4294901760
        %3915 = vmatmul.f32.gmra.mxu0 %v3914
        %v3916 = vpop.f32.mrf.mxu0
        %v3917 = vadd.f32 %v3762, %v3916
        %v3918 = vand.u32 %v2175, 4294901760
        %3919 = vmatmul.f32.gmra.mxu0 %v3918
        %v3920 = vpop.f32.mrf.mxu0
        %v3921 = vadd.f32 %v3768, %v3920
        %v3922 = vand.u32 %v2177, 4294901760
        %3923 = vmatmul.f32.gmra.mxu0 %v3922
        %v3924 = vpop.f32.mrf.mxu0
        %v3925 = vadd.f32 %v3774, %v3924
        %v3926 = vand.u32 %v2179, 4294901760
        %3927 = vmatmul.f32.gmra.mxu0 %v3926
        %v3928 = vpop.f32.mrf.mxu0
        %v3929 = vadd.f32 %v3780, %v3928
        %v3930 = vand.u32 %v2181, 4294901760
        %3931 = vmatmul.f32.gmra.mxu0 %v3930
        %v3932 = vpop.f32.mrf.mxu0
        %v3933 = vadd.f32 %v3786, %v3932
        %v3934 = vand.u32 %v2183, 4294901760
        %3935 = vmatmul.f32.gmra.mxu0 %v3934
        %v3936 = vpop.f32.mrf.mxu0
        %v3937 = vadd.f32 %v3792, %v3936
        %v3938 = vand.u32 %v2185, 4294901760
        %3939 = vmatmul.f32.gmra.mxu0 %v3938
        %v3940 = vpop.f32.mrf.mxu0
        %v3941 = vadd.f32 %v3798, %v3940
        %v3942 = vand.u32 %v2187, 4294901760
        %3943 = vmatmul.f32.gmra.mxu0 %v3942
        %v3944 = vpop.f32.mrf.mxu0
        %v3945 = vadd.f32 %v3804, %v3944
        %3946 = vdwg.mxu0
        %v3947 = vand.u32 %v2250, 4294901760
        %3948 = vmatpush.msra.mxu0 %v3947
        %v3949 = vand.u32 %v2248, 4294901760
        %3950 = vmatpush.msra.mxu0 %v3949
        %v3951 = vand.u32 %v2246, 4294901760
        %3952 = vmatpush.msra.mxu0 %v3951
        %v3953 = vand.u32 %v2244, 4294901760
        %3954 = vmatpush.msra.mxu0 %v3953
        %v3955 = vand.u32 %v2242, 4294901760
        %3956 = vmatpush.msra.mxu0 %v3955
        %v3957 = vand.u32 %v2240, 4294901760
        %3958 = vmatpush.msra.mxu0 %v3957
        %v3959 = vand.u32 %v2238, 4294901760
        %3960 = vmatpush.msra.mxu0 %v3959
        %v3961 = vand.u32 %v2236, 4294901760
        %3962 = vmatpush.msra.mxu0 %v3961
        %v3963 = vand.u32 %v2234, 4294901760
        %3964 = vmatpush.msra.mxu0 %v3963
        %v3965 = vand.u32 %v2232, 4294901760
        %3966 = vmatpush.msra.mxu0 %v3965
        %v3967 = vand.u32 %v2230, 4294901760
        %3968 = vmatpush.msra.mxu0 %v3967
        %v3969 = vand.u32 %v2228, 4294901760
        %3970 = vmatpush.msra.mxu0 %v3969
        %v3971 = vand.u32 %v2226, 4294901760
        %3972 = vmatpush.msra.mxu0 %v3971
        %v3973 = vand.u32 %v2224, 4294901760
        %3974 = vmatpush.msra.mxu0 %v3973
        %v3975 = vand.u32 %v2222, 4294901760
        %3976 = vmatpush.msra.mxu0 %v3975
        %v3977 = vand.u32 %v2220, 4294901760
        %3978 = vmatpush.msra.mxu0 %v3977
        %v3979 = vand.u32 %v2151, 4294901760
        %3980 = vmatmul.f32.gmra.mxu0 %v3979
        %v3981 = vpop.f32.mrf.mxu0
        %v3982 = vadd.f32 %v3873, %v3981
        %v3983 = vand.u32 %v2153, 4294901760
        %3984 = vmatmul.f32.gmra.mxu0 %v3983
        %v3985 = vpop.f32.mrf.mxu0
        %v3986 = vadd.f32 %v3877, %v3985
        %v3987 = vand.u32 %v2155, 4294901760
        %3988 = vmatmul.f32.gmra.mxu0 %v3987
        %v3989 = vpop.f32.mrf.mxu0
        %v3990 = vadd.f32 %v3881, %v3989
        %v3991 = vand.u32 %v2157, 4294901760
        %3992 = vmatmul.f32.gmra.mxu0 %v3991
        %v3993 = vpop.f32.mrf.mxu0
        %v3994 = vadd.f32 %v3885, %v3993
        %v3995 = vand.u32 %v2159, 4294901760
        %3996 = vmatmul.f32.gmra.mxu0 %v3995
        %v3997 = vpop.f32.mrf.mxu0
        %v3998 = vadd.f32 %v3889, %v3997
        %v3999 = vand.u32 %v2161, 4294901760
        %4000 = vmatmul.f32.gmra.mxu0 %v3999
        %v4001 = vpop.f32.mrf.mxu0
        %v4002 = vadd.f32 %v3893, %v4001
        %v4003 = vand.u32 %v2163, 4294901760
        %4004 = vmatmul.f32.gmra.mxu0 %v4003
        %v4005 = vpop.f32.mrf.mxu0
        %v4006 = vadd.f32 %v3897, %v4005
        %v4007 = vand.u32 %v2165, 4294901760
        %4008 = vmatmul.f32.gmra.mxu0 %v4007
        %v4009 = vpop.f32.mrf.mxu0
        %v4010 = vadd.f32 %v3901, %v4009
        %v4011 = vand.u32 %v2167, 4294901760
        %4012 = vmatmul.f32.gmra.mxu0 %v4011
        %v4013 = vpop.f32.mrf.mxu0
        %v4014 = vadd.f32 %v3905, %v4013
        %v4015 = vand.u32 %v2169, 4294901760
        %4016 = vmatmul.f32.gmra.mxu0 %v4015
        %v4017 = vpop.f32.mrf.mxu0
        %v4018 = vadd.f32 %v3909, %v4017
        %v4019 = vand.u32 %v2171, 4294901760
        %4020 = vmatmul.f32.gmra.mxu0 %v4019
        %v4021 = vpop.f32.mrf.mxu0
        %v4022 = vadd.f32 %v3913, %v4021
        %v4023 = vand.u32 %v2173, 4294901760
        %4024 = vmatmul.f32.gmra.mxu0 %v4023
        %v4025 = vpop.f32.mrf.mxu0
        %v4026 = vadd.f32 %v3917, %v4025
        %v4027 = vand.u32 %v2175, 4294901760
        %4028 = vmatmul.f32.gmra.mxu0 %v4027
        %v4029 = vpop.f32.mrf.mxu0
        %v4030 = vadd.f32 %v3921, %v4029
        %v4031 = vand.u32 %v2177, 4294901760
        %4032 = vmatmul.f32.gmra.mxu0 %v4031
        %v4033 = vpop.f32.mrf.mxu0
        %v4034 = vadd.f32 %v3925, %v4033
        %v4035 = vand.u32 %v2179, 4294901760
        %4036 = vmatmul.f32.gmra.mxu0 %v4035
        %v4037 = vpop.f32.mrf.mxu0
        %v4038 = vadd.f32 %v3929, %v4037
        %v4039 = vand.u32 %v2181, 4294901760
        %4040 = vmatmul.f32.gmra.mxu0 %v4039
        %v4041 = vpop.f32.mrf.mxu0
        %v4042 = vadd.f32 %v3933, %v4041
        %v4043 = vand.u32 %v2183, 4294901760
        %4044 = vmatmul.f32.gmra.mxu0 %v4043
        %v4045 = vpop.f32.mrf.mxu0
        %v4046 = vadd.f32 %v3937, %v4045
        %v4047 = vand.u32 %v2185, 4294901760
        %4048 = vmatmul.f32.gmra.mxu0 %v4047
        %v4049 = vpop.f32.mrf.mxu0
        %v4050 = vadd.f32 %v3941, %v4049
        %v4051 = vand.u32 %v2187, 4294901760
        %4052 = vmatmul.f32.gmra.mxu0 %v4051
        %v4053 = vpop.f32.mrf.mxu0
        %v4054 = vadd.f32 %v3945, %v4053
        %4055 = vdwg.mxu0
        %v4056 = vand.u32 %v2219, 4294901760
        %4057 = vmatpush.msra.mxu0 %v4056
        %v4058 = vand.u32 %v2217, 4294901760
        %4059 = vmatpush.msra.mxu0 %v4058
        %v4060 = vand.u32 %v2215, 4294901760
        %4061 = vmatpush.msra.mxu0 %v4060
        %v4062 = vand.u32 %v2213, 4294901760
        %4063 = vmatpush.msra.mxu0 %v4062
        %v4064 = vand.u32 %v2211, 4294901760
        %4065 = vmatpush.msra.mxu0 %v4064
        %v4066 = vand.u32 %v2209, 4294901760
        %4067 = vmatpush.msra.mxu0 %v4066
        %v4068 = vand.u32 %v2207, 4294901760
        %4069 = vmatpush.msra.mxu0 %v4068
        %v4070 = vand.u32 %v2205, 4294901760
        %4071 = vmatpush.msra.mxu0 %v4070
        %v4072 = vand.u32 %v2203, 4294901760
        %4073 = vmatpush.msra.mxu0 %v4072
        %v4074 = vand.u32 %v2201, 4294901760
        %4075 = vmatpush.msra.mxu0 %v4074
        %v4076 = vand.u32 %v2199, 4294901760
        %4077 = vmatpush.msra.mxu0 %v4076
        %v4078 = vand.u32 %v2197, 4294901760
        %4079 = vmatpush.msra.mxu0 %v4078
        %v4080 = vand.u32 %v2195, 4294901760
        %4081 = vmatpush.msra.mxu0 %v4080
        %v4082 = vand.u32 %v2193, 4294901760
        %4083 = vmatpush.msra.mxu0 %v4082
        %v4084 = vand.u32 %v2191, 4294901760
        %4085 = vmatpush.msra.mxu0 %v4084
        %v4086 = vand.u32 %v2189, 4294901760
        %4087 = vmatpush.msra.mxu0 %v4086
        %v4088 = vand.u32 %v2150, 4294901760
        %v4089 = vsub.f32 %v2150, %v4088
        %v4090 = vand.u32 %v4089, 4294901760
        %v4091 = vsub.f32 %v4089, %v4090
        %v4092 = vand.u32 %v4091, 4294901760
        %4093 = vmatmul.f32.gmra.mxu0 %v4092
        %v4094 = vpop.f32.mrf.mxu0
        %v4095 = vadd.f32 %v2255, %v4094
        %v4096 = vand.u32 %v2152, 4294901760
        %v4097 = vsub.f32 %v2152, %v4096
        %v4098 = vand.u32 %v4097, 4294901760
        %v4099 = vsub.f32 %v4097, %v4098
        %v4100 = vand.u32 %v4099, 4294901760
        %4101 = vmatmul.f32.gmra.mxu0 %v4100
        %v4102 = vpop.f32.mrf.mxu0
        %v4103 = vadd.f32 %v2255, %v4102
        %v4104 = vand.u32 %v2154, 4294901760
        %v4105 = vsub.f32 %v2154, %v4104
        %v4106 = vand.u32 %v4105, 4294901760
        %v4107 = vsub.f32 %v4105, %v4106
        %v4108 = vand.u32 %v4107, 4294901760
        %4109 = vmatmul.f32.gmra.mxu0 %v4108
        %v4110 = vpop.f32.mrf.mxu0
        %v4111 = vadd.f32 %v2255, %v4110
        %v4112 = vand.u32 %v2156, 4294901760
        %v4113 = vsub.f32 %v2156, %v4112
        %v4114 = vand.u32 %v4113, 4294901760
        %v4115 = vsub.f32 %v4113, %v4114
        %v4116 = vand.u32 %v4115, 4294901760
        %4117 = vmatmul.f32.gmra.mxu0 %v4116
        %v4118 = vpop.f32.mrf.mxu0
        %v4119 = vadd.f32 %v2255, %v4118
        %v4120 = vand.u32 %v2158, 4294901760
        %v4121 = vsub.f32 %v2158, %v4120
        %v4122 = vand.u32 %v4121, 4294901760
        %v4123 = vsub.f32 %v4121, %v4122
        %v4124 = vand.u32 %v4123, 4294901760
        %4125 = vmatmul.f32.gmra.mxu0 %v4124
        %v4126 = vpop.f32.mrf.mxu0
        %v4127 = vadd.f32 %v2255, %v4126
        %v4128 = vand.u32 %v2160, 4294901760
        %v4129 = vsub.f32 %v2160, %v4128
        %v4130 = vand.u32 %v4129, 4294901760
        %v4131 = vsub.f32 %v4129, %v4130
        %v4132 = vand.u32 %v4131, 4294901760
        %4133 = vmatmul.f32.gmra.mxu0 %v4132
        %v4134 = vpop.f32.mrf.mxu0
        %v4135 = vadd.f32 %v2255, %v4134
        %v4136 = vand.u32 %v2162, 4294901760
        %v4137 = vsub.f32 %v2162, %v4136
        %v4138 = vand.u32 %v4137, 4294901760
        %v4139 = vsub.f32 %v4137, %v4138
        %v4140 = vand.u32 %v4139, 4294901760
        %4141 = vmatmul.f32.gmra.mxu0 %v4140
        %v4142 = vpop.f32.mrf.mxu0
        %v4143 = vadd.f32 %v2255, %v4142
        %v4144 = vand.u32 %v2164, 4294901760
        %v4145 = vsub.f32 %v2164, %v4144
        %v4146 = vand.u32 %v4145, 4294901760
        %v4147 = vsub.f32 %v4145, %v4146
        %v4148 = vand.u32 %v4147, 4294901760
        %4149 = vmatmul.f32.gmra.mxu0 %v4148
        %v4150 = vpop.f32.mrf.mxu0
        %v4151 = vadd.f32 %v2255, %v4150
        %v4152 = vand.u32 %v2166, 4294901760
        %v4153 = vsub.f32 %v2166, %v4152
        %v4154 = vand.u32 %v4153, 4294901760
        %v4155 = vsub.f32 %v4153, %v4154
        %v4156 = vand.u32 %v4155, 4294901760
        %4157 = vmatmul.f32.gmra.mxu0 %v4156
        %v4158 = vpop.f32.mrf.mxu0
        %v4159 = vadd.f32 %v2255, %v4158
        %v4160 = vand.u32 %v2168, 4294901760
        %v4161 = vsub.f32 %v2168, %v4160
        %v4162 = vand.u32 %v4161, 4294901760
        %v4163 = vsub.f32 %v4161, %v4162
        %v4164 = vand.u32 %v4163, 4294901760
        %4165 = vmatmul.f32.gmra.mxu0 %v4164
        %v4166 = vpop.f32.mrf.mxu0
        %v4167 = vadd.f32 %v2255, %v4166
        %v4168 = vand.u32 %v2170, 4294901760
        %v4169 = vsub.f32 %v2170, %v4168
        %v4170 = vand.u32 %v4169, 4294901760
        %v4171 = vsub.f32 %v4169, %v4170
        %v4172 = vand.u32 %v4171, 4294901760
        %4173 = vmatmul.f32.gmra.mxu0 %v4172
        %v4174 = vpop.f32.mrf.mxu0
        %v4175 = vadd.f32 %v2255, %v4174
        %v4176 = vand.u32 %v2172, 4294901760
        %v4177 = vsub.f32 %v2172, %v4176
        %v4178 = vand.u32 %v4177, 4294901760
        %v4179 = vsub.f32 %v4177, %v4178
        %v4180 = vand.u32 %v4179, 4294901760
        %4181 = vmatmul.f32.gmra.mxu0 %v4180
        %v4182 = vpop.f32.mrf.mxu0
        %v4183 = vadd.f32 %v2255, %v4182
        %v4184 = vand.u32 %v2174, 4294901760
        %v4185 = vsub.f32 %v2174, %v4184
        %v4186 = vand.u32 %v4185, 4294901760
        %v4187 = vsub.f32 %v4185, %v4186
        %v4188 = vand.u32 %v4187, 4294901760
        %4189 = vmatmul.f32.gmra.mxu0 %v4188
        %v4190 = vpop.f32.mrf.mxu0
        %v4191 = vadd.f32 %v2255, %v4190
        %v4192 = vand.u32 %v2176, 4294901760
        %v4193 = vsub.f32 %v2176, %v4192
        %v4194 = vand.u32 %v4193, 4294901760
        %v4195 = vsub.f32 %v4193, %v4194
        %v4196 = vand.u32 %v4195, 4294901760
        %4197 = vmatmul.f32.gmra.mxu0 %v4196
        %v4198 = vpop.f32.mrf.mxu0
        %v4199 = vadd.f32 %v2255, %v4198
        %v4200 = vand.u32 %v2178, 4294901760
        %v4201 = vsub.f32 %v2178, %v4200
        %v4202 = vand.u32 %v4201, 4294901760
        %v4203 = vsub.f32 %v4201, %v4202
        %v4204 = vand.u32 %v4203, 4294901760
        %4205 = vmatmul.f32.gmra.mxu0 %v4204
        %v4206 = vpop.f32.mrf.mxu0
        %v4207 = vadd.f32 %v2255, %v4206
        %v4208 = vand.u32 %v2180, 4294901760
        %v4209 = vsub.f32 %v2180, %v4208
        %v4210 = vand.u32 %v4209, 4294901760
        %v4211 = vsub.f32 %v4209, %v4210
        %v4212 = vand.u32 %v4211, 4294901760
        %4213 = vmatmul.f32.gmra.mxu0 %v4212
        %v4214 = vpop.f32.mrf.mxu0
        %v4215 = vadd.f32 %v2255, %v4214
        %v4216 = vand.u32 %v2182, 4294901760
        %v4217 = vsub.f32 %v2182, %v4216
        %v4218 = vand.u32 %v4217, 4294901760
        %v4219 = vsub.f32 %v4217, %v4218
        %v4220 = vand.u32 %v4219, 4294901760
        %4221 = vmatmul.f32.gmra.mxu0 %v4220
        %v4222 = vpop.f32.mrf.mxu0
        %v4223 = vadd.f32 %v2255, %v4222
        %v4224 = vand.u32 %v2184, 4294901760
        %v4225 = vsub.f32 %v2184, %v4224
        %v4226 = vand.u32 %v4225, 4294901760
        %v4227 = vsub.f32 %v4225, %v4226
        %v4228 = vand.u32 %v4227, 4294901760
        %4229 = vmatmul.f32.gmra.mxu0 %v4228
        %v4230 = vpop.f32.mrf.mxu0
        %v4231 = vadd.f32 %v2255, %v4230
        %v4232 = vand.u32 %v2186, 4294901760
        %v4233 = vsub.f32 %v2186, %v4232
        %v4234 = vand.u32 %v4233, 4294901760
        %v4235 = vsub.f32 %v4233, %v4234
        %v4236 = vand.u32 %v4235, 4294901760
        %4237 = vmatmul.f32.gmra.mxu0 %v4236
        %v4238 = vpop.f32.mrf.mxu0
        %v4239 = vadd.f32 %v2255, %v4238
        %4240 = vdwg.mxu0
        %v4241 = vand.u32 %v2219, 4294901760
        %v4242 = vsub.f32 %v2219, %v4241
        %v4243 = vand.u32 %v4242, 4294901760
        %v4244 = vsub.f32 %v4242, %v4243
        %v4245 = vand.u32 %v4244, 4294901760
        %4246 = vmatpush.msra.mxu0 %v4245
        %v4247 = vand.u32 %v2217, 4294901760
        %v4248 = vsub.f32 %v2217, %v4247
        %v4249 = vand.u32 %v4248, 4294901760
        %v4250 = vsub.f32 %v4248, %v4249
        %v4251 = vand.u32 %v4250, 4294901760
        %4252 = vmatpush.msra.mxu0 %v4251
        %v4253 = vand.u32 %v2215, 4294901760
        %v4254 = vsub.f32 %v2215, %v4253
        %v4255 = vand.u32 %v4254, 4294901760
        %v4256 = vsub.f32 %v4254, %v4255
        %v4257 = vand.u32 %v4256, 4294901760
        %4258 = vmatpush.msra.mxu0 %v4257
        %v4259 = vand.u32 %v2213, 4294901760
        %v4260 = vsub.f32 %v2213, %v4259
        %v4261 = vand.u32 %v4260, 4294901760
        %v4262 = vsub.f32 %v4260, %v4261
        %v4263 = vand.u32 %v4262, 4294901760
        %4264 = vmatpush.msra.mxu0 %v4263
        %v4265 = vand.u32 %v2211, 4294901760
        %v4266 = vsub.f32 %v2211, %v4265
        %v4267 = vand.u32 %v4266, 4294901760
        %v4268 = vsub.f32 %v4266, %v4267
        %v4269 = vand.u32 %v4268, 4294901760
        %4270 = vmatpush.msra.mxu0 %v4269
        %v4271 = vand.u32 %v2209, 4294901760
        %v4272 = vsub.f32 %v2209, %v4271
        %v4273 = vand.u32 %v4272, 4294901760
        %v4274 = vsub.f32 %v4272, %v4273
        %v4275 = vand.u32 %v4274, 4294901760
        %4276 = vmatpush.msra.mxu0 %v4275
        %v4277 = vand.u32 %v2207, 4294901760
        %v4278 = vsub.f32 %v2207, %v4277
        %v4279 = vand.u32 %v4278, 4294901760
        %v4280 = vsub.f32 %v4278, %v4279
        %v4281 = vand.u32 %v4280, 4294901760
        %4282 = vmatpush.msra.mxu0 %v4281
        %v4283 = vand.u32 %v2205, 4294901760
        %v4284 = vsub.f32 %v2205, %v4283
        %v4285 = vand.u32 %v4284, 4294901760
        %v4286 = vsub.f32 %v4284, %v4285
        %v4287 = vand.u32 %v4286, 4294901760
        %4288 = vmatpush.msra.mxu0 %v4287
        %v4289 = vand.u32 %v2203, 4294901760
        %v4290 = vsub.f32 %v2203, %v4289
        %v4291 = vand.u32 %v4290, 4294901760
        %v4292 = vsub.f32 %v4290, %v4291
        %v4293 = vand.u32 %v4292, 4294901760
        %4294 = vmatpush.msra.mxu0 %v4293
        %v4295 = vand.u32 %v2201, 4294901760
        %v4296 = vsub.f32 %v2201, %v4295
        %v4297 = vand.u32 %v4296, 4294901760
        %v4298 = vsub.f32 %v4296, %v4297
        %v4299 = vand.u32 %v4298, 4294901760
        %4300 = vmatpush.msra.mxu0 %v4299
        %v4301 = vand.u32 %v2199, 4294901760
        %v4302 = vsub.f32 %v2199, %v4301
        %v4303 = vand.u32 %v4302, 4294901760
        %v4304 = vsub.f32 %v4302, %v4303
        %v4305 = vand.u32 %v4304, 4294901760
        %4306 = vmatpush.msra.mxu0 %v4305
        %v4307 = vand.u32 %v2197, 4294901760
        %v4308 = vsub.f32 %v2197, %v4307
        %v4309 = vand.u32 %v4308, 4294901760
        %v4310 = vsub.f32 %v4308, %v4309
        %v4311 = vand.u32 %v4310, 4294901760
        %4312 = vmatpush.msra.mxu0 %v4311
        %v4313 = vand.u32 %v2195, 4294901760
        %v4314 = vsub.f32 %v2195, %v4313
        %v4315 = vand.u32 %v4314, 4294901760
        %v4316 = vsub.f32 %v4314, %v4315
        %v4317 = vand.u32 %v4316, 4294901760
        %4318 = vmatpush.msra.mxu0 %v4317
        %v4319 = vand.u32 %v2193, 4294901760
        %v4320 = vsub.f32 %v2193, %v4319
        %v4321 = vand.u32 %v4320, 4294901760
        %v4322 = vsub.f32 %v4320, %v4321
        %v4323 = vand.u32 %v4322, 4294901760
        %4324 = vmatpush.msra.mxu0 %v4323
        %v4325 = vand.u32 %v2191, 4294901760
        %v4326 = vsub.f32 %v2191, %v4325
        %v4327 = vand.u32 %v4326, 4294901760
        %v4328 = vsub.f32 %v4326, %v4327
        %v4329 = vand.u32 %v4328, 4294901760
        %4330 = vmatpush.msra.mxu0 %v4329
        %v4331 = vand.u32 %v2189, 4294901760
        %v4332 = vsub.f32 %v2189, %v4331
        %v4333 = vand.u32 %v4332, 4294901760
        %v4334 = vsub.f32 %v4332, %v4333
        %v4335 = vand.u32 %v4334, 4294901760
        %4336 = vmatpush.msra.mxu0 %v4335
        %v4337 = vand.u32 %v2150, 4294901760
        %4338 = vmatmul.f32.gmra.mxu0 %v4337
        %v4339 = vpop.f32.mrf.mxu0
        %v4340 = vadd.f32 %v4095, %v4339
        %v4341 = vand.u32 %v2152, 4294901760
        %4342 = vmatmul.f32.gmra.mxu0 %v4341
        %v4343 = vpop.f32.mrf.mxu0
        %v4344 = vadd.f32 %v4103, %v4343
        %v4345 = vand.u32 %v2154, 4294901760
        %4346 = vmatmul.f32.gmra.mxu0 %v4345
        %v4347 = vpop.f32.mrf.mxu0
        %v4348 = vadd.f32 %v4111, %v4347
        %v4349 = vand.u32 %v2156, 4294901760
        %4350 = vmatmul.f32.gmra.mxu0 %v4349
        %v4351 = vpop.f32.mrf.mxu0
        %v4352 = vadd.f32 %v4119, %v4351
        %v4353 = vand.u32 %v2158, 4294901760
        %4354 = vmatmul.f32.gmra.mxu0 %v4353
        %v4355 = vpop.f32.mrf.mxu0
        %v4356 = vadd.f32 %v4127, %v4355
        %v4357 = vand.u32 %v2160, 4294901760
        %4358 = vmatmul.f32.gmra.mxu0 %v4357
        %v4359 = vpop.f32.mrf.mxu0
        %v4360 = vadd.f32 %v4135, %v4359
        %v4361 = vand.u32 %v2162, 4294901760
        %4362 = vmatmul.f32.gmra.mxu0 %v4361
        %v4363 = vpop.f32.mrf.mxu0
        %v4364 = vadd.f32 %v4143, %v4363
        %v4365 = vand.u32 %v2164, 4294901760
        %4366 = vmatmul.f32.gmra.mxu0 %v4365
        %v4367 = vpop.f32.mrf.mxu0
        %v4368 = vadd.f32 %v4151, %v4367
        %v4369 = vand.u32 %v2166, 4294901760
        %4370 = vmatmul.f32.gmra.mxu0 %v4369
        %v4371 = vpop.f32.mrf.mxu0
        %v4372 = vadd.f32 %v4159, %v4371
        %v4373 = vand.u32 %v2168, 4294901760
        %4374 = vmatmul.f32.gmra.mxu0 %v4373
        %v4375 = vpop.f32.mrf.mxu0
        %v4376 = vadd.f32 %v4167, %v4375
        %v4377 = vand.u32 %v2170, 4294901760
        %4378 = vmatmul.f32.gmra.mxu0 %v4377
        %v4379 = vpop.f32.mrf.mxu0
        %v4380 = vadd.f32 %v4175, %v4379
        %v4381 = vand.u32 %v2172, 4294901760
        %4382 = vmatmul.f32.gmra.mxu0 %v4381
        %v4383 = vpop.f32.mrf.mxu0
        %v4384 = vadd.f32 %v4183, %v4383
        %v4385 = vand.u32 %v2174, 4294901760
        %4386 = vmatmul.f32.gmra.mxu0 %v4385
        %v4387 = vpop.f32.mrf.mxu0
        %v4388 = vadd.f32 %v4191, %v4387
        %v4389 = vand.u32 %v2176, 4294901760
        %4390 = vmatmul.f32.gmra.mxu0 %v4389
        %v4391 = vpop.f32.mrf.mxu0
        %v4392 = vadd.f32 %v4199, %v4391
        %v4393 = vand.u32 %v2178, 4294901760
        %4394 = vmatmul.f32.gmra.mxu0 %v4393
        %v4395 = vpop.f32.mrf.mxu0
        %v4396 = vadd.f32 %v4207, %v4395
        %v4397 = vand.u32 %v2180, 4294901760
        %4398 = vmatmul.f32.gmra.mxu0 %v4397
        %v4399 = vpop.f32.mrf.mxu0
        %v4400 = vadd.f32 %v4215, %v4399
        %v4401 = vand.u32 %v2182, 4294901760
        %4402 = vmatmul.f32.gmra.mxu0 %v4401
        %v4403 = vpop.f32.mrf.mxu0
        %v4404 = vadd.f32 %v4223, %v4403
        %v4405 = vand.u32 %v2184, 4294901760
        %4406 = vmatmul.f32.gmra.mxu0 %v4405
        %v4407 = vpop.f32.mrf.mxu0
        %v4408 = vadd.f32 %v4231, %v4407
        %v4409 = vand.u32 %v2186, 4294901760
        %4410 = vmatmul.f32.gmra.mxu0 %v4409
        %v4411 = vpop.f32.mrf.mxu0
        %v4412 = vadd.f32 %v4239, %v4411
        %4413 = vdwg.mxu0
        %v4414 = vand.u32 %v2219, 4294901760
        %v4415 = vsub.f32 %v2219, %v4414
        %4416 = vmatpush.msra.mxu0 %v4415
        %v4417 = vand.u32 %v2217, 4294901760
        %v4418 = vsub.f32 %v2217, %v4417
        %4419 = vmatpush.msra.mxu0 %v4418
        %v4420 = vand.u32 %v2215, 4294901760
        %v4421 = vsub.f32 %v2215, %v4420
        %4422 = vmatpush.msra.mxu0 %v4421
        %v4423 = vand.u32 %v2213, 4294901760
        %v4424 = vsub.f32 %v2213, %v4423
        %4425 = vmatpush.msra.mxu0 %v4424
        %v4426 = vand.u32 %v2211, 4294901760
        %v4427 = vsub.f32 %v2211, %v4426
        %4428 = vmatpush.msra.mxu0 %v4427
        %v4429 = vand.u32 %v2209, 4294901760
        %v4430 = vsub.f32 %v2209, %v4429
        %4431 = vmatpush.msra.mxu0 %v4430
        %v4432 = vand.u32 %v2207, 4294901760
        %v4433 = vsub.f32 %v2207, %v4432
        %4434 = vmatpush.msra.mxu0 %v4433
        %v4435 = vand.u32 %v2205, 4294901760
        %v4436 = vsub.f32 %v2205, %v4435
        %4437 = vmatpush.msra.mxu0 %v4436
        %v4438 = vand.u32 %v2203, 4294901760
        %v4439 = vsub.f32 %v2203, %v4438
        %4440 = vmatpush.msra.mxu0 %v4439
        %v4441 = vand.u32 %v2201, 4294901760
        %v4442 = vsub.f32 %v2201, %v4441
        %4443 = vmatpush.msra.mxu0 %v4442
        %v4444 = vand.u32 %v2199, 4294901760
        %v4445 = vsub.f32 %v2199, %v4444
        %4446 = vmatpush.msra.mxu0 %v4445
        %v4447 = vand.u32 %v2197, 4294901760
        %v4448 = vsub.f32 %v2197, %v4447
        %4449 = vmatpush.msra.mxu0 %v4448
        %v4450 = vand.u32 %v2195, 4294901760
        %v4451 = vsub.f32 %v2195, %v4450
        %4452 = vmatpush.msra.mxu0 %v4451
        %v4453 = vand.u32 %v2193, 4294901760
        %v4454 = vsub.f32 %v2193, %v4453
        %4455 = vmatpush.msra.mxu0 %v4454
        %v4456 = vand.u32 %v2191, 4294901760
        %v4457 = vsub.f32 %v2191, %v4456
        %4458 = vmatpush.msra.mxu0 %v4457
        %v4459 = vand.u32 %v2189, 4294901760
        %v4460 = vsub.f32 %v2189, %v4459
        %4461 = vmatpush.msra.mxu0 %v4460
        %v4462 = vand.u32 %v2150, 4294901760
        %v4463 = vsub.f32 %v2150, %v4462
        %4464 = vmatmul.f32.gmra.mxu0 %v4463
        %v4465 = vpop.f32.mrf.mxu0
        %v4466 = vadd.f32 %v4340, %v4465
        %v4467 = vand.u32 %v2152, 4294901760
        %v4468 = vsub.f32 %v2152, %v4467
        %4469 = vmatmul.f32.gmra.mxu0 %v4468
        %v4470 = vpop.f32.mrf.mxu0
        %v4471 = vadd.f32 %v4344, %v4470
        %v4472 = vand.u32 %v2154, 4294901760
        %v4473 = vsub.f32 %v2154, %v4472
        %4474 = vmatmul.f32.gmra.mxu0 %v4473
        %v4475 = vpop.f32.mrf.mxu0
        %v4476 = vadd.f32 %v4348, %v4475
        %v4477 = vand.u32 %v2156, 4294901760
        %v4478 = vsub.f32 %v2156, %v4477
        %4479 = vmatmul.f32.gmra.mxu0 %v4478
        %v4480 = vpop.f32.mrf.mxu0
        %v4481 = vadd.f32 %v4352, %v4480
        %v4482 = vand.u32 %v2158, 4294901760
        %v4483 = vsub.f32 %v2158, %v4482
        %4484 = vmatmul.f32.gmra.mxu0 %v4483
        %v4485 = vpop.f32.mrf.mxu0
        %v4486 = vadd.f32 %v4356, %v4485
        %v4487 = vand.u32 %v2160, 4294901760
        %v4488 = vsub.f32 %v2160, %v4487
        %4489 = vmatmul.f32.gmra.mxu0 %v4488
        %v4490 = vpop.f32.mrf.mxu0
        %v4491 = vadd.f32 %v4360, %v4490
        %v4492 = vand.u32 %v2162, 4294901760
        %v4493 = vsub.f32 %v2162, %v4492
        %4494 = vmatmul.f32.gmra.mxu0 %v4493
        %v4495 = vpop.f32.mrf.mxu0
        %v4496 = vadd.f32 %v4364, %v4495
        %v4497 = vand.u32 %v2164, 4294901760
        %v4498 = vsub.f32 %v2164, %v4497
        %4499 = vmatmul.f32.gmra.mxu0 %v4498
        %v4500 = vpop.f32.mrf.mxu0
        %v4501 = vadd.f32 %v4368, %v4500
        %v4502 = vand.u32 %v2166, 4294901760
        %v4503 = vsub.f32 %v2166, %v4502
        %4504 = vmatmul.f32.gmra.mxu0 %v4503
        %v4505 = vpop.f32.mrf.mxu0
        %v4506 = vadd.f32 %v4372, %v4505
        %v4507 = vand.u32 %v2168, 4294901760
        %v4508 = vsub.f32 %v2168, %v4507
        %4509 = vmatmul.f32.gmra.mxu0 %v4508
        %v4510 = vpop.f32.mrf.mxu0
        %v4511 = vadd.f32 %v4376, %v4510
        %v4512 = vand.u32 %v2170, 4294901760
        %v4513 = vsub.f32 %v2170, %v4512
        %4514 = vmatmul.f32.gmra.mxu0 %v4513
        %v4515 = vpop.f32.mrf.mxu0
        %v4516 = vadd.f32 %v4380, %v4515
        %v4517 = vand.u32 %v2172, 4294901760
        %v4518 = vsub.f32 %v2172, %v4517
        %4519 = vmatmul.f32.gmra.mxu0 %v4518
        %v4520 = vpop.f32.mrf.mxu0
        %v4521 = vadd.f32 %v4384, %v4520
        %v4522 = vand.u32 %v2174, 4294901760
        %v4523 = vsub.f32 %v2174, %v4522
        %4524 = vmatmul.f32.gmra.mxu0 %v4523
        %v4525 = vpop.f32.mrf.mxu0
        %v4526 = vadd.f32 %v4388, %v4525
        %v4527 = vand.u32 %v2176, 4294901760
        %v4528 = vsub.f32 %v2176, %v4527
        %4529 = vmatmul.f32.gmra.mxu0 %v4528
        %v4530 = vpop.f32.mrf.mxu0
        %v4531 = vadd.f32 %v4392, %v4530
        %v4532 = vand.u32 %v2178, 4294901760
        %v4533 = vsub.f32 %v2178, %v4532
        %4534 = vmatmul.f32.gmra.mxu0 %v4533
        %v4535 = vpop.f32.mrf.mxu0
        %v4536 = vadd.f32 %v4396, %v4535
        %v4537 = vand.u32 %v2180, 4294901760
        %v4538 = vsub.f32 %v2180, %v4537
        %4539 = vmatmul.f32.gmra.mxu0 %v4538
        %v4540 = vpop.f32.mrf.mxu0
        %v4541 = vadd.f32 %v4400, %v4540
        %v4542 = vand.u32 %v2182, 4294901760
        %v4543 = vsub.f32 %v2182, %v4542
        %4544 = vmatmul.f32.gmra.mxu0 %v4543
        %v4545 = vpop.f32.mrf.mxu0
        %v4546 = vadd.f32 %v4404, %v4545
        %v4547 = vand.u32 %v2184, 4294901760
        %v4548 = vsub.f32 %v2184, %v4547
        %4549 = vmatmul.f32.gmra.mxu0 %v4548
        %v4550 = vpop.f32.mrf.mxu0
        %v4551 = vadd.f32 %v4408, %v4550
        %v4552 = vand.u32 %v2186, 4294901760
        %v4553 = vsub.f32 %v2186, %v4552
        %4554 = vmatmul.f32.gmra.mxu0 %v4553
        %v4555 = vpop.f32.mrf.mxu0
        %v4556 = vadd.f32 %v4412, %v4555
        %4557 = vdwg.mxu0
        %v4558 = vand.u32 %v2219, 4294901760
        %4559 = vmatpush.msra.mxu0 %v4558
        %v4560 = vand.u32 %v2217, 4294901760
        %4561 = vmatpush.msra.mxu0 %v4560
        %v4562 = vand.u32 %v2215, 4294901760
        %4563 = vmatpush.msra.mxu0 %v4562
        %v4564 = vand.u32 %v2213, 4294901760
        %4565 = vmatpush.msra.mxu0 %v4564
        %v4566 = vand.u32 %v2211, 4294901760
        %4567 = vmatpush.msra.mxu0 %v4566
        %v4568 = vand.u32 %v2209, 4294901760
        %4569 = vmatpush.msra.mxu0 %v4568
        %v4570 = vand.u32 %v2207, 4294901760
        %4571 = vmatpush.msra.mxu0 %v4570
        %v4572 = vand.u32 %v2205, 4294901760
        %4573 = vmatpush.msra.mxu0 %v4572
        %v4574 = vand.u32 %v2203, 4294901760
        %4575 = vmatpush.msra.mxu0 %v4574
        %v4576 = vand.u32 %v2201, 4294901760
        %4577 = vmatpush.msra.mxu0 %v4576
        %v4578 = vand.u32 %v2199, 4294901760
        %4579 = vmatpush.msra.mxu0 %v4578
        %v4580 = vand.u32 %v2197, 4294901760
        %4581 = vmatpush.msra.mxu0 %v4580
        %v4582 = vand.u32 %v2195, 4294901760
        %4583 = vmatpush.msra.mxu0 %v4582
        %v4584 = vand.u32 %v2193, 4294901760
        %4585 = vmatpush.msra.mxu0 %v4584
        %v4586 = vand.u32 %v2191, 4294901760
        %4587 = vmatpush.msra.mxu0 %v4586
        %v4588 = vand.u32 %v2189, 4294901760
        %4589 = vmatpush.msra.mxu0 %v4588
        %v4590 = vand.u32 %v2150, 4294901760
        %v4591 = vsub.f32 %v2150, %v4590
        %v4592 = vand.u32 %v4591, 4294901760
        %4593 = vmatmul.f32.gmra.mxu0 %v4592
        %v4594 = vpop.f32.mrf.mxu0
        %v4595 = vadd.f32 %v4466, %v4594
        %v4596 = vand.u32 %v2152, 4294901760
        %v4597 = vsub.f32 %v2152, %v4596
        %v4598 = vand.u32 %v4597, 4294901760
        %4599 = vmatmul.f32.gmra.mxu0 %v4598
        %v4600 = vpop.f32.mrf.mxu0
        %v4601 = vadd.f32 %v4471, %v4600
        %v4602 = vand.u32 %v2154, 4294901760
        %v4603 = vsub.f32 %v2154, %v4602
        %v4604 = vand.u32 %v4603, 4294901760
        %4605 = vmatmul.f32.gmra.mxu0 %v4604
        %v4606 = vpop.f32.mrf.mxu0
        %v4607 = vadd.f32 %v4476, %v4606
        %v4608 = vand.u32 %v2156, 4294901760
        %v4609 = vsub.f32 %v2156, %v4608
        %v4610 = vand.u32 %v4609, 4294901760
        %4611 = vmatmul.f32.gmra.mxu0 %v4610
        %v4612 = vpop.f32.mrf.mxu0
        %v4613 = vadd.f32 %v4481, %v4612
        %v4614 = vand.u32 %v2158, 4294901760
        %v4615 = vsub.f32 %v2158, %v4614
        %v4616 = vand.u32 %v4615, 4294901760
        %4617 = vmatmul.f32.gmra.mxu0 %v4616
        %v4618 = vpop.f32.mrf.mxu0
        %v4619 = vadd.f32 %v4486, %v4618
        %v4620 = vand.u32 %v2160, 4294901760
        %v4621 = vsub.f32 %v2160, %v4620
        %v4622 = vand.u32 %v4621, 4294901760
        %4623 = vmatmul.f32.gmra.mxu0 %v4622
        %v4624 = vpop.f32.mrf.mxu0
        %v4625 = vadd.f32 %v4491, %v4624
        %v4626 = vand.u32 %v2162, 4294901760
        %v4627 = vsub.f32 %v2162, %v4626
        %v4628 = vand.u32 %v4627, 4294901760
        %4629 = vmatmul.f32.gmra.mxu0 %v4628
        %v4630 = vpop.f32.mrf.mxu0
        %v4631 = vadd.f32 %v4496, %v4630
        %v4632 = vand.u32 %v2164, 4294901760
        %v4633 = vsub.f32 %v2164, %v4632
        %v4634 = vand.u32 %v4633, 4294901760
        %4635 = vmatmul.f32.gmra.mxu0 %v4634
        %v4636 = vpop.f32.mrf.mxu0
        %v4637 = vadd.f32 %v4501, %v4636
        %v4638 = vand.u32 %v2166, 4294901760
        %v4639 = vsub.f32 %v2166, %v4638
        %v4640 = vand.u32 %v4639, 4294901760
        %4641 = vmatmul.f32.gmra.mxu0 %v4640
        %v4642 = vpop.f32.mrf.mxu0
        %v4643 = vadd.f32 %v4506, %v4642
        %v4644 = vand.u32 %v2168, 4294901760
        %v4645 = vsub.f32 %v2168, %v4644
        %v4646 = vand.u32 %v4645, 4294901760
        %4647 = vmatmul.f32.gmra.mxu0 %v4646
        %v4648 = vpop.f32.mrf.mxu0
        %v4649 = vadd.f32 %v4511, %v4648
        %v4650 = vand.u32 %v2170, 4294901760
        %v4651 = vsub.f32 %v2170, %v4650
        %v4652 = vand.u32 %v4651, 4294901760
        %4653 = vmatmul.f32.gmra.mxu0 %v4652
        %v4654 = vpop.f32.mrf.mxu0
        %v4655 = vadd.f32 %v4516, %v4654
        %v4656 = vand.u32 %v2172, 4294901760
        %v4657 = vsub.f32 %v2172, %v4656
        %v4658 = vand.u32 %v4657, 4294901760
        %4659 = vmatmul.f32.gmra.mxu0 %v4658
        %v4660 = vpop.f32.mrf.mxu0
        %v4661 = vadd.f32 %v4521, %v4660
        %v4662 = vand.u32 %v2174, 4294901760
        %v4663 = vsub.f32 %v2174, %v4662
        %v4664 = vand.u32 %v4663, 4294901760
        %4665 = vmatmul.f32.gmra.mxu0 %v4664
        %v4666 = vpop.f32.mrf.mxu0
        %v4667 = vadd.f32 %v4526, %v4666
        %v4668 = vand.u32 %v2176, 4294901760
        %v4669 = vsub.f32 %v2176, %v4668
        %v4670 = vand.u32 %v4669, 4294901760
        %4671 = vmatmul.f32.gmra.mxu0 %v4670
        %v4672 = vpop.f32.mrf.mxu0
        %v4673 = vadd.f32 %v4531, %v4672
        %v4674 = vand.u32 %v2178, 4294901760
        %v4675 = vsub.f32 %v2178, %v4674
        %v4676 = vand.u32 %v4675, 4294901760
        %4677 = vmatmul.f32.gmra.mxu0 %v4676
        %v4678 = vpop.f32.mrf.mxu0
        %v4679 = vadd.f32 %v4536, %v4678
        %v4680 = vand.u32 %v2180, 4294901760
        %v4681 = vsub.f32 %v2180, %v4680
        %v4682 = vand.u32 %v4681, 4294901760
        %4683 = vmatmul.f32.gmra.mxu0 %v4682
        %v4684 = vpop.f32.mrf.mxu0
        %v4685 = vadd.f32 %v4541, %v4684
        %v4686 = vand.u32 %v2182, 4294901760
        %v4687 = vsub.f32 %v2182, %v4686
        %v4688 = vand.u32 %v4687, 4294901760
        %4689 = vmatmul.f32.gmra.mxu0 %v4688
        %v4690 = vpop.f32.mrf.mxu0
        %v4691 = vadd.f32 %v4546, %v4690
        %v4692 = vand.u32 %v2184, 4294901760
        %v4693 = vsub.f32 %v2184, %v4692
        %v4694 = vand.u32 %v4693, 4294901760
        %4695 = vmatmul.f32.gmra.mxu0 %v4694
        %v4696 = vpop.f32.mrf.mxu0
        %v4697 = vadd.f32 %v4551, %v4696
        %v4698 = vand.u32 %v2186, 4294901760
        %v4699 = vsub.f32 %v2186, %v4698
        %v4700 = vand.u32 %v4699, 4294901760
        %4701 = vmatmul.f32.gmra.mxu0 %v4700
        %v4702 = vpop.f32.mrf.mxu0
        %v4703 = vadd.f32 %v4556, %v4702
        %4704 = vdwg.mxu0
        %v4705 = vand.u32 %v2219, 4294901760
        %v4706 = vsub.f32 %v2219, %v4705
        %v4707 = vand.u32 %v4706, 4294901760
        %4708 = vmatpush.msra.mxu0 %v4707
        %v4709 = vand.u32 %v2217, 4294901760
        %v4710 = vsub.f32 %v2217, %v4709
        %v4711 = vand.u32 %v4710, 4294901760
        %4712 = vmatpush.msra.mxu0 %v4711
        %v4713 = vand.u32 %v2215, 4294901760
        %v4714 = vsub.f32 %v2215, %v4713
        %v4715 = vand.u32 %v4714, 4294901760
        %4716 = vmatpush.msra.mxu0 %v4715
        %v4717 = vand.u32 %v2213, 4294901760
        %v4718 = vsub.f32 %v2213, %v4717
        %v4719 = vand.u32 %v4718, 4294901760
        %4720 = vmatpush.msra.mxu0 %v4719
        %v4721 = vand.u32 %v2211, 4294901760
        %v4722 = vsub.f32 %v2211, %v4721
        %v4723 = vand.u32 %v4722, 4294901760
        %4724 = vmatpush.msra.mxu0 %v4723
        %v4725 = vand.u32 %v2209, 4294901760
        %v4726 = vsub.f32 %v2209, %v4725
        %v4727 = vand.u32 %v4726, 4294901760
        %4728 = vmatpush.msra.mxu0 %v4727
        %v4729 = vand.u32 %v2207, 4294901760
        %v4730 = vsub.f32 %v2207, %v4729
        %v4731 = vand.u32 %v4730, 4294901760
        %4732 = vmatpush.msra.mxu0 %v4731
        %v4733 = vand.u32 %v2205, 4294901760
        %v4734 = vsub.f32 %v2205, %v4733
        %v4735 = vand.u32 %v4734, 4294901760
        %4736 = vmatpush.msra.mxu0 %v4735
        %v4737 = vand.u32 %v2203, 4294901760
        %v4738 = vsub.f32 %v2203, %v4737
        %v4739 = vand.u32 %v4738, 4294901760
        %4740 = vmatpush.msra.mxu0 %v4739
        %v4741 = vand.u32 %v2201, 4294901760
        %v4742 = vsub.f32 %v2201, %v4741
        %v4743 = vand.u32 %v4742, 4294901760
        %4744 = vmatpush.msra.mxu0 %v4743
        %v4745 = vand.u32 %v2199, 4294901760
        %v4746 = vsub.f32 %v2199, %v4745
        %v4747 = vand.u32 %v4746, 4294901760
        %4748 = vmatpush.msra.mxu0 %v4747
        %v4749 = vand.u32 %v2197, 4294901760
        %v4750 = vsub.f32 %v2197, %v4749
        %v4751 = vand.u32 %v4750, 4294901760
        %4752 = vmatpush.msra.mxu0 %v4751
        %v4753 = vand.u32 %v2195, 4294901760
        %v4754 = vsub.f32 %v2195, %v4753
        %v4755 = vand.u32 %v4754, 4294901760
        %4756 = vmatpush.msra.mxu0 %v4755
        %v4757 = vand.u32 %v2193, 4294901760
        %v4758 = vsub.f32 %v2193, %v4757
        %v4759 = vand.u32 %v4758, 4294901760
        %4760 = vmatpush.msra.mxu0 %v4759
        %v4761 = vand.u32 %v2191, 4294901760
        %v4762 = vsub.f32 %v2191, %v4761
        %v4763 = vand.u32 %v4762, 4294901760
        %4764 = vmatpush.msra.mxu0 %v4763
        %v4765 = vand.u32 %v2189, 4294901760
        %v4766 = vsub.f32 %v2189, %v4765
        %v4767 = vand.u32 %v4766, 4294901760
        %4768 = vmatpush.msra.mxu0 %v4767
        %v4769 = vand.u32 %v2150, 4294901760
        %4770 = vmatmul.f32.gmra.mxu0 %v4769
        %v4771 = vpop.f32.mrf.mxu0
        %v4772 = vadd.f32 %v4595, %v4771
        %v4773 = vand.u32 %v2152, 4294901760
        %4774 = vmatmul.f32.gmra.mxu0 %v4773
        %v4775 = vpop.f32.mrf.mxu0
        %v4776 = vadd.f32 %v4601, %v4775
        %v4777 = vand.u32 %v2154, 4294901760
        %4778 = vmatmul.f32.gmra.mxu0 %v4777
        %v4779 = vpop.f32.mrf.mxu0
        %v4780 = vadd.f32 %v4607, %v4779
        %v4781 = vand.u32 %v2156, 4294901760
        %4782 = vmatmul.f32.gmra.mxu0 %v4781
        %v4783 = vpop.f32.mrf.mxu0
        %v4784 = vadd.f32 %v4613, %v4783
        %v4785 = vand.u32 %v2158, 4294901760
        %4786 = vmatmul.f32.gmra.mxu0 %v4785
        %v4787 = vpop.f32.mrf.mxu0
        %v4788 = vadd.f32 %v4619, %v4787
        %v4789 = vand.u32 %v2160, 4294901760
        %4790 = vmatmul.f32.gmra.mxu0 %v4789
        %v4791 = vpop.f32.mrf.mxu0
        %v4792 = vadd.f32 %v4625, %v4791
        %v4793 = vand.u32 %v2162, 4294901760
        %4794 = vmatmul.f32.gmra.mxu0 %v4793
        %v4795 = vpop.f32.mrf.mxu0
        %v4796 = vadd.f32 %v4631, %v4795
        %v4797 = vand.u32 %v2164, 4294901760
        %4798 = vmatmul.f32.gmra.mxu0 %v4797
        %v4799 = vpop.f32.mrf.mxu0
        %v4800 = vadd.f32 %v4637, %v4799
        %v4801 = vand.u32 %v2166, 4294901760
        %4802 = vmatmul.f32.gmra.mxu0 %v4801
        %v4803 = vpop.f32.mrf.mxu0
        %v4804 = vadd.f32 %v4643, %v4803
        %v4805 = vand.u32 %v2168, 4294901760
        %4806 = vmatmul.f32.gmra.mxu0 %v4805
        %v4807 = vpop.f32.mrf.mxu0
        %v4808 = vadd.f32 %v4649, %v4807
        %v4809 = vand.u32 %v2170, 4294901760
        %4810 = vmatmul.f32.gmra.mxu0 %v4809
        %v4811 = vpop.f32.mrf.mxu0
        %v4812 = vadd.f32 %v4655, %v4811
        %v4813 = vand.u32 %v2172, 4294901760
        %4814 = vmatmul.f32.gmra.mxu0 %v4813
        %v4815 = vpop.f32.mrf.mxu0
        %v4816 = vadd.f32 %v4661, %v4815
        %v4817 = vand.u32 %v2174, 4294901760
        %4818 = vmatmul.f32.gmra.mxu0 %v4817
        %v4819 = vpop.f32.mrf.mxu0
        %v4820 = vadd.f32 %v4667, %v4819
        %v4821 = vand.u32 %v2176, 4294901760
        %4822 = vmatmul.f32.gmra.mxu0 %v4821
        %v4823 = vpop.f32.mrf.mxu0
        %v4824 = vadd.f32 %v4673, %v4823
        %v4825 = vand.u32 %v2178, 4294901760
        %4826 = vmatmul.f32.gmra.mxu0 %v4825
        %v4827 = vpop.f32.mrf.mxu0
        %v4828 = vadd.f32 %v4679, %v4827
        %v4829 = vand.u32 %v2180, 4294901760
        %4830 = vmatmul.f32.gmra.mxu0 %v4829
        %v4831 = vpop.f32.mrf.mxu0
        %v4832 = vadd.f32 %v4685, %v4831
        %v4833 = vand.u32 %v2182, 4294901760
        %4834 = vmatmul.f32.gmra.mxu0 %v4833
        %v4835 = vpop.f32.mrf.mxu0
        %v4836 = vadd.f32 %v4691, %v4835
        %v4837 = vand.u32 %v2184, 4294901760
        %4838 = vmatmul.f32.gmra.mxu0 %v4837
        %v4839 = vpop.f32.mrf.mxu0
        %v4840 = vadd.f32 %v4697, %v4839
        %v4841 = vand.u32 %v2186, 4294901760
        %4842 = vmatmul.f32.gmra.mxu0 %v4841
        %v4843 = vpop.f32.mrf.mxu0
        %v4844 = vadd.f32 %v4703, %v4843
        %4845 = vdwg.mxu0
        %v4846 = vand.u32 %v2219, 4294901760
        %4847 = vmatpush.msra.mxu0 %v4846
        %v4848 = vand.u32 %v2217, 4294901760
        %4849 = vmatpush.msra.mxu0 %v4848
        %v4850 = vand.u32 %v2215, 4294901760
        %4851 = vmatpush.msra.mxu0 %v4850
        %v4852 = vand.u32 %v2213, 4294901760
        %4853 = vmatpush.msra.mxu0 %v4852
        %v4854 = vand.u32 %v2211, 4294901760
        %4855 = vmatpush.msra.mxu0 %v4854
        %v4856 = vand.u32 %v2209, 4294901760
        %4857 = vmatpush.msra.mxu0 %v4856
        %v4858 = vand.u32 %v2207, 4294901760
        %4859 = vmatpush.msra.mxu0 %v4858
        %v4860 = vand.u32 %v2205, 4294901760
        %4861 = vmatpush.msra.mxu0 %v4860
        %v4862 = vand.u32 %v2203, 4294901760
        %4863 = vmatpush.msra.mxu0 %v4862
        %v4864 = vand.u32 %v2201, 4294901760
        %4865 = vmatpush.msra.mxu0 %v4864
        %v4866 = vand.u32 %v2199, 4294901760
        %4867 = vmatpush.msra.mxu0 %v4866
        %v4868 = vand.u32 %v2197, 4294901760
        %4869 = vmatpush.msra.mxu0 %v4868
        %v4870 = vand.u32 %v2195, 4294901760
        %4871 = vmatpush.msra.mxu0 %v4870
        %v4872 = vand.u32 %v2193, 4294901760
        %4873 = vmatpush.msra.mxu0 %v4872
        %v4874 = vand.u32 %v2191, 4294901760
        %4875 = vmatpush.msra.mxu0 %v4874
        %v4876 = vand.u32 %v2189, 4294901760
        %4877 = vmatpush.msra.mxu0 %v4876
        %v4878 = vand.u32 %v2150, 4294901760
        %4879 = vmatmul.f32.gmra.mxu0 %v4878
        %v4880 = vpop.f32.mrf.mxu0
        %v4881 = vadd.f32 %v4772, %v4880
        %v4882 = vand.u32 %v2152, 4294901760
        %4883 = vmatmul.f32.gmra.mxu0 %v4882
        %v4884 = vpop.f32.mrf.mxu0
        %v4885 = vadd.f32 %v4776, %v4884
        %v4886 = vand.u32 %v2154, 4294901760
        %4887 = vmatmul.f32.gmra.mxu0 %v4886
        %v4888 = vpop.f32.mrf.mxu0
        %v4889 = vadd.f32 %v4780, %v4888
        %v4890 = vand.u32 %v2156, 4294901760
        %4891 = vmatmul.f32.gmra.mxu0 %v4890
        %v4892 = vpop.f32.mrf.mxu0
        %v4893 = vadd.f32 %v4784, %v4892
        %v4894 = vand.u32 %v2158, 4294901760
        %4895 = vmatmul.f32.gmra.mxu0 %v4894
        %v4896 = vpop.f32.mrf.mxu0
        %v4897 = vadd.f32 %v4788, %v4896
        %v4898 = vand.u32 %v2160, 4294901760
        %4899 = vmatmul.f32.gmra.mxu0 %v4898
        %v4900 = vpop.f32.mrf.mxu0
        %v4901 = vadd.f32 %v4792, %v4900
        %v4902 = vand.u32 %v2162, 4294901760
        %4903 = vmatmul.f32.gmra.mxu0 %v4902
        %v4904 = vpop.f32.mrf.mxu0
        %v4905 = vadd.f32 %v4796, %v4904
        %v4906 = vand.u32 %v2164, 4294901760
        %4907 = vmatmul.f32.gmra.mxu0 %v4906
        %v4908 = vpop.f32.mrf.mxu0
        %v4909 = vadd.f32 %v4800, %v4908
        %v4910 = vand.u32 %v2166, 4294901760
        %4911 = vmatmul.f32.gmra.mxu0 %v4910
        %v4912 = vpop.f32.mrf.mxu0
        %v4913 = vadd.f32 %v4804, %v4912
        %v4914 = vand.u32 %v2168, 4294901760
        %4915 = vmatmul.f32.gmra.mxu0 %v4914
        %v4916 = vpop.f32.mrf.mxu0
        %v4917 = vadd.f32 %v4808, %v4916
        %v4918 = vand.u32 %v2170, 4294901760
        %4919 = vmatmul.f32.gmra.mxu0 %v4918
        %v4920 = vpop.f32.mrf.mxu0
        %v4921 = vadd.f32 %v4812, %v4920
        %v4922 = vand.u32 %v2172, 4294901760
        %4923 = vmatmul.f32.gmra.mxu0 %v4922
        %v4924 = vpop.f32.mrf.mxu0
        %v4925 = vadd.f32 %v4816, %v4924
        %v4926 = vand.u32 %v2174, 4294901760
        %4927 = vmatmul.f32.gmra.mxu0 %v4926
        %v4928 = vpop.f32.mrf.mxu0
        %v4929 = vadd.f32 %v4820, %v4928
        %v4930 = vand.u32 %v2176, 4294901760
        %4931 = vmatmul.f32.gmra.mxu0 %v4930
        %v4932 = vpop.f32.mrf.mxu0
        %v4933 = vadd.f32 %v4824, %v4932
        %v4934 = vand.u32 %v2178, 4294901760
        %4935 = vmatmul.f32.gmra.mxu0 %v4934
        %v4936 = vpop.f32.mrf.mxu0
        %v4937 = vadd.f32 %v4828, %v4936
        %v4938 = vand.u32 %v2180, 4294901760
        %4939 = vmatmul.f32.gmra.mxu0 %v4938
        %v4940 = vpop.f32.mrf.mxu0
        %v4941 = vadd.f32 %v4832, %v4940
        %v4942 = vand.u32 %v2182, 4294901760
        %4943 = vmatmul.f32.gmra.mxu0 %v4942
        %v4944 = vpop.f32.mrf.mxu0
        %v4945 = vadd.f32 %v4836, %v4944
        %v4946 = vand.u32 %v2184, 4294901760
        %4947 = vmatmul.f32.gmra.mxu0 %v4946
        %v4948 = vpop.f32.mrf.mxu0
        %v4949 = vadd.f32 %v4840, %v4948
        %v4950 = vand.u32 %v2186, 4294901760
        %4951 = vmatmul.f32.gmra.mxu0 %v4950
        %v4952 = vpop.f32.mrf.mxu0
        %v4953 = vadd.f32 %v4844, %v4952
        %4954 = vdwg.mxu0
        %v4955 = vand.u32 %v2251, 4294901760
        %4956 = vmatpush.msra.mxu0 %v4955
        %v4957 = vand.u32 %v2249, 4294901760
        %4958 = vmatpush.msra.mxu0 %v4957
        %v4959 = vand.u32 %v2247, 4294901760
        %4960 = vmatpush.msra.mxu0 %v4959
        %v4961 = vand.u32 %v2245, 4294901760
        %4962 = vmatpush.msra.mxu0 %v4961
        %v4963 = vand.u32 %v2243, 4294901760
        %4964 = vmatpush.msra.mxu0 %v4963
        %v4965 = vand.u32 %v2241, 4294901760
        %4966 = vmatpush.msra.mxu0 %v4965
        %v4967 = vand.u32 %v2239, 4294901760
        %4968 = vmatpush.msra.mxu0 %v4967
        %v4969 = vand.u32 %v2237, 4294901760
        %4970 = vmatpush.msra.mxu0 %v4969
        %v4971 = vand.u32 %v2235, 4294901760
        %4972 = vmatpush.msra.mxu0 %v4971
        %v4973 = vand.u32 %v2233, 4294901760
        %4974 = vmatpush.msra.mxu0 %v4973
        %v4975 = vand.u32 %v2231, 4294901760
        %4976 = vmatpush.msra.mxu0 %v4975
        %v4977 = vand.u32 %v2229, 4294901760
        %4978 = vmatpush.msra.mxu0 %v4977
        %v4979 = vand.u32 %v2227, 4294901760
        %4980 = vmatpush.msra.mxu0 %v4979
        %v4981 = vand.u32 %v2225, 4294901760
        %4982 = vmatpush.msra.mxu0 %v4981
        %v4983 = vand.u32 %v2223, 4294901760
        %4984 = vmatpush.msra.mxu0 %v4983
        %v4985 = vand.u32 %v2221, 4294901760
        %4986 = vmatpush.msra.mxu0 %v4985
        %v4987 = vand.u32 %v2151, 4294901760
        %v4988 = vsub.f32 %v2151, %v4987
        %v4989 = vand.u32 %v4988, 4294901760
        %v4990 = vsub.f32 %v4988, %v4989
        %v4991 = vand.u32 %v4990, 4294901760
        %4992 = vmatmul.f32.gmra.mxu0 %v4991
        %v4993 = vpop.f32.mrf.mxu0
        %v4994 = vadd.f32 %v4881, %v4993
        %v4995 = vand.u32 %v2153, 4294901760
        %v4996 = vsub.f32 %v2153, %v4995
        %v4997 = vand.u32 %v4996, 4294901760
        %v4998 = vsub.f32 %v4996, %v4997
        %v4999 = vand.u32 %v4998, 4294901760
        %5000 = vmatmul.f32.gmra.mxu0 %v4999
        %v5001 = vpop.f32.mrf.mxu0
        %v5002 = vadd.f32 %v4885, %v5001
        %v5003 = vand.u32 %v2155, 4294901760
        %v5004 = vsub.f32 %v2155, %v5003
        %v5005 = vand.u32 %v5004, 4294901760
        %v5006 = vsub.f32 %v5004, %v5005
        %v5007 = vand.u32 %v5006, 4294901760
        %5008 = vmatmul.f32.gmra.mxu0 %v5007
        %v5009 = vpop.f32.mrf.mxu0
        %v5010 = vadd.f32 %v4889, %v5009
        %v5011 = vand.u32 %v2157, 4294901760
        %v5012 = vsub.f32 %v2157, %v5011
        %v5013 = vand.u32 %v5012, 4294901760
        %v5014 = vsub.f32 %v5012, %v5013
        %v5015 = vand.u32 %v5014, 4294901760
        %5016 = vmatmul.f32.gmra.mxu0 %v5015
        %v5017 = vpop.f32.mrf.mxu0
        %v5018 = vadd.f32 %v4893, %v5017
        %v5019 = vand.u32 %v2159, 4294901760
        %v5020 = vsub.f32 %v2159, %v5019
        %v5021 = vand.u32 %v5020, 4294901760
        %v5022 = vsub.f32 %v5020, %v5021
        %v5023 = vand.u32 %v5022, 4294901760
        %5024 = vmatmul.f32.gmra.mxu0 %v5023
        %v5025 = vpop.f32.mrf.mxu0
        %v5026 = vadd.f32 %v4897, %v5025
        %v5027 = vand.u32 %v2161, 4294901760
        %v5028 = vsub.f32 %v2161, %v5027
        %v5029 = vand.u32 %v5028, 4294901760
        %v5030 = vsub.f32 %v5028, %v5029
        %v5031 = vand.u32 %v5030, 4294901760
        %5032 = vmatmul.f32.gmra.mxu0 %v5031
        %v5033 = vpop.f32.mrf.mxu0
        %v5034 = vadd.f32 %v4901, %v5033
        %v5035 = vand.u32 %v2163, 4294901760
        %v5036 = vsub.f32 %v2163, %v5035
        %v5037 = vand.u32 %v5036, 4294901760
        %v5038 = vsub.f32 %v5036, %v5037
        %v5039 = vand.u32 %v5038, 4294901760
        %5040 = vmatmul.f32.gmra.mxu0 %v5039
        %v5041 = vpop.f32.mrf.mxu0
        %v5042 = vadd.f32 %v4905, %v5041
        %v5043 = vand.u32 %v2165, 4294901760
        %v5044 = vsub.f32 %v2165, %v5043
        %v5045 = vand.u32 %v5044, 4294901760
        %v5046 = vsub.f32 %v5044, %v5045
        %v5047 = vand.u32 %v5046, 4294901760
        %5048 = vmatmul.f32.gmra.mxu0 %v5047
        %v5049 = vpop.f32.mrf.mxu0
        %v5050 = vadd.f32 %v4909, %v5049
        %v5051 = vand.u32 %v2167, 4294901760
        %v5052 = vsub.f32 %v2167, %v5051
        %v5053 = vand.u32 %v5052, 4294901760
        %v5054 = vsub.f32 %v5052, %v5053
        %v5055 = vand.u32 %v5054, 4294901760
        %5056 = vmatmul.f32.gmra.mxu0 %v5055
        %v5057 = vpop.f32.mrf.mxu0
        %v5058 = vadd.f32 %v4913, %v5057
        %v5059 = vand.u32 %v2169, 4294901760
        %v5060 = vsub.f32 %v2169, %v5059
        %v5061 = vand.u32 %v5060, 4294901760
        %v5062 = vsub.f32 %v5060, %v5061
        %v5063 = vand.u32 %v5062, 4294901760
        %5064 = vmatmul.f32.gmra.mxu0 %v5063
        %v5065 = vpop.f32.mrf.mxu0
        %v5066 = vadd.f32 %v4917, %v5065
        %v5067 = vand.u32 %v2171, 4294901760
        %v5068 = vsub.f32 %v2171, %v5067
        %v5069 = vand.u32 %v5068, 4294901760
        %v5070 = vsub.f32 %v5068, %v5069
        %v5071 = vand.u32 %v5070, 4294901760
        %5072 = vmatmul.f32.gmra.mxu0 %v5071
        %v5073 = vpop.f32.mrf.mxu0
        %v5074 = vadd.f32 %v4921, %v5073
        %v5075 = vand.u32 %v2173, 4294901760
        %v5076 = vsub.f32 %v2173, %v5075
        %v5077 = vand.u32 %v5076, 4294901760
        %v5078 = vsub.f32 %v5076, %v5077
        %v5079 = vand.u32 %v5078, 4294901760
        %5080 = vmatmul.f32.gmra.mxu0 %v5079
        %v5081 = vpop.f32.mrf.mxu0
        %v5082 = vadd.f32 %v4925, %v5081
        %v5083 = vand.u32 %v2175, 4294901760
        %v5084 = vsub.f32 %v2175, %v5083
        %v5085 = vand.u32 %v5084, 4294901760
        %v5086 = vsub.f32 %v5084, %v5085
        %v5087 = vand.u32 %v5086, 4294901760
        %5088 = vmatmul.f32.gmra.mxu0 %v5087
        %v5089 = vpop.f32.mrf.mxu0
        %v5090 = vadd.f32 %v4929, %v5089
        %v5091 = vand.u32 %v2177, 4294901760
        %v5092 = vsub.f32 %v2177, %v5091
        %v5093 = vand.u32 %v5092, 4294901760
        %v5094 = vsub.f32 %v5092, %v5093
        %v5095 = vand.u32 %v5094, 4294901760
        %5096 = vmatmul.f32.gmra.mxu0 %v5095
        %v5097 = vpop.f32.mrf.mxu0
        %v5098 = vadd.f32 %v4933, %v5097
        %v5099 = vand.u32 %v2179, 4294901760
        %v5100 = vsub.f32 %v2179, %v5099
        %v5101 = vand.u32 %v5100, 4294901760
        %v5102 = vsub.f32 %v5100, %v5101
        %v5103 = vand.u32 %v5102, 4294901760
        %5104 = vmatmul.f32.gmra.mxu0 %v5103
        %v5105 = vpop.f32.mrf.mxu0
        %v5106 = vadd.f32 %v4937, %v5105
        %v5107 = vand.u32 %v2181, 4294901760
        %v5108 = vsub.f32 %v2181, %v5107
        %v5109 = vand.u32 %v5108, 4294901760
        %v5110 = vsub.f32 %v5108, %v5109
        %v5111 = vand.u32 %v5110, 4294901760
        %5112 = vmatmul.f32.gmra.mxu0 %v5111
        %v5113 = vpop.f32.mrf.mxu0
        %v5114 = vadd.f32 %v4941, %v5113
        %v5115 = vand.u32 %v2183, 4294901760
        %v5116 = vsub.f32 %v2183, %v5115
        %v5117 = vand.u32 %v5116, 4294901760
        %v5118 = vsub.f32 %v5116, %v5117
        %v5119 = vand.u32 %v5118, 4294901760
        %5120 = vmatmul.f32.gmra.mxu0 %v5119
        %v5121 = vpop.f32.mrf.mxu0
        %v5122 = vadd.f32 %v4945, %v5121
        %v5123 = vand.u32 %v2185, 4294901760
        %v5124 = vsub.f32 %v2185, %v5123
        %v5125 = vand.u32 %v5124, 4294901760
        %v5126 = vsub.f32 %v5124, %v5125
        %v5127 = vand.u32 %v5126, 4294901760
        %5128 = vmatmul.f32.gmra.mxu0 %v5127
        %v5129 = vpop.f32.mrf.mxu0
        %v5130 = vadd.f32 %v4949, %v5129
        %v5131 = vand.u32 %v2187, 4294901760
        %v5132 = vsub.f32 %v2187, %v5131
        %v5133 = vand.u32 %v5132, 4294901760
        %v5134 = vsub.f32 %v5132, %v5133
        %v5135 = vand.u32 %v5134, 4294901760
        %5136 = vmatmul.f32.gmra.mxu0 %v5135
        %v5137 = vpop.f32.mrf.mxu0
        %v5138 = vadd.f32 %v4953, %v5137
        %5139 = vdwg.mxu0
        %v5140 = vand.u32 %v2251, 4294901760
        %v5141 = vsub.f32 %v2251, %v5140
        %v5142 = vand.u32 %v5141, 4294901760
        %v5143 = vsub.f32 %v5141, %v5142
        %v5144 = vand.u32 %v5143, 4294901760
        %5145 = vmatpush.msra.mxu0 %v5144
        %v5146 = vand.u32 %v2249, 4294901760
        %v5147 = vsub.f32 %v2249, %v5146
        %v5148 = vand.u32 %v5147, 4294901760
        %v5149 = vsub.f32 %v5147, %v5148
        %v5150 = vand.u32 %v5149, 4294901760
        %5151 = vmatpush.msra.mxu0 %v5150
        %v5152 = vand.u32 %v2247, 4294901760
        %v5153 = vsub.f32 %v2247, %v5152
        %v5154 = vand.u32 %v5153, 4294901760
        %v5155 = vsub.f32 %v5153, %v5154
        %v5156 = vand.u32 %v5155, 4294901760
        %5157 = vmatpush.msra.mxu0 %v5156
        %v5158 = vand.u32 %v2245, 4294901760
        %v5159 = vsub.f32 %v2245, %v5158
        %v5160 = vand.u32 %v5159, 4294901760
        %v5161 = vsub.f32 %v5159, %v5160
        %v5162 = vand.u32 %v5161, 4294901760
        %5163 = vmatpush.msra.mxu0 %v5162
        %v5164 = vand.u32 %v2243, 4294901760
        %v5165 = vsub.f32 %v2243, %v5164
        %v5166 = vand.u32 %v5165, 4294901760
        %v5167 = vsub.f32 %v5165, %v5166
        %v5168 = vand.u32 %v5167, 4294901760
        %5169 = vmatpush.msra.mxu0 %v5168
        %v5170 = vand.u32 %v2241, 4294901760
        %v5171 = vsub.f32 %v2241, %v5170
        %v5172 = vand.u32 %v5171, 4294901760
        %v5173 = vsub.f32 %v5171, %v5172
        %v5174 = vand.u32 %v5173, 4294901760
        %5175 = vmatpush.msra.mxu0 %v5174
        %v5176 = vand.u32 %v2239, 4294901760
        %v5177 = vsub.f32 %v2239, %v5176
        %v5178 = vand.u32 %v5177, 4294901760
        %v5179 = vsub.f32 %v5177, %v5178
        %v5180 = vand.u32 %v5179, 4294901760
        %5181 = vmatpush.msra.mxu0 %v5180
        %v5182 = vand.u32 %v2237, 4294901760
        %v5183 = vsub.f32 %v2237, %v5182
        %v5184 = vand.u32 %v5183, 4294901760
        %v5185 = vsub.f32 %v5183, %v5184
        %v5186 = vand.u32 %v5185, 4294901760
        %5187 = vmatpush.msra.mxu0 %v5186
        %v5188 = vand.u32 %v2235, 4294901760
        %v5189 = vsub.f32 %v2235, %v5188
        %v5190 = vand.u32 %v5189, 4294901760
        %v5191 = vsub.f32 %v5189, %v5190
        %v5192 = vand.u32 %v5191, 4294901760
        %5193 = vmatpush.msra.mxu0 %v5192
        %v5194 = vand.u32 %v2233, 4294901760
        %v5195 = vsub.f32 %v2233, %v5194
        %v5196 = vand.u32 %v5195, 4294901760
        %v5197 = vsub.f32 %v5195, %v5196
        %v5198 = vand.u32 %v5197, 4294901760
        %5199 = vmatpush.msra.mxu0 %v5198
        %v5200 = vand.u32 %v2231, 4294901760
        %v5201 = vsub.f32 %v2231, %v5200
        %v5202 = vand.u32 %v5201, 4294901760
        %v5203 = vsub.f32 %v5201, %v5202
        %v5204 = vand.u32 %v5203, 4294901760
        %5205 = vmatpush.msra.mxu0 %v5204
        %v5206 = vand.u32 %v2229, 4294901760
        %v5207 = vsub.f32 %v2229, %v5206
        %v5208 = vand.u32 %v5207, 4294901760
        %v5209 = vsub.f32 %v5207, %v5208
        %v5210 = vand.u32 %v5209, 4294901760
        %5211 = vmatpush.msra.mxu0 %v5210
        %v5212 = vand.u32 %v2227, 4294901760
        %v5213 = vsub.f32 %v2227, %v5212
        %v5214 = vand.u32 %v5213, 4294901760
        %v5215 = vsub.f32 %v5213, %v5214
        %v5216 = vand.u32 %v5215, 4294901760
        %5217 = vmatpush.msra.mxu0 %v5216
        %v5218 = vand.u32 %v2225, 4294901760
        %v5219 = vsub.f32 %v2225, %v5218
        %v5220 = vand.u32 %v5219, 4294901760
        %v5221 = vsub.f32 %v5219, %v5220
        %v5222 = vand.u32 %v5221, 4294901760
        %5223 = vmatpush.msra.mxu0 %v5222
        %v5224 = vand.u32 %v2223, 4294901760
        %v5225 = vsub.f32 %v2223, %v5224
        %v5226 = vand.u32 %v5225, 4294901760
        %v5227 = vsub.f32 %v5225, %v5226
        %v5228 = vand.u32 %v5227, 4294901760
        %5229 = vmatpush.msra.mxu0 %v5228
        %v5230 = vand.u32 %v2221, 4294901760
        %v5231 = vsub.f32 %v2221, %v5230
        %v5232 = vand.u32 %v5231, 4294901760
        %v5233 = vsub.f32 %v5231, %v5232
        %v5234 = vand.u32 %v5233, 4294901760
        %5235 = vmatpush.msra.mxu0 %v5234
        %v5236 = vand.u32 %v2151, 4294901760
        %5237 = vmatmul.f32.gmra.mxu0 %v5236
        %v5238 = vpop.f32.mrf.mxu0
        %v5239 = vadd.f32 %v4994, %v5238
        %v5240 = vand.u32 %v2153, 4294901760
        %5241 = vmatmul.f32.gmra.mxu0 %v5240
        %v5242 = vpop.f32.mrf.mxu0
        %v5243 = vadd.f32 %v5002, %v5242
        %v5244 = vand.u32 %v2155, 4294901760
        %5245 = vmatmul.f32.gmra.mxu0 %v5244
        %v5246 = vpop.f32.mrf.mxu0
        %v5247 = vadd.f32 %v5010, %v5246
        %v5248 = vand.u32 %v2157, 4294901760
        %5249 = vmatmul.f32.gmra.mxu0 %v5248
        %v5250 = vpop.f32.mrf.mxu0
        %v5251 = vadd.f32 %v5018, %v5250
        %v5252 = vand.u32 %v2159, 4294901760
        %5253 = vmatmul.f32.gmra.mxu0 %v5252
        %v5254 = vpop.f32.mrf.mxu0
        %v5255 = vadd.f32 %v5026, %v5254
        %v5256 = vand.u32 %v2161, 4294901760
        %5257 = vmatmul.f32.gmra.mxu0 %v5256
        %v5258 = vpop.f32.mrf.mxu0
        %v5259 = vadd.f32 %v5034, %v5258
        %v5260 = vand.u32 %v2163, 4294901760
        %5261 = vmatmul.f32.gmra.mxu0 %v5260
        %v5262 = vpop.f32.mrf.mxu0
        %v5263 = vadd.f32 %v5042, %v5262
        %v5264 = vand.u32 %v2165, 4294901760
        %5265 = vmatmul.f32.gmra.mxu0 %v5264
        %v5266 = vpop.f32.mrf.mxu0
        %v5267 = vadd.f32 %v5050, %v5266
        %v5268 = vand.u32 %v2167, 4294901760
        %5269 = vmatmul.f32.gmra.mxu0 %v5268
        %v5270 = vpop.f32.mrf.mxu0
        %v5271 = vadd.f32 %v5058, %v5270
        %v5272 = vand.u32 %v2169, 4294901760
        %5273 = vmatmul.f32.gmra.mxu0 %v5272
        %v5274 = vpop.f32.mrf.mxu0
        %v5275 = vadd.f32 %v5066, %v5274
        %v5276 = vand.u32 %v2171, 4294901760
        %5277 = vmatmul.f32.gmra.mxu0 %v5276
        %v5278 = vpop.f32.mrf.mxu0
        %v5279 = vadd.f32 %v5074, %v5278
        %v5280 = vand.u32 %v2173, 4294901760
        %5281 = vmatmul.f32.gmra.mxu0 %v5280
        %v5282 = vpop.f32.mrf.mxu0
        %v5283 = vadd.f32 %v5082, %v5282
        %v5284 = vand.u32 %v2175, 4294901760
        %5285 = vmatmul.f32.gmra.mxu0 %v5284
        %v5286 = vpop.f32.mrf.mxu0
        %v5287 = vadd.f32 %v5090, %v5286
        %v5288 = vand.u32 %v2177, 4294901760
        %5289 = vmatmul.f32.gmra.mxu0 %v5288
        %v5290 = vpop.f32.mrf.mxu0
        %v5291 = vadd.f32 %v5098, %v5290
        %v5292 = vand.u32 %v2179, 4294901760
        %5293 = vmatmul.f32.gmra.mxu0 %v5292
        %v5294 = vpop.f32.mrf.mxu0
        %v5295 = vadd.f32 %v5106, %v5294
        %v5296 = vand.u32 %v2181, 4294901760
        %5297 = vmatmul.f32.gmra.mxu0 %v5296
        %v5298 = vpop.f32.mrf.mxu0
        %v5299 = vadd.f32 %v5114, %v5298
        %v5300 = vand.u32 %v2183, 4294901760
        %5301 = vmatmul.f32.gmra.mxu0 %v5300
        %v5302 = vpop.f32.mrf.mxu0
        %v5303 = vadd.f32 %v5122, %v5302
        %v5304 = vand.u32 %v2185, 4294901760
        %5305 = vmatmul.f32.gmra.mxu0 %v5304
        %v5306 = vpop.f32.mrf.mxu0
        %v5307 = vadd.f32 %v5130, %v5306
        %v5308 = vand.u32 %v2187, 4294901760
        %5309 = vmatmul.f32.gmra.mxu0 %v5308
        %v5310 = vpop.f32.mrf.mxu0
        %v5311 = vadd.f32 %v5138, %v5310
        %5312 = vdwg.mxu0
        %v5313 = vand.u32 %v2251, 4294901760
        %v5314 = vsub.f32 %v2251, %v5313
        %5315 = vmatpush.msra.mxu0 %v5314
        %v5316 = vand.u32 %v2249, 4294901760
        %v5317 = vsub.f32 %v2249, %v5316
        %5318 = vmatpush.msra.mxu0 %v5317
        %v5319 = vand.u32 %v2247, 4294901760
        %v5320 = vsub.f32 %v2247, %v5319
        %5321 = vmatpush.msra.mxu0 %v5320
        %v5322 = vand.u32 %v2245, 4294901760
        %v5323 = vsub.f32 %v2245, %v5322
        %5324 = vmatpush.msra.mxu0 %v5323
        %v5325 = vand.u32 %v2243, 4294901760
        %v5326 = vsub.f32 %v2243, %v5325
        %5327 = vmatpush.msra.mxu0 %v5326
        %v5328 = vand.u32 %v2241, 4294901760
        %v5329 = vsub.f32 %v2241, %v5328
        %5330 = vmatpush.msra.mxu0 %v5329
        %v5331 = vand.u32 %v2239, 4294901760
        %v5332 = vsub.f32 %v2239, %v5331
        %5333 = vmatpush.msra.mxu0 %v5332
        %v5334 = vand.u32 %v2237, 4294901760
        %v5335 = vsub.f32 %v2237, %v5334
        %5336 = vmatpush.msra.mxu0 %v5335
        %v5337 = vand.u32 %v2235, 4294901760
        %v5338 = vsub.f32 %v2235, %v5337
        %5339 = vmatpush.msra.mxu0 %v5338
        %v5340 = vand.u32 %v2233, 4294901760
        %v5341 = vsub.f32 %v2233, %v5340
        %5342 = vmatpush.msra.mxu0 %v5341
        %v5343 = vand.u32 %v2231, 4294901760
        %v5344 = vsub.f32 %v2231, %v5343
        %5345 = vmatpush.msra.mxu0 %v5344
        %v5346 = vand.u32 %v2229, 4294901760
        %v5347 = vsub.f32 %v2229, %v5346
        %5348 = vmatpush.msra.mxu0 %v5347
        %v5349 = vand.u32 %v2227, 4294901760
        %v5350 = vsub.f32 %v2227, %v5349
        %5351 = vmatpush.msra.mxu0 %v5350
        %v5352 = vand.u32 %v2225, 4294901760
        %v5353 = vsub.f32 %v2225, %v5352
        %5354 = vmatpush.msra.mxu0 %v5353
        %v5355 = vand.u32 %v2223, 4294901760
        %v5356 = vsub.f32 %v2223, %v5355
        %5357 = vmatpush.msra.mxu0 %v5356
        %v5358 = vand.u32 %v2221, 4294901760
        %v5359 = vsub.f32 %v2221, %v5358
        %5360 = vmatpush.msra.mxu0 %v5359
        %v5361 = vand.u32 %v2151, 4294901760
        %v5362 = vsub.f32 %v2151, %v5361
        %5363 = vmatmul.f32.gmra.mxu0 %v5362
        %v5364 = vpop.f32.mrf.mxu0
        %v5365 = vadd.f32 %v5239, %v5364
        %v5366 = vand.u32 %v2153, 4294901760
        %v5367 = vsub.f32 %v2153, %v5366
        %5368 = vmatmul.f32.gmra.mxu0 %v5367
        %v5369 = vpop.f32.mrf.mxu0
        %v5370 = vadd.f32 %v5243, %v5369
        %v5371 = vand.u32 %v2155, 4294901760
        %v5372 = vsub.f32 %v2155, %v5371
        %5373 = vmatmul.f32.gmra.mxu0 %v5372
        %v5374 = vpop.f32.mrf.mxu0
        %v5375 = vadd.f32 %v5247, %v5374
        %v5376 = vand.u32 %v2157, 4294901760
        %v5377 = vsub.f32 %v2157, %v5376
        %5378 = vmatmul.f32.gmra.mxu0 %v5377
        %v5379 = vpop.f32.mrf.mxu0
        %v5380 = vadd.f32 %v5251, %v5379
        %v5381 = vand.u32 %v2159, 4294901760
        %v5382 = vsub.f32 %v2159, %v5381
        %5383 = vmatmul.f32.gmra.mxu0 %v5382
        %v5384 = vpop.f32.mrf.mxu0
        %v5385 = vadd.f32 %v5255, %v5384
        %v5386 = vand.u32 %v2161, 4294901760
        %v5387 = vsub.f32 %v2161, %v5386
        %5388 = vmatmul.f32.gmra.mxu0 %v5387
        %v5389 = vpop.f32.mrf.mxu0
        %v5390 = vadd.f32 %v5259, %v5389
        %v5391 = vand.u32 %v2163, 4294901760
        %v5392 = vsub.f32 %v2163, %v5391
        %5393 = vmatmul.f32.gmra.mxu0 %v5392
        %v5394 = vpop.f32.mrf.mxu0
        %v5395 = vadd.f32 %v5263, %v5394
        %v5396 = vand.u32 %v2165, 4294901760
        %v5397 = vsub.f32 %v2165, %v5396
        %5398 = vmatmul.f32.gmra.mxu0 %v5397
        %v5399 = vpop.f32.mrf.mxu0
        %v5400 = vadd.f32 %v5267, %v5399
        %v5401 = vand.u32 %v2167, 4294901760
        %v5402 = vsub.f32 %v2167, %v5401
        %5403 = vmatmul.f32.gmra.mxu0 %v5402
        %v5404 = vpop.f32.mrf.mxu0
        %v5405 = vadd.f32 %v5271, %v5404
        %v5406 = vand.u32 %v2169, 4294901760
        %v5407 = vsub.f32 %v2169, %v5406
        %5408 = vmatmul.f32.gmra.mxu0 %v5407
        %v5409 = vpop.f32.mrf.mxu0
        %v5410 = vadd.f32 %v5275, %v5409
        %v5411 = vand.u32 %v2171, 4294901760
        %v5412 = vsub.f32 %v2171, %v5411
        %5413 = vmatmul.f32.gmra.mxu0 %v5412
        %v5414 = vpop.f32.mrf.mxu0
        %v5415 = vadd.f32 %v5279, %v5414
        %v5416 = vand.u32 %v2173, 4294901760
        %v5417 = vsub.f32 %v2173, %v5416
        %5418 = vmatmul.f32.gmra.mxu0 %v5417
        %v5419 = vpop.f32.mrf.mxu0
        %v5420 = vadd.f32 %v5283, %v5419
        %v5421 = vand.u32 %v2175, 4294901760
        %v5422 = vsub.f32 %v2175, %v5421
        %5423 = vmatmul.f32.gmra.mxu0 %v5422
        %v5424 = vpop.f32.mrf.mxu0
        %v5425 = vadd.f32 %v5287, %v5424
        %v5426 = vand.u32 %v2177, 4294901760
        %v5427 = vsub.f32 %v2177, %v5426
        %5428 = vmatmul.f32.gmra.mxu0 %v5427
        %v5429 = vpop.f32.mrf.mxu0
        %v5430 = vadd.f32 %v5291, %v5429
        %v5431 = vand.u32 %v2179, 4294901760
        %v5432 = vsub.f32 %v2179, %v5431
        %5433 = vmatmul.f32.gmra.mxu0 %v5432
        %v5434 = vpop.f32.mrf.mxu0
        %v5435 = vadd.f32 %v5295, %v5434
        %v5436 = vand.u32 %v2181, 4294901760
        %v5437 = vsub.f32 %v2181, %v5436
        %5438 = vmatmul.f32.gmra.mxu0 %v5437
        %v5439 = vpop.f32.mrf.mxu0
        %v5440 = vadd.f32 %v5299, %v5439
        %v5441 = vand.u32 %v2183, 4294901760
        %v5442 = vsub.f32 %v2183, %v5441
        %5443 = vmatmul.f32.gmra.mxu0 %v5442
        %v5444 = vpop.f32.mrf.mxu0
        %v5445 = vadd.f32 %v5303, %v5444
        %v5446 = vand.u32 %v2185, 4294901760
        %v5447 = vsub.f32 %v2185, %v5446
        %5448 = vmatmul.f32.gmra.mxu0 %v5447
        %v5449 = vpop.f32.mrf.mxu0
        %v5450 = vadd.f32 %v5307, %v5449
        %v5451 = vand.u32 %v2187, 4294901760
        %v5452 = vsub.f32 %v2187, %v5451
        %5453 = vmatmul.f32.gmra.mxu0 %v5452
        %v5454 = vpop.f32.mrf.mxu0
        %v5455 = vadd.f32 %v5311, %v5454
        %5456 = vdwg.mxu0
        %v5457 = vand.u32 %v2251, 4294901760
        %5458 = vmatpush.msra.mxu0 %v5457
        %v5459 = vand.u32 %v2249, 4294901760
        %5460 = vmatpush.msra.mxu0 %v5459
        %v5461 = vand.u32 %v2247, 4294901760
        %5462 = vmatpush.msra.mxu0 %v5461
        %v5463 = vand.u32 %v2245, 4294901760
        %5464 = vmatpush.msra.mxu0 %v5463
        %v5465 = vand.u32 %v2243, 4294901760
        %5466 = vmatpush.msra.mxu0 %v5465
        %v5467 = vand.u32 %v2241, 4294901760
        %5468 = vmatpush.msra.mxu0 %v5467
        %v5469 = vand.u32 %v2239, 4294901760
        %5470 = vmatpush.msra.mxu0 %v5469
        %v5471 = vand.u32 %v2237, 4294901760
        %5472 = vmatpush.msra.mxu0 %v5471
        %v5473 = vand.u32 %v2235, 4294901760
        %5474 = vmatpush.msra.mxu0 %v5473
        %v5475 = vand.u32 %v2233, 4294901760
        %5476 = vmatpush.msra.mxu0 %v5475
        %v5477 = vand.u32 %v2231, 4294901760
        %5478 = vmatpush.msra.mxu0 %v5477
        %v5479 = vand.u32 %v2229, 4294901760
        %5480 = vmatpush.msra.mxu0 %v5479
        %v5481 = vand.u32 %v2227, 4294901760
        %5482 = vmatpush.msra.mxu0 %v5481
        %v5483 = vand.u32 %v2225, 4294901760
        %5484 = vmatpush.msra.mxu0 %v5483
        %v5485 = vand.u32 %v2223, 4294901760
        %5486 = vmatpush.msra.mxu0 %v5485
        %v5487 = vand.u32 %v2221, 4294901760
        %5488 = vmatpush.msra.mxu0 %v5487
        %v5489 = vand.u32 %v2151, 4294901760
        %v5490 = vsub.f32 %v2151, %v5489
        %v5491 = vand.u32 %v5490, 4294901760
        %5492 = vmatmul.f32.gmra.mxu0 %v5491
        %v5493 = vpop.f32.mrf.mxu0
        %v5494 = vadd.f32 %v5365, %v5493
        %v5495 = vand.u32 %v2153, 4294901760
        %v5496 = vsub.f32 %v2153, %v5495
        %v5497 = vand.u32 %v5496, 4294901760
        %5498 = vmatmul.f32.gmra.mxu0 %v5497
        %v5499 = vpop.f32.mrf.mxu0
        %v5500 = vadd.f32 %v5370, %v5499
        %v5501 = vand.u32 %v2155, 4294901760
        %v5502 = vsub.f32 %v2155, %v5501
        %v5503 = vand.u32 %v5502, 4294901760
        %5504 = vmatmul.f32.gmra.mxu0 %v5503
        %v5505 = vpop.f32.mrf.mxu0
        %v5506 = vadd.f32 %v5375, %v5505
        %v5507 = vand.u32 %v2157, 4294901760
        %v5508 = vsub.f32 %v2157, %v5507
        %v5509 = vand.u32 %v5508, 4294901760
        %5510 = vmatmul.f32.gmra.mxu0 %v5509
        %v5511 = vpop.f32.mrf.mxu0
        %v5512 = vadd.f32 %v5380, %v5511
        %v5513 = vand.u32 %v2159, 4294901760
        %v5514 = vsub.f32 %v2159, %v5513
        %v5515 = vand.u32 %v5514, 4294901760
        %5516 = vmatmul.f32.gmra.mxu0 %v5515
        %v5517 = vpop.f32.mrf.mxu0
        %v5518 = vadd.f32 %v5385, %v5517
        %v5519 = vand.u32 %v2161, 4294901760
        %v5520 = vsub.f32 %v2161, %v5519
        %v5521 = vand.u32 %v5520, 4294901760
        %5522 = vmatmul.f32.gmra.mxu0 %v5521
        %v5523 = vpop.f32.mrf.mxu0
        %v5524 = vadd.f32 %v5390, %v5523
        %v5525 = vand.u32 %v2163, 4294901760
        %v5526 = vsub.f32 %v2163, %v5525
        %v5527 = vand.u32 %v5526, 4294901760
        %5528 = vmatmul.f32.gmra.mxu0 %v5527
        %v5529 = vpop.f32.mrf.mxu0
        %v5530 = vadd.f32 %v5395, %v5529
        %v5531 = vand.u32 %v2165, 4294901760
        %v5532 = vsub.f32 %v2165, %v5531
        %v5533 = vand.u32 %v5532, 4294901760
        %5534 = vmatmul.f32.gmra.mxu0 %v5533
        %v5535 = vpop.f32.mrf.mxu0
        %v5536 = vadd.f32 %v5400, %v5535
        %v5537 = vand.u32 %v2167, 4294901760
        %v5538 = vsub.f32 %v2167, %v5537
        %v5539 = vand.u32 %v5538, 4294901760
        %5540 = vmatmul.f32.gmra.mxu0 %v5539
        %v5541 = vpop.f32.mrf.mxu0
        %v5542 = vadd.f32 %v5405, %v5541
        %v5543 = vand.u32 %v2169, 4294901760
        %v5544 = vsub.f32 %v2169, %v5543
        %v5545 = vand.u32 %v5544, 4294901760
        %5546 = vmatmul.f32.gmra.mxu0 %v5545
        %v5547 = vpop.f32.mrf.mxu0
        %v5548 = vadd.f32 %v5410, %v5547
        %v5549 = vand.u32 %v2171, 4294901760
        %v5550 = vsub.f32 %v2171, %v5549
        %v5551 = vand.u32 %v5550, 4294901760
        %5552 = vmatmul.f32.gmra.mxu0 %v5551
        %v5553 = vpop.f32.mrf.mxu0
        %v5554 = vadd.f32 %v5415, %v5553
        %v5555 = vand.u32 %v2173, 4294901760
        %v5556 = vsub.f32 %v2173, %v5555
        %v5557 = vand.u32 %v5556, 4294901760
        %5558 = vmatmul.f32.gmra.mxu0 %v5557
        %v5559 = vpop.f32.mrf.mxu0
        %v5560 = vadd.f32 %v5420, %v5559
        %v5561 = vand.u32 %v2175, 4294901760
        %v5562 = vsub.f32 %v2175, %v5561
        %v5563 = vand.u32 %v5562, 4294901760
        %5564 = vmatmul.f32.gmra.mxu0 %v5563
        %v5565 = vpop.f32.mrf.mxu0
        %v5566 = vadd.f32 %v5425, %v5565
        %v5567 = vand.u32 %v2177, 4294901760
        %v5568 = vsub.f32 %v2177, %v5567
        %v5569 = vand.u32 %v5568, 4294901760
        %5570 = vmatmul.f32.gmra.mxu0 %v5569
        %v5571 = vpop.f32.mrf.mxu0
        %v5572 = vadd.f32 %v5430, %v5571
        %v5573 = vand.u32 %v2179, 4294901760
        %v5574 = vsub.f32 %v2179, %v5573
        %v5575 = vand.u32 %v5574, 4294901760
        %5576 = vmatmul.f32.gmra.mxu0 %v5575
        %v5577 = vpop.f32.mrf.mxu0
        %v5578 = vadd.f32 %v5435, %v5577
        %v5579 = vand.u32 %v2181, 4294901760
        %v5580 = vsub.f32 %v2181, %v5579
        %v5581 = vand.u32 %v5580, 4294901760
        %5582 = vmatmul.f32.gmra.mxu0 %v5581
        %v5583 = vpop.f32.mrf.mxu0
        %v5584 = vadd.f32 %v5440, %v5583
        %v5585 = vand.u32 %v2183, 4294901760
        %v5586 = vsub.f32 %v2183, %v5585
        %v5587 = vand.u32 %v5586, 4294901760
        %5588 = vmatmul.f32.gmra.mxu0 %v5587
        %v5589 = vpop.f32.mrf.mxu0
        %v5590 = vadd.f32 %v5445, %v5589
        %v5591 = vand.u32 %v2185, 4294901760
        %v5592 = vsub.f32 %v2185, %v5591
        %v5593 = vand.u32 %v5592, 4294901760
        %5594 = vmatmul.f32.gmra.mxu0 %v5593
        %v5595 = vpop.f32.mrf.mxu0
        %v5596 = vadd.f32 %v5450, %v5595
        %v5597 = vand.u32 %v2187, 4294901760
        %v5598 = vsub.f32 %v2187, %v5597
        %v5599 = vand.u32 %v5598, 4294901760
        %5600 = vmatmul.f32.gmra.mxu0 %v5599
        %v5601 = vpop.f32.mrf.mxu0
        %v5602 = vadd.f32 %v5455, %v5601
        %5603 = vdwg.mxu0
        %v5604 = vand.u32 %v2251, 4294901760
        %v5605 = vsub.f32 %v2251, %v5604
        %v5606 = vand.u32 %v5605, 4294901760
        %5607 = vmatpush.msra.mxu0 %v5606
        %v5608 = vand.u32 %v2249, 4294901760
        %v5609 = vsub.f32 %v2249, %v5608
        %v5610 = vand.u32 %v5609, 4294901760
        %5611 = vmatpush.msra.mxu0 %v5610
        %v5612 = vand.u32 %v2247, 4294901760
        %v5613 = vsub.f32 %v2247, %v5612
        %v5614 = vand.u32 %v5613, 4294901760
        %5615 = vmatpush.msra.mxu0 %v5614
        %v5616 = vand.u32 %v2245, 4294901760
        %v5617 = vsub.f32 %v2245, %v5616
        %v5618 = vand.u32 %v5617, 4294901760
        %5619 = vmatpush.msra.mxu0 %v5618
        %v5620 = vand.u32 %v2243, 4294901760
        %v5621 = vsub.f32 %v2243, %v5620
        %v5622 = vand.u32 %v5621, 4294901760
        %5623 = vmatpush.msra.mxu0 %v5622
        %v5624 = vand.u32 %v2241, 4294901760
        %v5625 = vsub.f32 %v2241, %v5624
        %v5626 = vand.u32 %v5625, 4294901760
        %5627 = vmatpush.msra.mxu0 %v5626
        %v5628 = vand.u32 %v2239, 4294901760
        %v5629 = vsub.f32 %v2239, %v5628
        %v5630 = vand.u32 %v5629, 4294901760
        %5631 = vmatpush.msra.mxu0 %v5630
        %v5632 = vand.u32 %v2237, 4294901760
        %v5633 = vsub.f32 %v2237, %v5632
        %v5634 = vand.u32 %v5633, 4294901760
        %5635 = vmatpush.msra.mxu0 %v5634
        %v5636 = vand.u32 %v2235, 4294901760
        %v5637 = vsub.f32 %v2235, %v5636
        %v5638 = vand.u32 %v5637, 4294901760
        %5639 = vmatpush.msra.mxu0 %v5638
        %v5640 = vand.u32 %v2233, 4294901760
        %v5641 = vsub.f32 %v2233, %v5640
        %v5642 = vand.u32 %v5641, 4294901760
        %5643 = vmatpush.msra.mxu0 %v5642
        %v5644 = vand.u32 %v2231, 4294901760
        %v5645 = vsub.f32 %v2231, %v5644
        %v5646 = vand.u32 %v5645, 4294901760
        %5647 = vmatpush.msra.mxu0 %v5646
        %v5648 = vand.u32 %v2229, 4294901760
        %v5649 = vsub.f32 %v2229, %v5648
        %v5650 = vand.u32 %v5649, 4294901760
        %5651 = vmatpush.msra.mxu0 %v5650
        %v5652 = vand.u32 %v2227, 4294901760
        %v5653 = vsub.f32 %v2227, %v5652
        %v5654 = vand.u32 %v5653, 4294901760
        %5655 = vmatpush.msra.mxu0 %v5654
        %v5656 = vand.u32 %v2225, 4294901760
        %v5657 = vsub.f32 %v2225, %v5656
        %v5658 = vand.u32 %v5657, 4294901760
        %5659 = vmatpush.msra.mxu0 %v5658
        %v5660 = vand.u32 %v2223, 4294901760
        %v5661 = vsub.f32 %v2223, %v5660
        %v5662 = vand.u32 %v5661, 4294901760
        %5663 = vmatpush.msra.mxu0 %v5662
        %v5664 = vand.u32 %v2221, 4294901760
        %v5665 = vsub.f32 %v2221, %v5664
        %v5666 = vand.u32 %v5665, 4294901760
        %5667 = vmatpush.msra.mxu0 %v5666
        %v5668 = vand.u32 %v2151, 4294901760
        %5669 = vmatmul.f32.gmra.mxu0 %v5668
        %v5670 = vpop.f32.mrf.mxu0
        %v5671 = vadd.f32 %v5494, %v5670
        %v5672 = vand.u32 %v2153, 4294901760
        %5673 = vmatmul.f32.gmra.mxu0 %v5672
        %v5674 = vpop.f32.mrf.mxu0
        %v5675 = vadd.f32 %v5500, %v5674
        %v5676 = vand.u32 %v2155, 4294901760
        %5677 = vmatmul.f32.gmra.mxu0 %v5676
        %v5678 = vpop.f32.mrf.mxu0
        %v5679 = vadd.f32 %v5506, %v5678
        %v5680 = vand.u32 %v2157, 4294901760
        %5681 = vmatmul.f32.gmra.mxu0 %v5680
        %v5682 = vpop.f32.mrf.mxu0
        %v5683 = vadd.f32 %v5512, %v5682
        %v5684 = vand.u32 %v2159, 4294901760
        %5685 = vmatmul.f32.gmra.mxu0 %v5684
        %v5686 = vpop.f32.mrf.mxu0
        %v5687 = vadd.f32 %v5518, %v5686
        %v5688 = vand.u32 %v2161, 4294901760
        %5689 = vmatmul.f32.gmra.mxu0 %v5688
        %v5690 = vpop.f32.mrf.mxu0
        %v5691 = vadd.f32 %v5524, %v5690
        %v5692 = vand.u32 %v2163, 4294901760
        %5693 = vmatmul.f32.gmra.mxu0 %v5692
        %v5694 = vpop.f32.mrf.mxu0
        %v5695 = vadd.f32 %v5530, %v5694
        %v5696 = vand.u32 %v2165, 4294901760
        %5697 = vmatmul.f32.gmra.mxu0 %v5696
        %v5698 = vpop.f32.mrf.mxu0
        %v5699 = vadd.f32 %v5536, %v5698
        %v5700 = vand.u32 %v2167, 4294901760
        %5701 = vmatmul.f32.gmra.mxu0 %v5700
        %v5702 = vpop.f32.mrf.mxu0
        %v5703 = vadd.f32 %v5542, %v5702
        %v5704 = vand.u32 %v2169, 4294901760
        %5705 = vmatmul.f32.gmra.mxu0 %v5704
        %v5706 = vpop.f32.mrf.mxu0
        %v5707 = vadd.f32 %v5548, %v5706
        %v5708 = vand.u32 %v2171, 4294901760
        %5709 = vmatmul.f32.gmra.mxu0 %v5708
        %v5710 = vpop.f32.mrf.mxu0
        %v5711 = vadd.f32 %v5554, %v5710
        %v5712 = vand.u32 %v2173, 4294901760
        %5713 = vmatmul.f32.gmra.mxu0 %v5712
        %v5714 = vpop.f32.mrf.mxu0
        %v5715 = vadd.f32 %v5560, %v5714
        %v5716 = vand.u32 %v2175, 4294901760
        %5717 = vmatmul.f32.gmra.mxu0 %v5716
        %v5718 = vpop.f32.mrf.mxu0
        %v5719 = vadd.f32 %v5566, %v5718
        %v5720 = vand.u32 %v2177, 4294901760
        %5721 = vmatmul.f32.gmra.mxu0 %v5720
        %v5722 = vpop.f32.mrf.mxu0
        %v5723 = vadd.f32 %v5572, %v5722
        %v5724 = vand.u32 %v2179, 4294901760
        %5725 = vmatmul.f32.gmra.mxu0 %v5724
        %v5726 = vpop.f32.mrf.mxu0
        %v5727 = vadd.f32 %v5578, %v5726
        %v5728 = vand.u32 %v2181, 4294901760
        %5729 = vmatmul.f32.gmra.mxu0 %v5728
        %v5730 = vpop.f32.mrf.mxu0
        %v5731 = vadd.f32 %v5584, %v5730
        %v5732 = vand.u32 %v2183, 4294901760
        %5733 = vmatmul.f32.gmra.mxu0 %v5732
        %v5734 = vpop.f32.mrf.mxu0
        %v5735 = vadd.f32 %v5590, %v5734
        %v5736 = vand.u32 %v2185, 4294901760
        %5737 = vmatmul.f32.gmra.mxu0 %v5736
        %v5738 = vpop.f32.mrf.mxu0
        %v5739 = vadd.f32 %v5596, %v5738
        %v5740 = vand.u32 %v2187, 4294901760
        %5741 = vmatmul.f32.gmra.mxu0 %v5740
        %v5742 = vpop.f32.mrf.mxu0
        %v5743 = vadd.f32 %v5602, %v5742
        %5744 = vdwg.mxu0
        %v5745 = vand.u32 %v2251, 4294901760
        %5746 = vmatpush.msra.mxu0 %v5745
        %v5747 = vand.u32 %v2249, 4294901760
        %5748 = vmatpush.msra.mxu0 %v5747
        %v5749 = vand.u32 %v2247, 4294901760
        %5750 = vmatpush.msra.mxu0 %v5749
        %v5751 = vand.u32 %v2245, 4294901760
        %5752 = vmatpush.msra.mxu0 %v5751
        %v5753 = vand.u32 %v2243, 4294901760
        %5754 = vmatpush.msra.mxu0 %v5753
        %v5755 = vand.u32 %v2241, 4294901760
        %5756 = vmatpush.msra.mxu0 %v5755
        %v5757 = vand.u32 %v2239, 4294901760
        %5758 = vmatpush.msra.mxu0 %v5757
        %v5759 = vand.u32 %v2237, 4294901760
        %5760 = vmatpush.msra.mxu0 %v5759
        %v5761 = vand.u32 %v2235, 4294901760
        %5762 = vmatpush.msra.mxu0 %v5761
        %v5763 = vand.u32 %v2233, 4294901760
        %5764 = vmatpush.msra.mxu0 %v5763
        %v5765 = vand.u32 %v2231, 4294901760
        %5766 = vmatpush.msra.mxu0 %v5765
        %v5767 = vand.u32 %v2229, 4294901760
        %5768 = vmatpush.msra.mxu0 %v5767
        %v5769 = vand.u32 %v2227, 4294901760
        %5770 = vmatpush.msra.mxu0 %v5769
        %v5771 = vand.u32 %v2225, 4294901760
        %5772 = vmatpush.msra.mxu0 %v5771
        %v5773 = vand.u32 %v2223, 4294901760
        %5774 = vmatpush.msra.mxu0 %v5773
        %v5775 = vand.u32 %v2221, 4294901760
        %5776 = vmatpush.msra.mxu0 %v5775
        %v5777 = vand.u32 %v2151, 4294901760
        %5778 = vmatmul.f32.gmra.mxu0 %v5777
        %v5779 = vpop.f32.mrf.mxu0
        %v5780 = vadd.f32 %v5671, %v5779
        %v5781 = vand.u32 %v2153, 4294901760
        %5782 = vmatmul.f32.gmra.mxu0 %v5781
        %v5783 = vpop.f32.mrf.mxu0
        %v5784 = vadd.f32 %v5675, %v5783
        %v5785 = vand.u32 %v2155, 4294901760
        %5786 = vmatmul.f32.gmra.mxu0 %v5785
        %v5787 = vpop.f32.mrf.mxu0
        %v5788 = vadd.f32 %v5679, %v5787
        %v5789 = vand.u32 %v2157, 4294901760
        %5790 = vmatmul.f32.gmra.mxu0 %v5789
        %v5791 = vpop.f32.mrf.mxu0
        %v5792 = vadd.f32 %v5683, %v5791
        %v5793 = vand.u32 %v2159, 4294901760
        %5794 = vmatmul.f32.gmra.mxu0 %v5793
        %v5795 = vpop.f32.mrf.mxu0
        %v5796 = vadd.f32 %v5687, %v5795
        %v5797 = vand.u32 %v2161, 4294901760
        %5798 = vmatmul.f32.gmra.mxu0 %v5797
        %v5799 = vpop.f32.mrf.mxu0
        %v5800 = vadd.f32 %v5691, %v5799
        %v5801 = vand.u32 %v2163, 4294901760
        %5802 = vmatmul.f32.gmra.mxu0 %v5801
        %v5803 = vpop.f32.mrf.mxu0
        %v5804 = vadd.f32 %v5695, %v5803
        %v5805 = vand.u32 %v2165, 4294901760
        %5806 = vmatmul.f32.gmra.mxu0 %v5805
        %v5807 = vpop.f32.mrf.mxu0
        %v5808 = vadd.f32 %v5699, %v5807
        %v5809 = vand.u32 %v2167, 4294901760
        %5810 = vmatmul.f32.gmra.mxu0 %v5809
        %v5811 = vpop.f32.mrf.mxu0
        %v5812 = vadd.f32 %v5703, %v5811
        %v5813 = vand.u32 %v2169, 4294901760
        %5814 = vmatmul.f32.gmra.mxu0 %v5813
        %v5815 = vpop.f32.mrf.mxu0
        %v5816 = vadd.f32 %v5707, %v5815
        %v5817 = vand.u32 %v2171, 4294901760
        %5818 = vmatmul.f32.gmra.mxu0 %v5817
        %v5819 = vpop.f32.mrf.mxu0
        %v5820 = vadd.f32 %v5711, %v5819
        %v5821 = vand.u32 %v2173, 4294901760
        %5822 = vmatmul.f32.gmra.mxu0 %v5821
        %v5823 = vpop.f32.mrf.mxu0
        %v5824 = vadd.f32 %v5715, %v5823
        %v5825 = vand.u32 %v2175, 4294901760
        %5826 = vmatmul.f32.gmra.mxu0 %v5825
        %v5827 = vpop.f32.mrf.mxu0
        %v5828 = vadd.f32 %v5719, %v5827
        %v5829 = vand.u32 %v2177, 4294901760
        %5830 = vmatmul.f32.gmra.mxu0 %v5829
        %v5831 = vpop.f32.mrf.mxu0
        %v5832 = vadd.f32 %v5723, %v5831
        %v5833 = vand.u32 %v2179, 4294901760
        %5834 = vmatmul.f32.gmra.mxu0 %v5833
        %v5835 = vpop.f32.mrf.mxu0
        %v5836 = vadd.f32 %v5727, %v5835
        %v5837 = vand.u32 %v2181, 4294901760
        %5838 = vmatmul.f32.gmra.mxu0 %v5837
        %v5839 = vpop.f32.mrf.mxu0
        %v5840 = vadd.f32 %v5731, %v5839
        %v5841 = vand.u32 %v2183, 4294901760
        %5842 = vmatmul.f32.gmra.mxu0 %v5841
        %v5843 = vpop.f32.mrf.mxu0
        %v5844 = vadd.f32 %v5735, %v5843
        %v5845 = vand.u32 %v2185, 4294901760
        %5846 = vmatmul.f32.gmra.mxu0 %v5845
        %v5847 = vpop.f32.mrf.mxu0
        %v5848 = vadd.f32 %v5739, %v5847
        %v5849 = vand.u32 %v2187, 4294901760
        %5850 = vmatmul.f32.gmra.mxu0 %v5849
        %v5851 = vpop.f32.mrf.mxu0
        %v5852 = vadd.f32 %v5743, %v5851
        %5853 = vdwg.mxu0
        %v5854 = vmax.f32 %v3982, 0.0
        %v5855 = vmax.f32 %v5780, 0.0
        %v5856 = vmax.f32 %v3986, 0.0
        %v5857 = vmax.f32 %v5784, 0.0
        %v5858 = vmax.f32 %v3990, 0.0
        %v5859 = vmax.f32 %v5788, 0.0
        %v5860 = vmax.f32 %v3994, 0.0
        %v5861 = vmax.f32 %v5792, 0.0
        %v5862 = vmax.f32 %v3998, 0.0
        %v5863 = vmax.f32 %v5796, 0.0
        %v5864 = vmax.f32 %v4002, 0.0
        %v5865 = vmax.f32 %v5800, 0.0
        %v5866 = vmax.f32 %v4006, 0.0
        %v5867 = vmax.f32 %v5804, 0.0
        %v5868 = vmax.f32 %v4010, 0.0
        %v5869 = vmax.f32 %v5808, 0.0
        %v5870 = vmax.f32 %v4014, 0.0
        %v5871 = vmax.f32 %v5812, 0.0
        %v5872 = vmax.f32 %v4018, 0.0
        %v5873 = vmax.f32 %v5816, 0.0
        %v5874 = vmax.f32 %v4022, 0.0
        %v5875 = vmax.f32 %v5820, 0.0
        %v5876 = vmax.f32 %v4026, 0.0
        %v5877 = vmax.f32 %v5824, 0.0
        %v5878 = vmax.f32 %v4030, 0.0
        %v5879 = vmax.f32 %v5828, 0.0
        %v5880 = vmax.f32 %v4034, 0.0
        %v5881 = vmax.f32 %v5832, 0.0
        %v5882 = vmax.f32 %v4038, 0.0
        %v5883 = vmax.f32 %v5836, 0.0
        %v5884 = vmax.f32 %v4042, 0.0
        %v5885 = vmax.f32 %v5840, 0.0
        %v5886 = vmax.f32 %v4046, 0.0
        %v5887 = vmax.f32 %v5844, 0.0
        %v5888 = vmax.f32 %v4050, 0.0
        %v5889 = vmax.f32 %v5848, 0.0
        %v5890 = vmax.f32 %v4054, 0.0
        %v5891 = vmax.f32 %v5852, 0.0
        %5892 = vst [vmem:[%s292] sm:$0xff] %v5854
        %5893 = vst [vmem:[%s292 + $0x8] sm:$0xff] %v5855
        %5894 = vst [vmem:[%s292 + $0x10] sm:$0xff] %v5856
        %5895 = vst [vmem:[%s292 + $0x18] sm:$0xff] %v5857
        %5896 = vst [vmem:[%s292 + $0x20] sm:$0xff] %v5858
        %5897 = vst [vmem:[%s292 + $0x28] sm:$0xff] %v5859
        %5898 = vst [vmem:[%s292 + $0x30] sm:$0xff] %v5860
        %5899 = vst [vmem:[%s292 + $0x38] sm:$0xff] %v5861
        %5900 = vst [vmem:[%s292 + $0x40] sm:$0xff] %v5862
        %5901 = vst [vmem:[%s292 + $0x48] sm:$0xff] %v5863
        %5902 = vst [vmem:[%s292 + $0x50] sm:$0xff] %v5864
        %5903 = vst [vmem:[%s292 + $0x58] sm:$0xff] %v5865
        %5904 = vst [vmem:[%s292 + $0x60] sm:$0xff] %v5866
        %5905 = vst [vmem:[%s292 + $0x68] sm:$0xff] %v5867
        %5906 = vst [vmem:[%s292 + $0x70] sm:$0xff] %v5868
        %5907 = vst [vmem:[%s292 + $0x78] sm:$0xff] %v5869
        %5908 = vst [vmem:[%s292 + $0x80] sm:$0xff] %v5870
        %5909 = vst [vmem:[%s292 + $0x88] sm:$0xff] %v5871
        %5910 = vst [vmem:[%s292 + $0x90] sm:$0xff] %v5872
        %5911 = vst [vmem:[%s292 + $0x98] sm:$0xff] %v5873
        %5912 = vst [vmem:[%s292 + $0xa0] sm:$0xff] %v5874
        %5913 = vst [vmem:[%s292 + $0xa8] sm:$0xff] %v5875
        %5914 = vst [vmem:[%s292 + $0xb0] sm:$0xff] %v5876
        %5915 = vst [vmem:[%s292 + $0xb8] sm:$0xff] %v5877
        %5916 = vst [vmem:[%s292 + $0xc0] sm:$0xff] %v5878
        %5917 = vst [vmem:[%s292 + $0xc8] sm:$0xff] %v5879
        %5918 = vst [vmem:[%s292 + $0xd0] sm:$0xff] %v5880
        %5919 = vst [vmem:[%s292 + $0xd8] sm:$0xff] %v5881
        %5920 = vst [vmem:[%s292 + $0xe0] sm:$0xff] %v5882
        %5921 = vst [vmem:[%s292 + $0xe8] sm:$0xff] %v5883
        %5922 = vst [vmem:[%s292 + $0xf0] sm:$0xff] %v5884
        %5923 = vst [vmem:[%s292 + $0xf8] sm:$0xff] %v5885
        %5924 = vst [vmem:[%s292 + $0x100] sm:$0xff] %v5886
        %5925 = vst [vmem:[%s292 + $0x108] sm:$0xff] %v5887
        %5926 = vst [vmem:[%s292 + $0x110] sm:$0xff] %v5888
        %5927 = vst [vmem:[%s292 + $0x118] sm:$0xff] %v5889
        %5928 = vst [vmem:[%s292 + $0x120] sm:$0xff] %v5890
        %5929 = vst [vmem:[%s292 + $0x128] sm:$0xff] %v5891
        %s5930 = sand.u32 %s142, 1
        %s5931 = scalar_lea.sflag [#allocation4], %s5930
        %s5932 = sand.u32 %s142, 1
        %s5933 = smul.addr %s5932, 304
        %s5934 = scalar_lea.vmem [#allocation10], %s5933
        // Predicated region
        $region57: #{tpu_custom_call.1} parent=39 // pred_check
          %p5935 = pneg %p152
        $region58: #{tpu_custom_call.1} parent=39 // pred_check_branch
          %5937 = sbr.rel (%p5935) target = $region60
        $region59: #{tpu_custom_call.1} parent=39 // pred_region
          %s5938 = smul.u32 19, %s24
          %5940 = vsyncadd %s5931, 0
          %s5941 = smul.addr %s5938, 2
          %s5942 = smul.addr %s5941, 8
          %s5943 = scalar_lea.hbm %s5, %s5942
          %s5944 = sshll.u32 %s5934, 4
          %s5945 = int_to_ptr.vmem [resolvable:$true] %s5944
          %s5946 = sshll.u32 %s5943, 4
          %s5947 = int_to_ptr.hbm [resolvable:$true] %s5946
          %5952 = dma.vmem_to_hbm [thread:$0]  %s5945, 4864, %s5947, %s5931, 256, 256, 16
        $region60: #{tpu_custom_call.1} parent=39 // pred_fallthru
          _
      $region40: #{tpu_custom_call.1} parent=5 // pred_fallthru
        _
      %p5953 = scmp.le.s32.totalorder 2, %s19
      // Predicated region
      $region61: #{tpu_custom_call.1} parent=5 // pred_check
        %p5954 = pneg %p5953
      $region62: #{tpu_custom_call.1} parent=5 // pred_check_branch
        %5956 = sbr.rel (%p5954) target = $region64
      $region63: #{tpu_custom_call.1} parent=5 // pred_region
        %s5957 = ssub.s32 %s19, 2
        // Predicated region
        $region65: #{tpu_custom_call.1} parent=63 // pred_check
          %p5958 = pneg %p158
        $region66: #{tpu_custom_call.1} parent=63 // pred_check_branch
          %5960 = sbr.rel (%p5958) target = $region68
        $region67: #{tpu_custom_call.1} parent=63 // pred_region
          %s5961 = sand.u32 %s143, 1
          %s5962 = scalar_lea.sflag [#allocation4], %s5961
          %s5963 = sand.u32 %s143, 1
          %s5964 = smul.addr %s5963, 304
          %s5965 = scalar_lea.vmem [#allocation10], %s5964
          %5967 = dma.done %s5962, 4864
        $region68: #{tpu_custom_call.1} parent=63 // pred_fallthru
          _
      $region64: #{tpu_custom_call.1} parent=5 // pred_fallthru
        _
    $region6: #{tpu_custom_call.1} parent=1 // loop_footer
      %s23 = sadd.s32 1, %s19
    $region7: #{tpu_custom_call.1} parent=1 // loop_footer_branch
      %18 = sbr.rel target = $region3
    $region8: #{tpu_custom_call.1} parent=1 // loop_exit
      _
    %5968 = vsyncpa [#allocation3], 1
    %s5969 = scalar_lea.sflag [#allocation3], 1
    %5970 = vsyncpa %s5969, 1
    %5971 = vsyncpa [#allocation6], 1
    %5972 = vsyncpa [#allocation9], 1
    %5973 = vsyncpa [#allocation4], 1
    %s5974 = scalar_lea.sflag [#allocation4], 1
    %5975 = vsyncpa %s5974, 1

</llo_original>
